<compile_context>
chip_gen: v5e
topology: v5e:2x2
jax: 0.10.0
libtpu: 0.0.40
codegen_flags: <defaults>
</compile_context>

<pallas_src>
import functools

import jax
import jax.numpy as jnp
from jax.experimental import pallas as pl
from jax.experimental.pallas import tpu as pltpu


_BN_SCALE = float((1.0 + 1e-5) ** -0.5)
# TODO(synk): BatchNorm is applied with eval-mode running stats of a freshly
# initialized layer (mean=0, var=1, gamma=1, beta=0), i.e. a 1/sqrt(1+eps)
# scale; trained running stats / affine params are not reproduced.


# ---------------------------------------------------------------------------
# Fused dense kernels:  out = (A @ W + b) * bn_scale   [optionally -> GLU]
# ---------------------------------------------------------------------------

def _dense_bias_kernel(a_ref, w_ref, b_ref, o_ref, *, bn_scale):
    y = jnp.dot(a_ref[...], w_ref[...], preferred_element_type=jnp.float32)
    o_ref[...] = (y + b_ref[...]) * bn_scale


def _dense_glu_kernel(a_ref, w_ref, b_ref, o_ref, *, bn_scale):
    y = jnp.dot(a_ref[...], w_ref[...], preferred_element_type=jnp.float32)
    y = (y + b_ref[...]) * bn_scale
    ch = o_ref.shape[-1]
    gate = 1.0 / (1.0 + jnp.exp(-y[:, ch:]))          # sigmoid -> EUP slot
    o_ref[...] = y[:, :ch] * gate


def fused_dense(a, w, b=None, *, bn_scale=1.0, glu=False, tm_max=512):
    """(M,K) @ (K,N) + bias, optional BN scale and GLU over output columns.

    Blocks are sized to the real shapes (full K and N, M tiled only when it
    exceeds tm_max), so nothing is padded up to 128-multiples in HBM.
    """
    a = a.astype(jnp.float32)
    w = w.astype(jnp.float32)
    M, K = a.shape
    K2, N = w.shape
    assert K == K2
    if b is None:
        b = jnp.zeros((1, N), jnp.float32)
    b = b.reshape(1, N).astype(jnp.float32)

    if glu:
        assert N % 2 == 0
        n_out = N // 2
        kernel = functools.partial(_dense_glu_kernel, bn_scale=bn_scale)
    else:
        n_out = N
        kernel = functools.partial(_dense_bias_kernel, bn_scale=bn_scale)

    if M <= tm_max:
        tm, Mp, a_p = M, M, a                      # single block == full dims
    else:
        tm = tm_max                                # 8-aligned M tiling
        Mp = pl.cdiv(M, tm) * tm
        a_p = jnp.pad(a, ((0, Mp - M), (0, 0)))

    out = pl.pallas_call(
        kernel,
        out_shape=jax.ShapeDtypeStruct((Mp, n_out), jnp.float32),
        grid_spec=pltpu.PrefetchScalarGridSpec(
            num_scalar_prefetch=0,
            grid=(Mp // tm,),
            in_specs=[pl.BlockSpec((tm, K), lambda i: (i, 0)),
                      pl.BlockSpec((K, N), lambda i: (0, 0)),
                      pl.BlockSpec((1, N), lambda i: (0, 0))],
            out_specs=pl.BlockSpec((tm, n_out), lambda i: (i, 0))),
        compiler_params=pltpu.CompilerParams(
            dimension_semantics=("parallel",)),
    )(a_p, w, b)
    return out[:M] if Mp != M else out


# ---------------------------------------------------------------------------
# replace_magnitude (single gridded elementwise kernel, rsqrt on EUP)
# ---------------------------------------------------------------------------

def _replace_mag_kernel(x_ref, mag_ref, o_ref):
    re = x_ref[0, 0]
    im = x_ref[0, 1]
    m = mag_ref[0, 0]
    r2 = re * re + im * im
    nz = r2 > 0.0
    inv = jax.lax.rsqrt(jnp.where(nz, r2, 1.0))
    o_ref[0, 0] = m * jnp.where(nz, re * inv, 1.0)   # atan2(0,0)=0 -> cos=1
    o_ref[0, 1] = m * jnp.where(nz, im * inv, 0.0)   # atan2(0,0)=0 -> sin=0


def replace_magnitude(x, mag):
    """x: [B,2,F,T], mag: [B,1,F,T] -> [B,2,F,T] (mag with the phase of x)."""
    B, _, F, T = x.shape
    return pl.pallas_call(
        _replace_mag_kernel,
        out_shape=jax.ShapeDtypeStruct((B, 2, F, T), jnp.float32),
        grid_spec=pltpu.PrefetchScalarGridSpec(
            num_scalar_prefetch=0,
            grid=(B,),   # one batch plane per step keeps VMEM bounded at big F,T
            in_specs=[pl.BlockSpec((1, 2, F, T), lambda b: (b, 0, 0, 0)),
                      pl.BlockSpec((1, 1, F, T), lambda b: (b, 0, 0, 0))],
            out_specs=pl.BlockSpec((1, 2, F, T), lambda b: (b, 0, 0, 0))),
        compiler_params=pltpu.CompilerParams(
            dimension_semantics=("parallel",)),
    )(x.astype(jnp.float32), mag.astype(jnp.float32))


# ---------------------------------------------------------------------------
# Conv stack: channels-last im2col + fused matmul/bias/BN/GLU kernel
# ---------------------------------------------------------------------------

def _im2col_nhwc(x, kh, kw, ph, pw):
    """x: [B,H,W,C] -> [B*H*W, kh*kw*C] patches (channels-last, no transposes)."""
    B, H, W, C = x.shape
    xp = jnp.pad(x, ((0, 0), (ph, ph), (pw, pw), (0, 0)))
    cols = []
    for di in range(kh):
        for dj in range(kw):
            cols.append(xp[:, di:di + H, dj:dj + W, :])
    p = jnp.concatenate(cols, axis=-1)                  # [B,H,W,kh*kw*C]
    # TODO(synk): for realistic F,T a VMEM-resident shifted-slice conv kernel
    # would avoid this kh*kw input duplication in HBM.
    return p.reshape(B * H * W, kh * kw * C)


def conv_glu(x, layer, kh, kw, ph, pw, *, bn_scale=1.0):
    """ConvGLU in NHWC: conv + bias (+ eval BN scale) + GLU, all in one kernel."""
    B, H, W, _ = x.shape
    w2, b2 = layer
    patches = _im2col_nhwc(x, kh, kw, ph, pw)
    y = fused_dense(patches, w2, b2, bn_scale=bn_scale, glu=True)
    return y.reshape(B, H, W, -1)


def conv_plain(x, layer, kh, kw, ph, pw):
    B, H, W, _ = x.shape
    w2, b2 = layer
    patches = _im2col_nhwc(x, kh, kw, ph, pw)
    y = fused_dense(patches, w2, b2, glu=False)
    return y.reshape(B, H, W, -1)


# ---------------------------------------------------------------------------
# STFT / ISTFT (torch.stft / torch.istft semantics, center=True, onesided)
# ---------------------------------------------------------------------------

def overlap_add(frames, hop):
    """frames: [B,T,n_fft] -> [B, n_fft + hop*(T-1)] (no duplicate-index scatter)."""
    B, T, n_fft = frames.shape
    n_out = n_fft + hop * (T - 1)
    if n_fft % hop == 0:
        r = n_fft // hop
        seg = frames.reshape(B, T, r, hop)
        out = jnp.zeros((B, T + r - 1, hop), frames.dtype)
        for j in range(r):                              # r shifted slice-adds
            out = out.at[:, j:j + T, :].add(seg[:, :, j, :])
        return out.reshape(B, n_out)
    # fallback (hop does not divide n_fft): scatter overlap-add
    idx = (jnp.arange(T)[:, None] * hop + jnp.arange(n_fft)[None, :]).reshape(-1)
    out = jnp.zeros((B, n_out), frames.dtype)
    return out.at[:, idx].add(frames.reshape(B, T * n_fft))


def stft(waves, consts, n_fft, hop):
    """waves: [B,L] -> [B,2,F,T]."""
    B, L = waves.shape
    pad = n_fft // 2
    F = n_fft // 2 + 1
    wp = jnp.pad(waves, ((0, 0), (pad, pad)), mode="reflect")
    frames = wp[:, consts["frame_idx"]] * consts["window"][None, None, :]
    T = frames.shape[1]
    y = fused_dense(frames.reshape(B * T, n_fft), consts["dft"])   # [B*T, 2F]
    return y.reshape(B, T, 2, F).transpose(0, 2, 3, 1)             # [B,2,F,T]


def istft(X, consts, n_fft, hop, length):
    """X: [B,2,F,T] -> [B, length]."""
    B, _, F, T = X.shape
    Xre = X[:, 0].transpose(0, 2, 1)                    # [B,T,F]
    Xim = X[:, 1].transpose(0, 2, 1)
    A = jnp.concatenate([Xre, Xim], axis=-1).reshape(B * T, 2 * F)
    frames = fused_dense(A, consts["idft"]).reshape(B, T, n_fft)   # irfft/frame
    frames = frames * consts["window"][None, None, :]
    y = overlap_add(frames, hop)
    start = n_fft // 2
    return y[:, start:start + length] * consts["inv_env"][None, :]


def hann_window(n_fft):
    n = jnp.arange(n_fft, dtype=jnp.float32)
    return 0.5 * (1.0 - jnp.cos(2.0 * jnp.pi * n / n_fft))   # periodic (torch)


def make_consts(n_fft, hop, max_length):
    """Loop-invariant STFT/ISTFT constants, built once outside the DeGLI loop."""
    window = hann_window(n_fft)
    F = n_fft // 2 + 1
    pad = n_fft // 2
    T = 1 + (max_length + 2 * pad - n_fft) // hop
    frame_idx = jnp.arange(T)[:, None] * hop + jnp.arange(n_fft)[None, :]
    # forward DFT: real frame -> [re | im] of onesided spectrum
    n = jnp.arange(n_fft, dtype=jnp.float32)[:, None]
    f = jnp.arange(F, dtype=jnp.float32)[None, :]
    ang = 2.0 * jnp.pi * n * f / n_fft
    dft = jnp.concatenate([jnp.cos(ang), -jnp.sin(ang)], axis=1)       # [n_fft,2F]
    # inverse DFT: onesided [re | im] -> real frame
    k = jnp.arange(F, dtype=jnp.float32)[:, None]
    m = jnp.arange(n_fft, dtype=jnp.float32)[None, :]
    ang2 = 2.0 * jnp.pi * k * m / n_fft
    wgt = jnp.where((jnp.arange(F) == 0) | (jnp.arange(F) == n_fft // 2),
                    1.0, 2.0).astype(jnp.float32)[:, None]
    idft = jnp.concatenate([wgt * jnp.cos(ang2) / n_fft,
                            -wgt * jnp.sin(ang2) / n_fft], axis=0)     # [2F,n_fft]
    # ISTFT window^2 overlap-add envelope (loop-invariant)
    env = overlap_add(jnp.broadcast_to((window ** 2)[None, None, :],
                                       (1, T, n_fft)), hop)[0]
    env = env[pad:pad + max_length]
    inv_env = 1.0 / jnp.where(env > 1e-11, env, 1.0)
    return {"window": window, "dft": dft, "idft": idft,
            "frame_idx": frame_idx, "inv_env": inv_env}


# ---------------------------------------------------------------------------
# DeGLI model
# ---------------------------------------------------------------------------

def degli_dnn(p, x, mag_replaced, consistent):
    inp = jnp.concatenate([x, mag_replaced, consistent], axis=1)   # [B,6,F,T]
    h = inp.transpose(0, 2, 3, 1)                                  # NHWC [B,F,T,6]
    h = conv_glu(h, p["first"], 11, 11, 5, 5, bn_scale=_BN_SCALE)
    residual = h
    h = conv_glu(h, p["glu1"], 7, 7, 3, 3, bn_scale=_BN_SCALE)
    h = conv_glu(h, p["glu2"], 7, 7, 3, 3)
    h = h + residual
    h = conv_glu(h, p["last"], 7, 7, 3, 3)
    y = conv_plain(h, p["out"], 7, 7, 3, 3)                        # [B,F,T,2]
    return y.transpose(0, 3, 1, 2)                                 # [B,2,F,T]


def degli_forward(params_list, consts, x, mag, *, n_fft, hop, max_length,
                  repeat=1, out_all_block=True):
    out_repeats = []
    residual = None
    for _ in range(repeat):
        for p in params_list:
            mag_replaced = replace_magnitude(x, mag)               # [B,2,F,T]
            waves = istft(mag_replaced, consts, n_fft, hop, max_length)
            consistent = stft(waves, consts, n_fft, hop)           # [B,2,F,T]
            residual = degli_dnn(p, x, mag_replaced, consistent)
            x = consistent - residual
        if out_all_block:
            out_repeats.append(x)
    if out_all_block:
        out_rep = jnp.stack(out_repeats, axis=1)                   # [B,rep,2,F,T]
    else:
        out_rep = x[:, None]
    final_out = replace_magnitude(x, mag)
    return out_rep, final_out, residual


# ---------------------------------------------------------------------------
# Parameters (torch layout init, converted once to matmul layout)
# ---------------------------------------------------------------------------

def init_params(key, depth=1):
    def conv_init(k, oc, ic, kh, kw):
        k1, k2 = jax.random.split(k)
        fan_in = ic * kh * kw
        w = jax.random.normal(k1, (oc, ic, kh, kw), jnp.float32) / jnp.sqrt(fan_in)
        b = jax.random.normal(k2, (oc,), jnp.float32) * 0.01
        return w, b

    params_list = []
    for kd in jax.random.split(key, depth):
        ks = jax.random.split(kd, 5)
        params_list.append({
            "first": conv_init(ks[0], 32, 6, 11, 11),
            "glu1": conv_init(ks[1], 32, 16, 7, 7),
            "glu2": conv_init(ks[2], 32, 16, 7, 7),
            "last": conv_init(ks[3], 32, 16, 7, 7),
            "out": conv_init(ks[4], 2, 16, 7, 7),
        })
    return params_list


def prepare_conv(w, b):
    """[OC,IC,KH,KW] torch conv weight -> ([KH*KW*IC, OC], [1, OC]) once."""
    OC, IC, KH, KW = w.shape
    w2 = jnp.transpose(w, (2, 3, 1, 0)).reshape(KH * KW * IC, OC)
    return w2.astype(jnp.float32), b.reshape(1, OC).astype(jnp.float32)


def prepare_params(params_list):
    return [{name: prepare_conv(*p[name]) for name in
             ("first", "glu1", "glu2", "last", "out")} for p in params_list]


# ---------------------------------------------------------------------------
# Main
# ---------------------------------------------------------------------------

if __name__ == "__main__":
    N_FFT = 16
    HOP = 4
    B = 2
    F = N_FFT // 2 + 1            # 9 frequency bins
    MAX_LEN = 32                  # waveform length
    T = MAX_LEN // HOP + 1        # 9 frames (center=True)

    key = jax.random.PRNGKey(0)
    kx, km, kp = jax.random.split(key, 3)
    x = jax.random.normal(kx, (B, 2, F, T), jnp.float32)
    mag = jnp.abs(jax.random.normal(km, (B, 1, F, T), jnp.float32))

    params_list = prepare_params(init_params(kp, depth=1))
    consts = make_consts(N_FFT, HOP, MAX_LEN)

    fwd = jax.jit(functools.partial(degli_forward, n_fft=N_FFT, hop=HOP,
                                    max_length=MAX_LEN, repeat=1,
                                    out_all_block=True))
    out_repeats, final_out, residual = fwd(params_list, consts, x, mag)
    jax.block_until_ready(out_repeats)
    jax.block_until_ready(final_out)
    jax.block_until_ready(residual)

    assert out_repeats.shape == (B, 1, 2, F, T)
    assert final_out.shape == (B, 2, F, T)
    assert residual.shape == (B, 2, F, T)
    print("KERNEL_OK")
</pallas_src>

<mosaic_0001>
module attributes {stable_mosaic.version = 11 : i64} {
  func.func @_replace_mag_kernel(%arg0: i32, %arg1: memref<1x2x9x9xf32, #tpu.memory_space<vmem>>, %arg2: memref<1x1x9x9xf32, #tpu.memory_space<vmem>>, %arg3: memref<1x2x9x9xf32, #tpu.memory_space<vmem>>) attributes {dimension_semantics = [#tpu.dimension_semantics<parallel>], iteration_bounds = array<i64: 2>, scalar_prefetch = 0 : i64, scratch_operands = 0 : i64, tpu.core_type = #tpu.core_type<tc>, window_params = [{transform_indices = @transform_0, window_bounds = array<i64: 1, 2, 9, 9>}, {transform_indices = @transform_1, window_bounds = array<i64: 1, 1, 9, 9>}, {transform_indices = @transform_2, window_bounds = array<i64: 1, 2, 9, 9>}]} {
    %c0 = arith.constant 0 : index
    %c0_0 = arith.constant 0 : index
    %c0_1 = arith.constant 0 : index
    %c0_2 = arith.constant 0 : index
    %0 = vector.load %arg1[%c0, %c0_0, %c0_1, %c0_2] : memref<1x2x9x9xf32, #tpu.memory_space<vmem>>, vector<1x1x9x9xf32>
    %1 = vector.shape_cast %0 : vector<1x1x9x9xf32> to vector<9x9xf32>
    %c0_3 = arith.constant 0 : index
    %c1 = arith.constant 1 : index
    %c0_4 = arith.constant 0 : index
    %c0_5 = arith.constant 0 : index
    %2 = vector.load %arg1[%c0_3, %c1, %c0_4, %c0_5] : memref<1x2x9x9xf32, #tpu.memory_space<vmem>>, vector<1x1x9x9xf32>
    %3 = vector.shape_cast %2 : vector<1x1x9x9xf32> to vector<9x9xf32>
    %c0_6 = arith.constant 0 : index
    %c0_7 = arith.constant 0 : index
    %c0_8 = arith.constant 0 : index
    %c0_9 = arith.constant 0 : index
    %4 = vector.load %arg2[%c0_6, %c0_7, %c0_8, %c0_9] : memref<1x1x9x9xf32, #tpu.memory_space<vmem>>, vector<1x1x9x9xf32>
    %5 = vector.shape_cast %4 : vector<1x1x9x9xf32> to vector<9x9xf32>
    %6 = arith.mulf %1, %1 : vector<9x9xf32>
    %7 = arith.mulf %3, %3 : vector<9x9xf32>
    %8 = arith.addf %6, %7 : vector<9x9xf32>
    %cst = arith.constant 0.000000e+00 : f32
    %9 = vector.broadcast %cst : f32 to vector<9x9xf32>
    %10 = arith.cmpf ogt, %8, %9 : vector<9x9xf32>
    %cst_10 = arith.constant 1.000000e+00 : f32
    %11 = vector.broadcast %cst_10 : f32 to vector<9x9xf32>
    %12 = arith.select %10, %8, %11 : vector<9x9xi1>, vector<9x9xf32>
    %13 = math.rsqrt %12 : vector<9x9xf32>
    %14 = arith.mulf %1, %13 : vector<9x9xf32>
    %cst_11 = arith.constant 1.000000e+00 : f32
    %15 = vector.broadcast %cst_11 : f32 to vector<9x9xf32>
    %16 = arith.select %10, %14, %15 : vector<9x9xi1>, vector<9x9xf32>
    %17 = arith.mulf %5, %16 : vector<9x9xf32>
    %c0_12 = arith.constant 0 : index
    %c0_13 = arith.constant 0 : index
    %c0_14 = arith.constant 0 : index
    %c0_15 = arith.constant 0 : index
    %18 = vector.load %arg3[%c0_12, %c0_13, %c0_14, %c0_15] : memref<1x2x9x9xf32, #tpu.memory_space<vmem>>, vector<1x1x9x9xf32>
    %19 = vector.shape_cast %18 : vector<1x1x9x9xf32> to vector<9x9xf32>
    %20 = vector.shape_cast %17 : vector<9x9xf32> to vector<1x1x9x9xf32>
    tpu.vector_store %arg3[%c0_12, %c0_13, %c0_14, %c0_15], %20 {strides = array<i32>} : memref<1x2x9x9xf32, #tpu.memory_space<vmem>>, vector<1x1x9x9xf32>,
    %21 = arith.mulf %3, %13 : vector<9x9xf32>
    %cst_16 = arith.constant 0.000000e+00 : f32
    %22 = vector.broadcast %cst_16 : f32 to vector<9x9xf32>
    %23 = arith.select %10, %21, %22 : vector<9x9xi1>, vector<9x9xf32>
    %24 = arith.mulf %5, %23 : vector<9x9xf32>
    %c0_17 = arith.constant 0 : index
    %c1_18 = arith.constant 1 : index
    %c0_19 = arith.constant 0 : index
    %c0_20 = arith.constant 0 : index
    %25 = vector.load %arg3[%c0_17, %c1_18, %c0_19, %c0_20] : memref<1x2x9x9xf32, #tpu.memory_space<vmem>>, vector<1x1x9x9xf32>
    %26 = vector.shape_cast %25 : vector<1x1x9x9xf32> to vector<9x9xf32>
    %27 = vector.shape_cast %24 : vector<9x9xf32> to vector<1x1x9x9xf32>
    tpu.vector_store %arg3[%c0_17, %c1_18, %c0_19, %c0_20], %27 {strides = array<i32>} : memref<1x2x9x9xf32, #tpu.memory_space<vmem>>, vector<1x1x9x9xf32>,
    return
  }
  func.func @transform_0(%arg0: i32) -> (i32, i32, i32, i32) {
    %c0_i32 = arith.constant 0 : i32
    %c0_i32_0 = arith.constant 0 : i32
    %c0_i32_1 = arith.constant 0 : i32
    %c0_i32_2 = arith.constant 0 : i32
    return %arg0, %c0_i32, %c0_i32_0, %c0_i32_1 : i32, i32, i32, i32
  }
  func.func @transform_1(%arg0: i32) -> (i32, i32, i32, i32) {
    %c0_i32 = arith.constant 0 : i32
    %c0_i32_0 = arith.constant 0 : i32
    %c0_i32_1 = arith.constant 0 : i32
    %c0_i32_2 = arith.constant 0 : i32
    return %arg0, %c0_i32, %c0_i32_0, %c0_i32_1 : i32, i32, i32, i32
  }
  func.func @transform_2(%arg0: i32) -> (i32, i32, i32, i32) {
    %c0_i32 = arith.constant 0 : i32
    %c0_i32_0 = arith.constant 0 : i32
    %c0_i32_1 = arith.constant 0 : i32
    %c0_i32_2 = arith.constant 0 : i32
    return %arg0, %c0_i32, %c0_i32_0, %c0_i32_1 : i32, i32, i32, i32
  }
}

module attributes {stable_mosaic.version = 11 : i64} {
  func.func @_dense_bias_kernel(%arg0: i32, %arg1: memref<18x18xf32, #tpu.memory_space<vmem>>, %arg2: memref<18x16xf32, #tpu.memory_space<vmem>>, %arg3: memref<1x16xf32, #tpu.memory_space<vmem>>, %arg4: memref<18x16xf32, #tpu.memory_space<vmem>>) attributes {dimension_semantics = [#tpu.dimension_semantics<parallel>], iteration_bounds = array<i64: 1>, scalar_prefetch = 0 : i64, scratch_operands = 0 : i64, tpu.core_type = #tpu.core_type<tc>, window_params = [{transform_indices = @transform_0, window_bounds = array<i64: 18, 18>}, {pipeline_mode = #tpu.pipeline_mode<synchronous>, transform_indices = @transform_1, window_bounds = array<i64: 18, 16>}, {pipeline_mode = #tpu.pipeline_mode<synchronous>, transform_indices = @transform_2, window_bounds = array<i64: 1, 16>}, {transform_indices = @transform_3, window_bounds = array<i64: 18, 16>}]} {
    %c0 = arith.constant 0 : index
    %c0_0 = arith.constant 0 : index
    %0 = vector.load %arg1[%c0, %c0_0] : memref<18x18xf32, #tpu.memory_space<vmem>>, vector<18x18xf32>
    %c0_1 = arith.constant 0 : index
    %c0_2 = arith.constant 0 : index
    %1 = vector.load %arg2[%c0_1, %c0_2] : memref<18x16xf32, #tpu.memory_space<vmem>>, vector<18x16xf32>
    %cst = arith.constant dense<0.000000e+00> : vector<18x16xf32>
    %2 = tpu.matmul %0, %1, %cst {dimension_numbers = #tpu.dot_dimension_numbers<[1], [0], [0], [1], [0, 0, 1, 1], [], []>} : vector<18x18xf32>, vector<18x16xf32>, vector<18x16xf32> -> vector<18x16xf32>
    %c0_3 = arith.constant 0 : index
    %c0_4 = arith.constant 0 : index
    %3 = vector.load %arg3[%c0_3, %c0_4] : memref<1x16xf32, #tpu.memory_space<vmem>>, vector<1x16xf32>
    %4 = vector.broadcast %3 : vector<1x16xf32> to vector<18x16xf32>
    %5 = arith.addf %2, %4 : vector<18x16xf32>
    %cst_5 = arith.constant 1.000000e+00 : f32
    %6 = vector.broadcast %cst_5 : f32 to vector<18x16xf32>
    %7 = arith.mulf %5, %6 : vector<18x16xf32>
    %c0_6 = arith.constant 0 : index
    %c0_7 = arith.constant 0 : index
    %8 = vector.load %arg4[%c0_6, %c0_7] : memref<18x16xf32, #tpu.memory_space<vmem>>, vector<18x16xf32>
    tpu.vector_store %arg4[%c0_6, %c0_7], %7 {strides = array<i32>} : memref<18x16xf32, #tpu.memory_space<vmem>>, vector<18x16xf32>,
    return
  }
  func.func @transform_0(%arg0: i32) -> (i32, i32) {
    %c0_i32 = arith.constant 0 : i32
    %c0_i32_0 = arith.constant 0 : i32
    return %arg0, %c0_i32 : i32, i32
  }
  func.func @transform_1(%arg0: i32) -> (i32, i32) {
    %c0_i32 = arith.constant 0 : i32
    %c0_i32_0 = arith.constant 0 : i32
    %c0_i32_1 = arith.constant 0 : i32
    return %c0_i32, %c0_i32_0 : i32, i32
  }
  func.func @transform_2(%arg0: i32) -> (i32, i32) {
    %c0_i32 = arith.constant 0 : i32
    %c0_i32_0 = arith.constant 0 : i32
    %c0_i32_1 = arith.constant 0 : i32
    return %c0_i32, %c0_i32_0 : i32, i32
  }
  func.func @transform_3(%arg0: i32) -> (i32, i32) {
    %c0_i32 = arith.constant 0 : i32
    %c0_i32_0 = arith.constant 0 : i32
    return %arg0, %c0_i32 : i32, i32
  }
}

module attributes {stable_mosaic.version = 11 : i64} {
  func.func @_dense_bias_kernel(%arg0: i32, %arg1: memref<18x16xf32, #tpu.memory_space<vmem>>, %arg2: memref<16x18xf32, #tpu.memory_space<vmem>>, %arg3: memref<1x18xf32, #tpu.memory_space<vmem>>, %arg4: memref<18x18xf32, #tpu.memory_space<vmem>>) attributes {dimension_semantics = [#tpu.dimension_semantics<parallel>], iteration_bounds = array<i64: 1>, scalar_prefetch = 0 : i64, scratch_operands = 0 : i64, tpu.core_type = #tpu.core_type<tc>, window_params = [{transform_indices = @transform_0, window_bounds = array<i64: 18, 16>}, {pipeline_mode = #tpu.pipeline_mode<synchronous>, transform_indices = @transform_1, window_bounds = array<i64: 16, 18>}, {pipeline_mode = #tpu.pipeline_mode<synchronous>, transform_indices = @transform_2, window_bounds = array<i64: 1, 18>}, {transform_indices = @transform_3, window_bounds = array<i64: 18, 18>}]} {
    %c0 = arith.constant 0 : index
    %c0_0 = arith.constant 0 : index
    %0 = vector.load %arg1[%c0, %c0_0] : memref<18x16xf32, #tpu.memory_space<vmem>>, vector<18x16xf32>
    %c0_1 = arith.constant 0 : index
    %c0_2 = arith.constant 0 : index
    %1 = vector.load %arg2[%c0_1, %c0_2] : memref<16x18xf32, #tpu.memory_space<vmem>>, vector<16x18xf32>
    %cst = arith.constant dense<0.000000e+00> : vector<18x18xf32>
    %2 = tpu.matmul %0, %1, %cst {dimension_numbers = #tpu.dot_dimension_numbers<[1], [0], [0], [1], [0, 0, 1, 1], [], []>} : vector<18x16xf32>, vector<16x18xf32>, vector<18x18xf32> -> vector<18x18xf32>
    %c0_3 = arith.constant 0 : index
    %c0_4 = arith.constant 0 : index
    %3 = vector.load %arg3[%c0_3, %c0_4] : memref<1x18xf32, #tpu.memory_space<vmem>>, vector<1x18xf32>
    %4 = vector.broadcast %3 : vector<1x18xf32> to vector<18x18xf32>
    %5 = arith.addf %2, %4 : vector<18x18xf32>
    %cst_5 = arith.constant 1.000000e+00 : f32
    %6 = vector.broadcast %cst_5 : f32 to vector<18x18xf32>
    %7 = arith.mulf %5, %6 : vector<18x18xf32>
    %c0_6 = arith.constant 0 : index
    %c0_7 = arith.constant 0 : index
    %8 = vector.load %arg4[%c0_6, %c0_7] : memref<18x18xf32, #tpu.memory_space<vmem>>, vector<18x18xf32>
    tpu.vector_store %arg4[%c0_6, %c0_7], %7 {strides = array<i32>} : memref<18x18xf32, #tpu.memory_space<vmem>>, vector<18x18xf32>,
    return
  }
  func.func @transform_0(%arg0: i32) -> (i32, i32) {
    %c0_i32 = arith.constant 0 : i32
    %c0_i32_0 = arith.constant 0 : i32
    return %arg0, %c0_i32 : i32, i32
  }
  func.func @transform_1(%arg0: i32) -> (i32, i32) {
    %c0_i32 = arith.constant 0 : i32
    %c0_i32_0 = arith.constant 0 : i32
    %c0_i32_1 = arith.constant 0 : i32
    return %c0_i32, %c0_i32_0 : i32, i32
  }
  func.func @transform_2(%arg0: i32) -> (i32, i32) {
    %c0_i32 = arith.constant 0 : i32
    %c0_i32_0 = arith.constant 0 : i32
    %c0_i32_1 = arith.constant 0 : i32
    return %c0_i32, %c0_i32_0 : i32, i32
  }
  func.func @transform_3(%arg0: i32) -> (i32, i32) {
    %c0_i32 = arith.constant 0 : i32
    %c0_i32_0 = arith.constant 0 : i32
    return %arg0, %c0_i32 : i32, i32
  }
}

module attributes {stable_mosaic.version = 11 : i64} {
  func.func @_dense_glu_kernel(%arg0: i32, %arg1: memref<162x726xf32, #tpu.memory_space<vmem>>, %arg2: memref<726x32xf32, #tpu.memory_space<vmem>>, %arg3: memref<1x32xf32, #tpu.memory_space<vmem>>, %arg4: memref<162x16xf32, #tpu.memory_space<vmem>>) attributes {dimension_semantics = [#tpu.dimension_semantics<parallel>], iteration_bounds = array<i64: 1>, scalar_prefetch = 0 : i64, scratch_operands = 0 : i64, tpu.core_type = #tpu.core_type<tc>, window_params = [{transform_indices = @transform_0, window_bounds = array<i64: 162, 726>}, {pipeline_mode = #tpu.pipeline_mode<synchronous>, transform_indices = @transform_1, window_bounds = array<i64: 726, 32>}, {pipeline_mode = #tpu.pipeline_mode<synchronous>, transform_indices = @transform_2, window_bounds = array<i64: 1, 32>}, {transform_indices = @transform_3, window_bounds = array<i64: 162, 16>}]} {
    %c0 = arith.constant 0 : index
    %c0_0 = arith.constant 0 : index
    %0 = vector.load %arg1[%c0, %c0_0] : memref<162x726xf32, #tpu.memory_space<vmem>>, vector<162x726xf32>
    %c0_1 = arith.constant 0 : index
    %c0_2 = arith.constant 0 : index
    %1 = vector.load %arg2[%c0_1, %c0_2] : memref<726x32xf32, #tpu.memory_space<vmem>>, vector<726x32xf32>
    %cst = arith.constant dense<0.000000e+00> : vector<162x32xf32>
    %2 = tpu.matmul %0, %1, %cst {dimension_numbers = #tpu.dot_dimension_numbers<[1], [0], [0], [1], [0, 0, 1, 1], [], []>} : vector<162x726xf32>, vector<726x32xf32>, vector<162x32xf32> -> vector<162x32xf32>
    %c0_3 = arith.constant 0 : index
    %c0_4 = arith.constant 0 : index
    %3 = vector.load %arg3[%c0_3, %c0_4] : memref<1x32xf32, #tpu.memory_space<vmem>>, vector<1x32xf32>
    %4 = vector.broadcast %3 : vector<1x32xf32> to vector<162x32xf32>
    %5 = arith.addf %2, %4 : vector<162x32xf32>
    %cst_5 = arith.constant 0.999994993 : f32
    %6 = vector.broadcast %cst_5 : f32 to vector<162x32xf32>
    %7 = arith.mulf %5, %6 : vector<162x32xf32>
    %8 = vector.extract_strided_slice %7 {offsets = [0, 16], sizes = [162, 16], strides = [1, 1]} : vector<162x32xf32> to vector<162x16xf32>
    %cst_6 = arith.constant 0.000000e+00 : f32
    %9 = vector.broadcast %cst_6 : f32 to vector<162x16xf32>
    %10 = arith.subf %9, %8 : vector<162x16xf32>
    %11 = math.exp %10 : vector<162x16xf32>
    %cst_7 = arith.constant 1.000000e+00 : f32
    %12 = vector.broadcast %cst_7 : f32 to vector<162x16xf32>
    %13 = arith.addf %12, %11 : vector<162x16xf32>
    %cst_8 = arith.constant 1.000000e+00 : f32
    %14 = vector.broadcast %cst_8 : f32 to vector<162x16xf32>
    %15 = arith.divf %14, %13 : vector<162x16xf32>
    %16 = vector.extract_strided_slice %7 {offsets = [0, 0], sizes = [162, 16], strides = [1, 1]} : vector<162x32xf32> to vector<162x16xf32>
    %17 = arith.mulf %16, %15 : vector<162x16xf32>
    %c0_9 = arith.constant 0 : index
    %c0_10 = arith.constant 0 : index
    %18 = vector.load %arg4[%c0_9, %c0_10] : memref<162x16xf32, #tpu.memory_space<vmem>>, vector<162x16xf32>
    tpu.vector_store %arg4[%c0_9, %c0_10], %17 {strides = array<i32>} : memref<162x16xf32, #tpu.memory_space<vmem>>, vector<162x16xf32>,
    return
  }
  func.func @transform_0(%arg0: i32) -> (i32, i32) {
    %c0_i32 = arith.constant 0 : i32
    %c0_i32_0 = arith.constant 0 : i32
    return %arg0, %c0_i32 : i32, i32
  }
  func.func @transform_1(%arg0: i32) -> (i32, i32) {
    %c0_i32 = arith.constant 0 : i32
    %c0_i32_0 = arith.constant 0 : i32
    %c0_i32_1 = arith.constant 0 : i32
    return %c0_i32, %c0_i32_0 : i32, i32
  }
  func.func @transform_2(%arg0: i32) -> (i32, i32) {
    %c0_i32 = arith.constant 0 : i32
    %c0_i32_0 = arith.constant 0 : i32
    %c0_i32_1 = arith.constant 0 : i32
    return %c0_i32, %c0_i32_0 : i32, i32
  }
  func.func @transform_3(%arg0: i32) -> (i32, i32) {
    %c0_i32 = arith.constant 0 : i32
    %c0_i32_0 = arith.constant 0 : i32
    return %arg0, %c0_i32 : i32, i32
  }
}

module attributes {stable_mosaic.version = 11 : i64} {
  func.func @_dense_glu_kernel(%arg0: i32, %arg1: memref<162x784xf32, #tpu.memory_space<vmem>>, %arg2: memref<784x32xf32, #tpu.memory_space<vmem>>, %arg3: memref<1x32xf32, #tpu.memory_space<vmem>>, %arg4: memref<162x16xf32, #tpu.memory_space<vmem>>) attributes {dimension_semantics = [#tpu.dimension_semantics<parallel>], iteration_bounds = array<i64: 1>, scalar_prefetch = 0 : i64, scratch_operands = 0 : i64, tpu.core_type = #tpu.core_type<tc>, window_params = [{transform_indices = @transform_0, window_bounds = array<i64: 162, 784>}, {pipeline_mode = #tpu.pipeline_mode<synchronous>, transform_indices = @transform_1, window_bounds = array<i64: 784, 32>}, {pipeline_mode = #tpu.pipeline_mode<synchronous>, transform_indices = @transform_2, window_bounds = array<i64: 1, 32>}, {transform_indices = @transform_3, window_bounds = array<i64: 162, 16>}]} {
    %c0 = arith.constant 0 : index
    %c0_0 = arith.constant 0 : index
    %0 = vector.load %arg1[%c0, %c0_0] : memref<162x784xf32, #tpu.memory_space<vmem>>, vector<162x784xf32>
    %c0_1 = arith.constant 0 : index
    %c0_2 = arith.constant 0 : index
    %1 = vector.load %arg2[%c0_1, %c0_2] : memref<784x32xf32, #tpu.memory_space<vmem>>, vector<784x32xf32>
    %cst = arith.constant dense<0.000000e+00> : vector<162x32xf32>
    %2 = tpu.matmul %0, %1, %cst {dimension_numbers = #tpu.dot_dimension_numbers<[1], [0], [0], [1], [0, 0, 1, 1], [], []>} : vector<162x784xf32>, vector<784x32xf32>, vector<162x32xf32> -> vector<162x32xf32>
    %c0_3 = arith.constant 0 : index
    %c0_4 = arith.constant 0 : index
    %3 = vector.load %arg3[%c0_3, %c0_4] : memref<1x32xf32, #tpu.memory_space<vmem>>, vector<1x32xf32>
    %4 = vector.broadcast %3 : vector<1x32xf32> to vector<162x32xf32>
    %5 = arith.addf %2, %4 : vector<162x32xf32>
    %cst_5 = arith.constant 0.999994993 : f32
    %6 = vector.broadcast %cst_5 : f32 to vector<162x32xf32>
    %7 = arith.mulf %5, %6 : vector<162x32xf32>
    %8 = vector.extract_strided_slice %7 {offsets = [0, 16], sizes = [162, 16], strides = [1, 1]} : vector<162x32xf32> to vector<162x16xf32>
    %cst_6 = arith.constant 0.000000e+00 : f32
    %9 = vector.broadcast %cst_6 : f32 to vector<162x16xf32>
    %10 = arith.subf %9, %8 : vector<162x16xf32>
    %11 = math.exp %10 : vector<162x16xf32>
    %cst_7 = arith.constant 1.000000e+00 : f32
    %12 = vector.broadcast %cst_7 : f32 to vector<162x16xf32>
    %13 = arith.addf %12, %11 : vector<162x16xf32>
    %cst_8 = arith.constant 1.000000e+00 : f32
    %14 = vector.broadcast %cst_8 : f32 to vector<162x16xf32>
    %15 = arith.divf %14, %13 : vector<162x16xf32>
    %16 = vector.extract_strided_slice %7 {offsets = [0, 0], sizes = [162, 16], strides = [1, 1]} : vector<162x32xf32> to vector<162x16xf32>
    %17 = arith.mulf %16, %15 : vector<162x16xf32>
    %c0_9 = arith.constant 0 : index
    %c0_10 = arith.constant 0 : index
    %18 = vector.load %arg4[%c0_9, %c0_10] : memref<162x16xf32, #tpu.memory_space<vmem>>, vector<162x16xf32>
    tpu.vector_store %arg4[%c0_9, %c0_10], %17 {strides = array<i32>} : memref<162x16xf32, #tpu.memory_space<vmem>>, vector<162x16xf32>,
    return
  }
  func.func @transform_0(%arg0: i32) -> (i32, i32) {
    %c0_i32 = arith.constant 0 : i32
    %c0_i32_0 = arith.constant 0 : i32
    return %arg0, %c0_i32 : i32, i32
  }
  func.func @transform_1(%arg0: i32) -> (i32, i32) {
    %c0_i32 = arith.constant 0 : i32
    %c0_i32_0 = arith.constant 0 : i32
    %c0_i32_1 = arith.constant 0 : i32
    return %c0_i32, %c0_i32_0 : i32, i32
  }
  func.func @transform_2(%arg0: i32) -> (i32, i32) {
    %c0_i32 = arith.constant 0 : i32
    %c0_i32_0 = arith.constant 0 : i32
    %c0_i32_1 = arith.constant 0 : i32
    return %c0_i32, %c0_i32_0 : i32, i32
  }
  func.func @transform_3(%arg0: i32) -> (i32, i32) {
    %c0_i32 = arith.constant 0 : i32
    %c0_i32_0 = arith.constant 0 : i32
    return %arg0, %c0_i32 : i32, i32
  }
}

module attributes {stable_mosaic.version = 11 : i64} {
  func.func @_dense_glu_kernel(%arg0: i32, %arg1: memref<162x784xf32, #tpu.memory_space<vmem>>, %arg2: memref<784x32xf32, #tpu.memory_space<vmem>>, %arg3: memref<1x32xf32, #tpu.memory_space<vmem>>, %arg4: memref<162x16xf32, #tpu.memory_space<vmem>>) attributes {dimension_semantics = [#tpu.dimension_semantics<parallel>], iteration_bounds = array<i64: 1>, scalar_prefetch = 0 : i64, scratch_operands = 0 : i64, tpu.core_type = #tpu.core_type<tc>, window_params = [{transform_indices = @transform_0, window_bounds = array<i64: 162, 784>}, {pipeline_mode = #tpu.pipeline_mode<synchronous>, transform_indices = @transform_1, window_bounds = array<i64: 784, 32>}, {pipeline_mode = #tpu.pipeline_mode<synchronous>, transform_indices = @transform_2, window_bounds = array<i64: 1, 32>}, {transform_indices = @transform_3, window_bounds = array<i64: 162, 16>}]} {
    %c0 = arith.constant 0 : index
    %c0_0 = arith.constant 0 : index
    %0 = vector.load %arg1[%c0, %c0_0] : memref<162x784xf32, #tpu.memory_space<vmem>>, vector<162x784xf32>
    %c0_1 = arith.constant 0 : index
    %c0_2 = arith.constant 0 : index
    %1 = vector.load %arg2[%c0_1, %c0_2] : memref<784x32xf32, #tpu.memory_space<vmem>>, vector<784x32xf32>
    %cst = arith.constant dense<0.000000e+00> : vector<162x32xf32>
    %2 = tpu.matmul %0, %1, %cst {dimension_numbers = #tpu.dot_dimension_numbers<[1], [0], [0], [1], [0, 0, 1, 1], [], []>} : vector<162x784xf32>, vector<784x32xf32>, vector<162x32xf32> -> vector<162x32xf32>
    %c0_3 = arith.constant 0 : index
    %c0_4 = arith.constant 0 : index
    %3 = vector.load %arg3[%c0_3, %c0_4] : memref<1x32xf32, #tpu.memory_space<vmem>>, vector<1x32xf32>
    %4 = vector.broadcast %3 : vector<1x32xf32> to vector<162x32xf32>
    %5 = arith.addf %2, %4 : vector<162x32xf32>
    %cst_5 = arith.constant 1.000000e+00 : f32
    %6 = vector.broadcast %cst_5 : f32 to vector<162x32xf32>
    %7 = arith.mulf %5, %6 : vector<162x32xf32>
    %8 = vector.extract_strided_slice %7 {offsets = [0, 16], sizes = [162, 16], strides = [1, 1]} : vector<162x32xf32> to vector<162x16xf32>
    %cst_6 = arith.constant 0.000000e+00 : f32
    %9 = vector.broadcast %cst_6 : f32 to vector<162x16xf32>
    %10 = arith.subf %9, %8 : vector<162x16xf32>
    %11 = math.exp %10 : vector<162x16xf32>
    %cst_7 = arith.constant 1.000000e+00 : f32
    %12 = vector.broadcast %cst_7 : f32 to vector<162x16xf32>
    %13 = arith.addf %12, %11 : vector<162x16xf32>
    %cst_8 = arith.constant 1.000000e+00 : f32
    %14 = vector.broadcast %cst_8 : f32 to vector<162x16xf32>
    %15 = arith.divf %14, %13 : vector<162x16xf32>
    %16 = vector.extract_strided_slice %7 {offsets = [0, 0], sizes = [162, 16], strides = [1, 1]} : vector<162x32xf32> to vector<162x16xf32>
    %17 = arith.mulf %16, %15 : vector<162x16xf32>
    %c0_9 = arith.constant 0 : index
    %c0_10 = arith.constant 0 : index
    %18 = vector.load %arg4[%c0_9, %c0_10] : memref<162x16xf32, #tpu.memory_space<vmem>>, vector<162x16xf32>
    tpu.vector_store %arg4[%c0_9, %c0_10], %17 {strides = array<i32>} : memref<162x16xf32, #tpu.memory_space<vmem>>, vector<162x16xf32>,
    return
  }
  func.func @transform_0(%arg0: i32) -> (i32, i32) {
    %c0_i32 = arith.constant 0 : i32
    %c0_i32_0 = arith.constant 0 : i32
    return %arg0, %c0_i32 : i32, i32
  }
  func.func @transform_1(%arg0: i32) -> (i32, i32) {
    %c0_i32 = arith.constant 0 : i32
    %c0_i32_0 = arith.constant 0 : i32
    %c0_i32_1 = arith.constant 0 : i32
    return %c0_i32, %c0_i32_0 : i32, i32
  }
  func.func @transform_2(%arg0: i32) -> (i32, i32) {
    %c0_i32 = arith.constant 0 : i32
    %c0_i32_0 = arith.constant 0 : i32
    %c0_i32_1 = arith.constant 0 : i32
    return %c0_i32, %c0_i32_0 : i32, i32
  }
  func.func @transform_3(%arg0: i32) -> (i32, i32) {
    %c0_i32 = arith.constant 0 : i32
    %c0_i32_0 = arith.constant 0 : i32
    return %arg0, %c0_i32 : i32, i32
  }
}

module attributes {stable_mosaic.version = 11 : i64} {
  func.func @_dense_bias_kernel(%arg0: i32, %arg1: memref<162x784xf32, #tpu.memory_space<vmem>>, %arg2: memref<784x2xf32, #tpu.memory_space<vmem>>, %arg3: memref<1x2xf32, #tpu.memory_space<vmem>>, %arg4: memref<162x2xf32, #tpu.memory_space<vmem>>) attributes {dimension_semantics = [#tpu.dimension_semantics<parallel>], iteration_bounds = array<i64: 1>, scalar_prefetch = 0 : i64, scratch_operands = 0 : i64, tpu.core_type = #tpu.core_type<tc>, window_params = [{transform_indices = @transform_0, window_bounds = array<i64: 162, 784>}, {pipeline_mode = #tpu.pipeline_mode<synchronous>, transform_indices = @transform_1, window_bounds = array<i64: 784, 2>}, {pipeline_mode = #tpu.pipeline_mode<synchronous>, transform_indices = @transform_2, window_bounds = array<i64: 1, 2>}, {transform_indices = @transform_3, window_bounds = array<i64: 162, 2>}]} {
    %c0 = arith.constant 0 : index
    %c0_0 = arith.constant 0 : index
    %0 = vector.load %arg1[%c0, %c0_0] : memref<162x784xf32, #tpu.memory_space<vmem>>, vector<162x784xf32>
    %c0_1 = arith.constant 0 : index
    %c0_2 = arith.constant 0 : index
    %1 = vector.load %arg2[%c0_1, %c0_2] : memref<784x2xf32, #tpu.memory_space<vmem>>, vector<784x2xf32>
    %cst = arith.constant dense<0.000000e+00> : vector<162x2xf32>
    %2 = tpu.matmul %0, %1, %cst {dimension_numbers = #tpu.dot_dimension_numbers<[1], [0], [0], [1], [0, 0, 1, 1], [], []>} : vector<162x784xf32>, vector<784x2xf32>, vector<162x2xf32> -> vector<162x2xf32>
    %c0_3 = arith.constant 0 : index
    %c0_4 = arith.constant 0 : index
    %3 = vector.load %arg3[%c0_3, %c0_4] : memref<1x2xf32, #tpu.memory_space<vmem>>, vector<1x2xf32>
    %4 = vector.broadcast %3 : vector<1x2xf32> to vector<162x2xf32>
    %5 = arith.addf %2, %4 : vector<162x2xf32>
    %cst_5 = arith.constant 1.000000e+00 : f32
    %6 = vector.broadcast %cst_5 : f32 to vector<162x2xf32>
    %7 = arith.mulf %5, %6 : vector<162x2xf32>
    %c0_6 = arith.constant 0 : index
    %c0_7 = arith.constant 0 : index
    %8 = vector.load %arg4[%c0_6, %c0_7] : memref<162x2xf32, #tpu.memory_space<vmem>>, vector<162x2xf32>
    tpu.vector_store %arg4[%c0_6, %c0_7], %7 {strides = array<i32>} : memref<162x2xf32, #tpu.memory_space<vmem>>, vector<162x2xf32>,
    return
  }
  func.func @transform_0(%arg0: i32) -> (i32, i32) {
    %c0_i32 = arith.constant 0 : i32
    %c0_i32_0 = arith.constant 0 : i32
    return %arg0, %c0_i32 : i32, i32
  }
  func.func @transform_1(%arg0: i32) -> (i32, i32) {
    %c0_i32 = arith.constant 0 : i32
    %c0_i32_0 = arith.constant 0 : i32
    %c0_i32_1 = arith.constant 0 : i32
    return %c0_i32, %c0_i32_0 : i32, i32
  }
  func.func @transform_2(%arg0: i32) -> (i32, i32) {
    %c0_i32 = arith.constant 0 : i32
    %c0_i32_0 = arith.constant 0 : i32
    %c0_i32_1 = arith.constant 0 : i32
    return %c0_i32, %c0_i32_0 : i32, i32
  }
  func.func @transform_3(%arg0: i32) -> (i32, i32) {
    %c0_i32 = arith.constant 0 : i32
    %c0_i32_0 = arith.constant 0 : i32
    return %arg0, %c0_i32 : i32, i32
  }
}

</mosaic_0001>

<llo_original>
// kernel: degli_forward.9
$region0: #{degli_forward.9}
  #allocation0 [shape = 'u32[]', space=smem, size = 0x4, offset = 0x4, fixed_abs, tag = 'smem constant byte address 0x4 - core index']
  #allocation1 [shape = 'u32[72,128]{1,0:T(1,128)}', space=vmem, size = 0x9000, scoped, tag = 'internal scratch']
  %s0 = inlined_call_operand.vmem [shape: f32[2,2,9,9], index: 0, kind: input, shape index: {}]
  %s1 = inlined_call_operand.vmem [shape: f32[2,1,9,9], index: 1, kind: input, shape index: {}]
  %s2 = inlined_call_operand.vmem [shape: f32[2,2,9,9], index: 2, kind: output, shape index: {}]
  %s3 = sld [smem:[#allocation0]]
  $region41: #{degli_forward.9} parent=0
    _
  %s5 = ssub.s32 1, %s3
  %s6 = scalar_select 0, %s5, %s3
  loop: start=0, step=1, limit=4
  $region2: #{degli_forward.9} parent=0 // loop_pre_header
    _
  $region3: #{degli_forward.9} parent=0 // loop_header
    %s8 = sphi 0, %s12
    %p9 = scmp.ge.s32.totalorder %s8, 4
    %s18 = sphi 0, %s20
    %s21 = sphi 0, %s18
    %s22 = sphi 0, %s21
    %s38 = sphi 0, %s22
    %s44 = sphi 0, %s46
    %s47 = sphi 0, %s44
    %s48 = sphi 0, %s47
    %s64 = sphi 0, %s48
    %s70 = sphi 0, %s72
    %s73 = sphi 0, %s70
    %s74 = sphi 0, %s73
    %s90 = sphi 0, %s74
  $region4: #{degli_forward.9} parent=0 // loop_header_branch
    %11 = sbr.rel (%p9) target = $region8
  $region5: #{degli_forward.9} parent=0 // loop_body
    %s13 = ssub.s32 %s8, 1
    %s14 = ssub.s32 %s8, 2
    %s15 = sadd.s32 %s8, 1
    %s16 = ssub.s32 %s8, %s15
    %p17 = scmp.eq.s32.totalorder %s16, 0
    %s19 = sadd.s32 %s18, 1
    %s20 = scalar_select %p17, %s18, %s19
    %p23 = pneg %p17
    %p24 = scmp.eq.s32.totalorder %s8, 1
    %p25 = por %p23, %p24
    %p26 = scmp.ne.s32.totalorder %s18, %s21
    %p27 = scmp.eq.s32.totalorder %s8, 0
    %p28 = por %p26, %p27
    %p29 = scmp.ne.s32.totalorder %s18, %s21
    %p30 = scmp.eq.s32.totalorder %s13, 1
    %p31 = por %p29, %p30
    %p32 = scmp.ne.s32.totalorder %s21, %s22
    %p33 = scmp.eq.s32.totalorder %s13, 0
    %p34 = por %p32, %p33
    %p35 = scmp.ne.s32.totalorder %s21, %s22
    %p36 = scmp.eq.s32.totalorder %s14, 1
    %p37 = por %p35, %p36
    %p39 = scmp.ne.s32.totalorder %s22, %s38
    %p40 = scmp.eq.s32.totalorder %s14, 0
    %p41 = por %p39, %p40
    %s42 = ssub.s32 %s8, %s15
    %p43 = scmp.eq.s32.totalorder %s42, 0
    %s45 = sadd.s32 %s44, 1
    %s46 = scalar_select %p43, %s44, %s45
    %p49 = pneg %p43
    %p50 = scmp.eq.s32.totalorder %s8, 1
    %p51 = por %p49, %p50
    %p52 = scmp.ne.s32.totalorder %s44, %s47
    %p53 = scmp.eq.s32.totalorder %s8, 0
    %p54 = por %p52, %p53
    %p55 = scmp.ne.s32.totalorder %s44, %s47
    %p56 = scmp.eq.s32.totalorder %s13, 1
    %p57 = por %p55, %p56
    %p58 = scmp.ne.s32.totalorder %s47, %s48
    %p59 = scmp.eq.s32.totalorder %s13, 0
    %p60 = por %p58, %p59
    %p61 = scmp.ne.s32.totalorder %s47, %s48
    %p62 = scmp.eq.s32.totalorder %s14, 1
    %p63 = por %p61, %p62
    %p65 = scmp.ne.s32.totalorder %s48, %s64
    %p66 = scmp.eq.s32.totalorder %s14, 0
    %p67 = por %p65, %p66
    %s68 = ssub.s32 %s8, %s15
    %p69 = scmp.eq.s32.totalorder %s68, 0
    %s71 = sadd.s32 %s70, 1
    %s72 = scalar_select %p69, %s70, %s71
    %p75 = pneg %p69
    %p76 = scmp.eq.s32.totalorder %s8, 1
    %p77 = por %p75, %p76
    %p78 = scmp.ne.s32.totalorder %s70, %s73
    %p79 = scmp.eq.s32.totalorder %s8, 0
    %p80 = por %p78, %p79
    %p81 = scmp.ne.s32.totalorder %s70, %s73
    %p82 = scmp.eq.s32.totalorder %s13, 1
    %p83 = por %p81, %p82
    %p84 = scmp.ne.s32.totalorder %s73, %s74
    %p85 = scmp.eq.s32.totalorder %s13, 0
    %p86 = por %p84, %p85
    %p87 = scmp.ne.s32.totalorder %s73, %s74
    %p88 = scmp.eq.s32.totalorder %s14, 1
    %p89 = por %p87, %p88
    %p91 = scmp.ne.s32.totalorder %s74, %s90
    %p92 = scmp.eq.s32.totalorder %s14, 0
    %p93 = por %p91, %p92
    %p94 = scmp.le.s32.totalorder 1, %s8
    %p95 = scmp.lt.s32.totalorder %s8, 3
    %p96 = pnand %p94, %p95
    %p97 = pneg %p96
    // Predicated region
    $region9: #{degli_forward.9} parent=5 // pred_check
      _
    $region10: #{degli_forward.9} parent=5 // pred_check_branch
      %99 = sbr.rel (%p96) target = $region12
    $region11: #{degli_forward.9} parent=5 // pred_region
      %s100 = ssub.s32 %s8, 1
    $region12: #{degli_forward.9} parent=5 // pred_fallthru
      _
    %p101 = scmp.lt.s32.totalorder %s8, 2
    // Predicated region
    $region13: #{degli_forward.9} parent=5 // pred_check
      %p102 = pneg %p101
    $region14: #{degli_forward.9} parent=5 // pred_check_branch
      %104 = sbr.rel (%p102) target = $region16
    $region15: #{degli_forward.9} parent=5 // pred_region
      // Predicated region
      $region17: #{degli_forward.9} parent=15 // pred_check
        %p105 = pneg %p28
      $region18: #{degli_forward.9} parent=15 // pred_check_branch
        %107 = sbr.rel (%p105) target = $region20
      $region19: #{degli_forward.9} parent=15 // pred_region
        %p108 = scmp.lt.s32.totalorder %s8, 1
        %s109 = scalar_select %p108, %s8, 1
        %s110 = smul.addr %s109, 4
        %s111 = smul.addr %s110, 8
        %s112 = scalar_lea.vmem %s0, %s111
      $region20: #{degli_forward.9} parent=15 // pred_fallthru
        _
      // Predicated region
      $region21: #{degli_forward.9} parent=15 // pred_check
        %p113 = pneg %p54
      $region22: #{degli_forward.9} parent=15 // pred_check_branch
        %115 = sbr.rel (%p113) target = $region24
      $region23: #{degli_forward.9} parent=15 // pred_region
        %p116 = scmp.lt.s32.totalorder %s8, 1
        %s117 = scalar_select %p116, %s8, 1
        %s118 = smul.addr %s117, 2
        %s119 = smul.addr %s118, 8
        %s120 = scalar_lea.vmem %s1, %s119
      $region24: #{degli_forward.9} parent=15 // pred_fallthru
        _
    $region16: #{degli_forward.9} parent=5 // pred_fallthru
      _
    %p121 = scmp.le.s32.totalorder 1, %s8
    %p122 = scmp.lt.s32.totalorder %s8, 3
    %p123 = pnand %p121, %p122
    %p124 = pneg %p123
    // Predicated region
    $region25: #{degli_forward.9} parent=5 // pred_check
      _
    $region26: #{degli_forward.9} parent=5 // pred_check_branch
      %126 = sbr.rel (%p123) target = $region28
    $region27: #{degli_forward.9} parent=5 // pred_region
      %s127 = ssub.s32 %s8, 1
      %p128 = scmp.lt.s32.totalorder %s13, 1
      %s129 = scalar_select %p128, %s13, 1
      %s130 = smul.addr %s129, 4
      %s131 = smul.addr %s130, 8
      %s132 = scalar_lea.vmem %s0, %s131
      %p133 = pneg %p34
      %p134 = pneg %p31
      %p135 = scmp.lt.s32.totalorder %s13, 1
      %s136 = scalar_select %p135, %s13, 1
      %s137 = smul.addr %s136, 2
      %s138 = smul.addr %s137, 8
      %s139 = scalar_lea.vmem %s1, %s138
      %p140 = pneg %p60
      %p141 = pneg %p57
      %p142 = pneg %p86
      %p143 = pneg %p83
      %p144 = scmp.lt.s32.totalorder %s13, 1
      %s145 = scalar_select %p144, %s13, 1
      %s146 = smul.addr %s145, 4
      %s147 = smul.addr %s146, 8
      %s148 = scalar_lea.vmem %s2, %s147
      %p149 = scmp.lt.s32.totalorder %s13, 1
      %s150 = scalar_select %p149, %s13, 1
      %s151 = smul.addr %s150, 4
      %s152 = smul.addr %s151, 8
      %s153 = scalar_lea.vmem %s0, %s152
      %p154 = scmp.lt.s32.totalorder %s13, 1
      %s155 = scalar_select %p154, %s13, 1
      %s156 = smul.addr %s155, 2
      %s157 = smul.addr %s156, 8
      %s158 = scalar_lea.vmem %s1, %s157
      %p159 = scmp.lt.s32.totalorder %s13, 1
      %s160 = scalar_select %p159, %s13, 1
      %s161 = smul.addr %s160, 4
      %s162 = smul.addr %s161, 8
      %s163 = scalar_lea.vmem %s2, %s162
      %v164 = vld [vmem:[%s153] sm:$0xff]
      %v165 = vld [vmem:[%s153 + $0x8] sm:$0x1]
      %s166 = scalar_lea.vmem %s153, 16
      %v167 = vld [vmem:[%s166] sm:$0xff]
      %v168 = vld [vmem:[%s166 + $0x8] sm:$0x1]
      %v169 = vld [vmem:[%s158] sm:$0xff]
      %v170 = vld [vmem:[%s158 + $0x8] sm:$0x1]
      %v171 = vmul.f32 %v164, %v164
      %v172 = vmul.f32 %v165, %v165
      %v173 = vmul.f32 %v167, %v167
      %v174 = vmul.f32 %v168, %v168
      %v175 = vadd.f32 %v171, %v173
      %v176 = vadd.f32 %v172, %v174
      %vm177 = vcmp.gt.f32.partialorder %v175, 0.0
      %vm178 = vcmp.gt.f32.partialorder %v176, 0.0
      %v179 = vsel %vm177, %v175, 1.0
      %v180 = vsel %vm178, %v176, 1.0
      %v181 = vrsqrt.pop %v179
      %v182 = vmul.f32 %v181, %v179
      %v183 = vmul.f32 %v182, %v181
      %v184 = vmul.f32 0.5, %v183
      %v185 = vsub.f32 1.5, %v184
      %v186 = vmul.f32 %v181, %v185
      %vm187 = vweird.f32 %v179
      %vm188 = vweird.f32 %v181
      %vm189 = vmor %vm187, %vm188
      %v190 = vsel %vm189, %v181, %v186
      %v191 = vrsqrt.pop %v180
      %v192 = vmul.f32 %v191, %v180
      %v193 = vmul.f32 %v192, %v191
      %v194 = vmul.f32 0.5, %v193
      %v195 = vsub.f32 1.5, %v194
      %v196 = vmul.f32 %v191, %v195
      %vm197 = vweird.f32 %v180
      %vm198 = vweird.f32 %v191
      %vm199 = vmor %vm197, %vm198
      %v200 = vsel %vm199, %v191, %v196
      %v201 = vmul.f32 %v164, %v190
      %v202 = vmul.f32 %v165, %v200
      %v203 = vsel %vm177, %v201, 1.0
      %v204 = vsel %vm178, %v202, 1.0
      %v205 = vmul.f32 %v169, %v203
      %v206 = vmul.f32 %v170, %v204
      %vm207 = vcmask 72704
      %208 = vst.msk [vmem:[%s163] sm:$0xff] %vm207, %v205
      %vm209 = vcmask 65536
      %210 = vst.msk [vmem:[%s163 + $0x8] sm:$0x1] %vm209, %v206
      %v211 = vmul.f32 %v167, %v190
      %v212 = vmul.f32 %v168, %v200
      %v213 = vsel %vm177, %v211, 0.0
      %v214 = vsel %vm178, %v212, 0.0
      %v215 = vmul.f32 %v169, %v213
      %v216 = vmul.f32 %v170, %v214
      %s217 = scalar_lea.vmem %s163, 16
      %218 = vst.msk [vmem:[%s217] sm:$0xff] %vm207, %v215
      %219 = vst.msk [vmem:[%s217 + $0x8] sm:$0x1] %vm209, %v216
      %p220 = scmp.lt.s32.totalorder %s13, 1
      %s221 = scalar_select %p220, %s13, 1
      %s222 = smul.addr %s221, 4
      %s223 = smul.addr %s222, 8
      %s224 = scalar_lea.vmem %s2, %s223
      // Predicated region
      $region29: #{degli_forward.9} parent=27 // pred_check
        %p225 = pneg %p83
      $region30: #{degli_forward.9} parent=27 // pred_check_branch
        %227 = sbr.rel (%p225) target = $region32
      $region31: #{degli_forward.9} parent=27 // pred_region
        _
      $region32: #{degli_forward.9} parent=27 // pred_fallthru
        _
    $region28: #{degli_forward.9} parent=5 // pred_fallthru
      _
    %p228 = scmp.le.s32.totalorder 2, %s8
    // Predicated region
    $region33: #{degli_forward.9} parent=5 // pred_check
      %p229 = pneg %p228
    $region34: #{degli_forward.9} parent=5 // pred_check_branch
      %231 = sbr.rel (%p229) target = $region36
    $region35: #{degli_forward.9} parent=5 // pred_region
      %s232 = ssub.s32 %s8, 2
      // Predicated region
      $region37: #{degli_forward.9} parent=35 // pred_check
        %p233 = pneg %p89
      $region38: #{degli_forward.9} parent=35 // pred_check_branch
        %235 = sbr.rel (%p233) target = $region40
      $region39: #{degli_forward.9} parent=35 // pred_region
        %p236 = scmp.lt.s32.totalorder %s14, 1
        %s237 = scalar_select %p236, %s14, 1
        %s238 = smul.addr %s237, 4
        %s239 = smul.addr %s238, 8
        %s240 = scalar_lea.vmem %s2, %s239
      $region40: #{degli_forward.9} parent=35 // pred_fallthru
        _
    $region36: #{degli_forward.9} parent=5 // pred_fallthru
      _
  $region6: #{degli_forward.9} parent=0 // loop_footer
    %s12 = sadd.s32 1, %s8
  $region7: #{degli_forward.9} parent=0 // loop_footer_branch
    %7 = sbr.rel target = $region3
  $region8: #{degli_forward.9} parent=0 // loop_exit
    _

// kernel: degli_forward.10
$region0: #{degli_forward.10}
  #allocation0 [shape = 'u32[]', space=smem, size = 0x4, offset = 0x4, fixed_abs, tag = 'smem constant byte address 0x4 - core index']
  #allocation1 [shape = 'u32[72,128]{1,0:T(1,128)}', space=vmem, size = 0x9000, scoped, tag = 'internal scratch']
  %s0 = inlined_call_operand.vmem [shape: f32[18,18], index: 0, kind: input, shape index: {}]
  %s1 = inlined_call_operand.vmem [shape: f32[18,16], index: 1, kind: input, shape index: {}]
  %s2 = inlined_call_operand.vmem [shape: f32[1,16], index: 2, kind: input, shape index: {}]
  %s3 = inlined_call_operand.vmem [shape: f32[18,16], index: 3, kind: output, shape index: {}]
  %s4 = sld [smem:[#allocation0]]
  $region22: #{degli_forward.10} parent=0
    _
  %s6 = ssub.s32 1, %s4
  %s7 = scalar_select 0, %s6, %s4
  // Predicated region
  $region2: #{degli_forward.10} parent=0 // pred_check
    _
  $region3: #{degli_forward.10} parent=0 // pred_check_branch
    %9 = sbr.rel (0) target = $region5
  $region4: #{degli_forward.10} parent=0 // pred_region
    _
  $region5: #{degli_forward.10} parent=0 // pred_fallthru
    _
  // Predicated region
  $region6: #{degli_forward.10} parent=0 // pred_check
    _
  $region7: #{degli_forward.10} parent=0 // pred_check_branch
    %11 = sbr.rel (0) target = $region9
  $region8: #{degli_forward.10} parent=0 // pred_region
    _
  $region9: #{degli_forward.10} parent=0 // pred_fallthru
    _
  // Predicated region
  $region10: #{degli_forward.10} parent=0 // pred_check
    _
  $region11: #{degli_forward.10} parent=0 // pred_check_branch
    %13 = sbr.rel (0) target = $region13
  $region12: #{degli_forward.10} parent=0 // pred_region
    _
  $region13: #{degli_forward.10} parent=0 // pred_fallthru
    _
  %v14 = vld [vmem:[%s0] sm:$0xff]
  %v15 = vld [vmem:[%s0 + $0x8] sm:$0xff]
  %v16 = vld [vmem:[%s0 + $0x10] sm:$0x3]
  %v17 = vld [vmem:[%s1] sm:$0xff]
  %v18 = vld [vmem:[%s1 + $0x8] sm:$0xff]
  %v19 = vld [vmem:[%s1 + $0x10] sm:$0x3]
  %v20 = vld [vmem:[%s2] sm:$0x1]
  %v22 = vperm.slane %v20, 0
  %vm24 = vcmask 146432
  %v26 = vsel %vm24, %v14, 0
  %v29 = vsel %vm24, %v15, 0
  %v32 = vsel %vm24, %v16, 0
  %vm34 = vcmask 1041408
  %v36 = vsel %vm34, %v19, 0
  %38 = vmatpush.msra.mxu0 0.0
  %39 = vmatpush.msra.mxu0 0.0
  %40 = vmatpush.msra.mxu0 0.0
  %41 = vmatpush.msra.mxu0 0.0
  %42 = vmatpush.msra.mxu0 0.0
  %43 = vmatpush.msra.mxu0 0.0
  %44 = vmatpush.msra.mxu0 0.0
  %45 = vmatpush.msra.mxu0 0.0
  %46 = vmatpush.msra.mxu0 0.0
  %47 = vmatpush.msra.mxu0 0.0
  %48 = vmatpush.msra.mxu0 0.0
  %49 = vmatpush.msra.mxu0 0.0
  %50 = vmatpush.msra.mxu0 0.0
  %51 = vmatpush.msra.mxu0 %v36
  %52 = vmatpush.msra.mxu0 %v18
  %53 = vmatpush.msra.mxu0 %v17
  %54 = vmatmul.f32.gmra.mxu0 %v26
  %v55 = vpop.f32.mrf.mxu0
  %v56 = vadd.f32 %v22, %v55
  %57 = vmatmul.f32.gmra.mxu0 %v29
  %v58 = vpop.f32.mrf.mxu0
  %v59 = vadd.f32 %v22, %v58
  %60 = vmatmul.f32.gmra.mxu0 %v32
  %v61 = vpop.f32.mrf.mxu0
  %v62 = vadd.f32 %v22, %v61
  %63 = vdwg.mxu0
  %vm64 = vcmask 130048
  %65 = vst.msk [vmem:[%s3] sm:$0xff] %vm64, %v56
  %66 = vst.msk [vmem:[%s3 + $0x8] sm:$0xff] %vm64, %v59
  %vm67 = vcmask 123904
  %68 = vst.msk [vmem:[%s3 + $0x10] sm:$0x3] %vm67, %v62
  // Predicated region
  $region14: #{degli_forward.10} parent=0 // pred_check
    _
  $region15: #{degli_forward.10} parent=0 // pred_check_branch
    %70 = sbr.rel (0) target = $region17
  $region16: #{degli_forward.10} parent=0 // pred_region
    _
  $region17: #{degli_forward.10} parent=0 // pred_fallthru
    _
  // Predicated region
  $region18: #{degli_forward.10} parent=0 // pred_check
    _
  $region19: #{degli_forward.10} parent=0 // pred_check_branch
    %72 = sbr.rel (0) target = $region21
  $region20: #{degli_forward.10} parent=0 // pred_region
    _
  $region21: #{degli_forward.10} parent=0 // pred_fallthru
    _

// kernel: degli_forward.11
$region0: #{degli_forward.11}
  #allocation0 [shape = 'u32[]', space=smem, size = 0x4, offset = 0x4, fixed_abs, tag = 'smem constant byte address 0x4 - core index']
  #allocation1 [shape = 'u32[72,128]{1,0:T(1,128)}', space=vmem, size = 0x9000, scoped, tag = 'internal scratch']
  %s0 = inlined_call_operand.vmem [shape: f32[18,16], index: 0, kind: input, shape index: {}]
  %s1 = inlined_call_operand.hbm [shape: f32[16,18], index: 1, kind: input, shape index: {}]
  %s2 = inlined_call_operand.vmem [shape: f32[1,18], index: 2, kind: input, shape index: {}]
  %s3 = inlined_call_operand.vmem [shape: f32[18,18], index: 3, kind: output, shape index: {}]
  %s4 = sld [smem:[#allocation0]]
  $region26: #{degli_forward.11} parent=0
    _
  %s6 = ssub.s32 1, %s4
  %s7 = scalar_select 0, %s6, %s4
  $region1: #{degli_forward.11} parent=0
    #allocation2 [shape = 'u8[8192]{0}', space=vmem, size = 0x2000, scoped, tag = 'input window, operand 1, single buffered']
    #allocation3 [shape = 's32[1]{0}', space=sflag, size = 0x4, scoped, tag = 'scoped memory for degli_forward.11']
    %8 = vsyncpa [#allocation3], 0
    // Predicated region
    $region2: #{degli_forward.11} parent=1 // pred_check
      _
    $region3: #{degli_forward.11} parent=1 // pred_check_branch
      %10 = sbr.rel (0) target = $region5
    $region4: #{degli_forward.11} parent=1 // pred_region
      _
    $region5: #{degli_forward.11} parent=1 // pred_fallthru
      _
    // Predicated region
    $region6: #{degli_forward.11} parent=1 // pred_check
      _
    $region7: #{degli_forward.11} parent=1 // pred_check_branch
      %12 = sbr.rel (0) target = $region9
    $region8: #{degli_forward.11} parent=1 // pred_region
      %14 = vsyncadd [#allocation3], 0
      %s15 = sshll.u32 %s1, 4
      %s16 = int_to_ptr.hbm [resolvable:$true] %s15
      %s17 = sshll.u32 [#allocation2], 4
      %s18 = int_to_ptr.vmem [resolvable:$true] %s17
      %23 = dma.hbm_to_vmem [thread:$0]  %s16, 256, %s18, [#allocation3], 128, 128, 8
    $region9: #{degli_forward.11} parent=1 // pred_fallthru
      _
    // Predicated region
    $region10: #{degli_forward.11} parent=1 // pred_check
      _
    $region11: #{degli_forward.11} parent=1 // pred_check_branch
      %25 = sbr.rel (0) target = $region13
    $region12: #{degli_forward.11} parent=1 // pred_region
      _
    $region13: #{degli_forward.11} parent=1 // pred_fallthru
      _
    // Predicated region
    $region14: #{degli_forward.11} parent=1 // pred_check
      _
    $region15: #{degli_forward.11} parent=1 // pred_check_branch
      %27 = sbr.rel (0) target = $region17
    $region16: #{degli_forward.11} parent=1 // pred_region
      %29 = dma.done [#allocation3], 256
    $region17: #{degli_forward.11} parent=1 // pred_fallthru
      _
    %v30 = vld [vmem:[%s0] sm:$0xff]
    %v31 = vld [vmem:[%s0 + $0x8] sm:$0xff]
    %v32 = vld [vmem:[%s0 + $0x10] sm:$0x3]
    %v33 = vld [vmem:[#allocation2] sm:$0xff]
    %v34 = vld [vmem:[#allocation2 + $0x8] sm:$0xff]
    %v35 = vld [vmem:[%s2] sm:$0x1]
    %v37 = vperm.slane %v35, 0
    %vm39 = vcmask 130048
    %v41 = vsel %vm39, %v30, 0
    %v44 = vsel %vm39, %v31, 0
    %v47 = vsel %vm39, %v32, 0
    %49 = vmatpush.msra.mxu0 0.0
    %50 = vmatpush.msra.mxu0 0.0
    %51 = vmatpush.msra.mxu0 0.0
    %52 = vmatpush.msra.mxu0 0.0
    %53 = vmatpush.msra.mxu0 0.0
    %54 = vmatpush.msra.mxu0 0.0
    %55 = vmatpush.msra.mxu0 0.0
    %56 = vmatpush.msra.mxu0 0.0
    %57 = vmatpush.msra.mxu0 0.0
    %58 = vmatpush.msra.mxu0 0.0
    %59 = vmatpush.msra.mxu0 0.0
    %60 = vmatpush.msra.mxu0 0.0
    %61 = vmatpush.msra.mxu0 0.0
    %62 = vmatpush.msra.mxu0 0.0
    %63 = vmatpush.msra.mxu0 %v34
    %64 = vmatpush.msra.mxu0 %v33
    %65 = vmatmul.f32.gmra.mxu0 %v41
    %v66 = vpop.f32.mrf.mxu0
    %v67 = vadd.f32 %v37, %v66
    %68 = vmatmul.f32.gmra.mxu0 %v44
    %v69 = vpop.f32.mrf.mxu0
    %v70 = vadd.f32 %v37, %v69
    %71 = vmatmul.f32.gmra.mxu0 %v47
    %v72 = vpop.f32.mrf.mxu0
    %v73 = vadd.f32 %v37, %v72
    %74 = vdwg.mxu0
    %vm75 = vcmask 146432
    %76 = vst.msk [vmem:[%s3] sm:$0xff] %vm75, %v67
    %77 = vst.msk [vmem:[%s3 + $0x8] sm:$0xff] %vm75, %v70
    %vm78 = vcmask 140288
    %79 = vst.msk [vmem:[%s3 + $0x10] sm:$0x3] %vm78, %v73
    // Predicated region
    $region18: #{degli_forward.11} parent=1 // pred_check
      _
    $region19: #{degli_forward.11} parent=1 // pred_check_branch
      %81 = sbr.rel (0) target = $region21
    $region20: #{degli_forward.11} parent=1 // pred_region
      _
    $region21: #{degli_forward.11} parent=1 // pred_fallthru
      _
    // Predicated region
    $region22: #{degli_forward.11} parent=1 // pred_check
      _
    $region23: #{degli_forward.11} parent=1 // pred_check_branch
      %83 = sbr.rel (0) target = $region25
    $region24: #{degli_forward.11} parent=1 // pred_region
      _
    $region25: #{degli_forward.11} parent=1 // pred_fallthru
      _
    %84 = vsyncpa [#allocation3], 1

// kernel: degli_forward.12
$region0: #{degli_forward.12}
  #allocation0 [shape = 'u32[]', space=smem, size = 0x4, offset = 0x4, fixed_abs, tag = 'smem constant byte address 0x4 - core index']
  #allocation1 [shape = 'u32[72,128]{1,0:T(1,128)}', space=vmem, size = 0x9000, scoped, tag = 'internal scratch']
  %s0 = inlined_call_operand.vmem [shape: f32[162,726], index: 0, kind: input, shape index: {}]
  %s1 = inlined_call_operand.vmem [shape: f32[726,32], index: 1, kind: input, shape index: {}]
  %s2 = inlined_call_operand.vmem [shape: f32[1,32], index: 2, kind: input, shape index: {}]
  %s3 = inlined_call_operand.vmem [shape: f32[162,16], index: 3, kind: output, shape index: {}]
  %s4 = sld [smem:[#allocation0]]
  $region22: #{degli_forward.12} parent=0
    _
  %s6 = ssub.s32 1, %s4
  %s7 = scalar_select 0, %s6, %s4
  // Predicated region
  $region2: #{degli_forward.12} parent=0 // pred_check
    _
  $region3: #{degli_forward.12} parent=0 // pred_check_branch
    %9 = sbr.rel (0) target = $region5
  $region4: #{degli_forward.12} parent=0 // pred_region
    _
  $region5: #{degli_forward.12} parent=0 // pred_fallthru
    _
  // Predicated region
  $region6: #{degli_forward.12} parent=0 // pred_check
    _
  $region7: #{degli_forward.12} parent=0 // pred_check_branch
    %11 = sbr.rel (0) target = $region9
  $region8: #{degli_forward.12} parent=0 // pred_region
    _
  $region9: #{degli_forward.12} parent=0 // pred_fallthru
    _
  // Predicated region
  $region10: #{degli_forward.12} parent=0 // pred_check
    _
  $region11: #{degli_forward.12} parent=0 // pred_check_branch
    %13 = sbr.rel (0) target = $region13
  $region12: #{degli_forward.12} parent=0 // pred_region
    _
  $region13: #{degli_forward.12} parent=0 // pred_fallthru
    _
  %v14 = vld [vmem:[%s0] sm:$0xff]
  %v15 = vld [vmem:[%s0 + $0x8] sm:$0xff]
  %v16 = vld [vmem:[%s0 + $0x10] sm:$0xff]
  %v17 = vld [vmem:[%s0 + $0x18] sm:$0xff]
  %v18 = vld [vmem:[%s0 + $0x20] sm:$0xff]
  %v19 = vld [vmem:[%s0 + $0x28] sm:$0xff]
  %v20 = vld [vmem:[%s0 + $0x30] sm:$0xff]
  %v21 = vld [vmem:[%s0 + $0x38] sm:$0xff]
  %v22 = vld [vmem:[%s0 + $0x40] sm:$0xff]
  %v23 = vld [vmem:[%s0 + $0x48] sm:$0xff]
  %v24 = vld [vmem:[%s0 + $0x50] sm:$0xff]
  %v25 = vld [vmem:[%s0 + $0x58] sm:$0xff]
  %v26 = vld [vmem:[%s0 + $0x60] sm:$0xff]
  %v27 = vld [vmem:[%s0 + $0x68] sm:$0xff]
  %v28 = vld [vmem:[%s0 + $0x70] sm:$0xff]
  %v29 = vld [vmem:[%s0 + $0x78] sm:$0xff]
  %v30 = vld [vmem:[%s0 + $0x80] sm:$0xff]
  %v31 = vld [vmem:[%s0 + $0x88] sm:$0xff]
  %v32 = vld [vmem:[%s0 + $0x90] sm:$0xff]
  %v33 = vld [vmem:[%s0 + $0x98] sm:$0xff]
  %v34 = vld [vmem:[%s0 + $0xa0] sm:$0xff]
  %v35 = vld [vmem:[%s0 + $0xa8] sm:$0xff]
  %v36 = vld [vmem:[%s0 + $0xb0] sm:$0xff]
  %v37 = vld [vmem:[%s0 + $0xb8] sm:$0xff]
  %v38 = vld [vmem:[%s0 + $0xc0] sm:$0xff]
  %v39 = vld [vmem:[%s0 + $0xc8] sm:$0xff]
  %v40 = vld [vmem:[%s0 + $0xd0] sm:$0xff]
  %v41 = vld [vmem:[%s0 + $0xd8] sm:$0xff]
  %v42 = vld [vmem:[%s0 + $0xe0] sm:$0xff]
  %v43 = vld [vmem:[%s0 + $0xe8] sm:$0xff]
  %v44 = vld [vmem:[%s0 + $0xf0] sm:$0xff]
  %v45 = vld [vmem:[%s0 + $0xf8] sm:$0xff]
  %v46 = vld [vmem:[%s0 + $0x100] sm:$0xff]
  %v47 = vld [vmem:[%s0 + $0x108] sm:$0xff]
  %v48 = vld [vmem:[%s0 + $0x110] sm:$0xff]
  %v49 = vld [vmem:[%s0 + $0x118] sm:$0xff]
  %v50 = vld [vmem:[%s0 + $0x120] sm:$0xff]
  %v51 = vld [vmem:[%s0 + $0x128] sm:$0xff]
  %v52 = vld [vmem:[%s0 + $0x130] sm:$0xff]
  %v53 = vld [vmem:[%s0 + $0x138] sm:$0xff]
  %v54 = vld [vmem:[%s0 + $0x140] sm:$0xff]
  %v55 = vld [vmem:[%s0 + $0x148] sm:$0xff]
  %v56 = vld [vmem:[%s0 + $0x150] sm:$0xff]
  %v57 = vld [vmem:[%s0 + $0x158] sm:$0xff]
  %v58 = vld [vmem:[%s0 + $0x160] sm:$0xff]
  %v59 = vld [vmem:[%s0 + $0x168] sm:$0xff]
  %v60 = vld [vmem:[%s0 + $0x170] sm:$0xff]
  %v61 = vld [vmem:[%s0 + $0x178] sm:$0xff]
  %v62 = vld [vmem:[%s0 + $0x180] sm:$0xff]
  %v63 = vld [vmem:[%s0 + $0x188] sm:$0xff]
  %v64 = vld [vmem:[%s0 + $0x190] sm:$0xff]
  %v65 = vld [vmem:[%s0 + $0x198] sm:$0xff]
  %v66 = vld [vmem:[%s0 + $0x1a0] sm:$0xff]
  %v67 = vld [vmem:[%s0 + $0x1a8] sm:$0xff]
  %v68 = vld [vmem:[%s0 + $0x1b0] sm:$0xff]
  %v69 = vld [vmem:[%s0 + $0x1b8] sm:$0xff]
  %v70 = vld [vmem:[%s0 + $0x1c0] sm:$0xff]
  %v71 = vld [vmem:[%s0 + $0x1c8] sm:$0xff]
  %v72 = vld [vmem:[%s0 + $0x1d0] sm:$0xff]
  %v73 = vld [vmem:[%s0 + $0x1d8] sm:$0xff]
  %v74 = vld [vmem:[%s0 + $0x1e0] sm:$0xff]
  %v75 = vld [vmem:[%s0 + $0x1e8] sm:$0xff]
  %v76 = vld [vmem:[%s0 + $0x1f0] sm:$0xff]
  %v77 = vld [vmem:[%s0 + $0x1f8] sm:$0xff]
  %v78 = vld [vmem:[%s0 + $0x200] sm:$0xff]
  %v79 = vld [vmem:[%s0 + $0x208] sm:$0xff]
  %v80 = vld [vmem:[%s0 + $0x210] sm:$0xff]
  %v81 = vld [vmem:[%s0 + $0x218] sm:$0xff]
  %v82 = vld [vmem:[%s0 + $0x220] sm:$0xff]
  %v83 = vld [vmem:[%s0 + $0x228] sm:$0xff]
  %v84 = vld [vmem:[%s0 + $0x230] sm:$0xff]
  %v85 = vld [vmem:[%s0 + $0x238] sm:$0xff]
  %v86 = vld [vmem:[%s0 + $0x240] sm:$0xff]
  %v87 = vld [vmem:[%s0 + $0x248] sm:$0xff]
  %v88 = vld [vmem:[%s0 + $0x250] sm:$0xff]
  %v89 = vld [vmem:[%s0 + $0x258] sm:$0xff]
  %v90 = vld [vmem:[%s0 + $0x260] sm:$0xff]
  %v91 = vld [vmem:[%s0 + $0x268] sm:$0xff]
  %v92 = vld [vmem:[%s0 + $0x270] sm:$0xff]
  %v93 = vld [vmem:[%s0 + $0x278] sm:$0xff]
  %v94 = vld [vmem:[%s0 + $0x280] sm:$0xff]
  %v95 = vld [vmem:[%s0 + $0x288] sm:$0xff]
  %v96 = vld [vmem:[%s0 + $0x290] sm:$0xff]
  %v97 = vld [vmem:[%s0 + $0x298] sm:$0xff]
  %v98 = vld [vmem:[%s0 + $0x2a0] sm:$0xff]
  %v99 = vld [vmem:[%s0 + $0x2a8] sm:$0xff]
  %v100 = vld [vmem:[%s0 + $0x2b0] sm:$0xff]
  %v101 = vld [vmem:[%s0 + $0x2b8] sm:$0xff]
  %v102 = vld [vmem:[%s0 + $0x2c0] sm:$0xff]
  %v103 = vld [vmem:[%s0 + $0x2c8] sm:$0xff]
  %v104 = vld [vmem:[%s0 + $0x2d0] sm:$0xff]
  %v105 = vld [vmem:[%s0 + $0x2d8] sm:$0xff]
  %v106 = vld [vmem:[%s0 + $0x2e0] sm:$0xff]
  %v107 = vld [vmem:[%s0 + $0x2e8] sm:$0xff]
  %v108 = vld [vmem:[%s0 + $0x2f0] sm:$0xff]
  %v109 = vld [vmem:[%s0 + $0x2f8] sm:$0xff]
  %v110 = vld [vmem:[%s0 + $0x300] sm:$0xff]
  %v111 = vld [vmem:[%s0 + $0x308] sm:$0xff]
  %v112 = vld [vmem:[%s0 + $0x310] sm:$0xff]
  %v113 = vld [vmem:[%s0 + $0x318] sm:$0xff]
  %v114 = vld [vmem:[%s0 + $0x320] sm:$0xff]
  %v115 = vld [vmem:[%s0 + $0x328] sm:$0xff]
  %v116 = vld [vmem:[%s0 + $0x330] sm:$0xff]
  %v117 = vld [vmem:[%s0 + $0x338] sm:$0xff]
  %v118 = vld [vmem:[%s0 + $0x340] sm:$0xff]
  %v119 = vld [vmem:[%s0 + $0x348] sm:$0xff]
  %v120 = vld [vmem:[%s0 + $0x350] sm:$0xff]
  %v121 = vld [vmem:[%s0 + $0x358] sm:$0xff]
  %v122 = vld [vmem:[%s0 + $0x360] sm:$0xff]
  %v123 = vld [vmem:[%s0 + $0x368] sm:$0xff]
  %v124 = vld [vmem:[%s0 + $0x370] sm:$0xff]
  %v125 = vld [vmem:[%s0 + $0x378] sm:$0xff]
  %v126 = vld [vmem:[%s0 + $0x380] sm:$0xff]
  %v127 = vld [vmem:[%s0 + $0x388] sm:$0xff]
  %v128 = vld [vmem:[%s0 + $0x390] sm:$0xff]
  %v129 = vld [vmem:[%s0 + $0x398] sm:$0xff]
  %v130 = vld [vmem:[%s0 + $0x3a0] sm:$0xff]
  %v131 = vld [vmem:[%s0 + $0x3a8] sm:$0xff]
  %v132 = vld [vmem:[%s0 + $0x3b0] sm:$0xff]
  %v133 = vld [vmem:[%s0 + $0x3b8] sm:$0xff]
  %v134 = vld [vmem:[%s0 + $0x3c0] sm:$0x3]
  %v135 = vld [vmem:[%s0 + $0x3c8] sm:$0x3]
  %v136 = vld [vmem:[%s0 + $0x3d0] sm:$0x3]
  %v137 = vld [vmem:[%s0 + $0x3d8] sm:$0x3]
  %v138 = vld [vmem:[%s0 + $0x3e0] sm:$0x3]
  %v139 = vld [vmem:[%s0 + $0x3e8] sm:$0x3]
  %v140 = vld [vmem:[%s1] sm:$0xff]
  %v141 = vld [vmem:[%s1 + $0x8] sm:$0xff]
  %v142 = vld [vmem:[%s1 + $0x10] sm:$0xff]
  %v143 = vld [vmem:[%s1 + $0x18] sm:$0xff]
  %v144 = vld [vmem:[%s1 + $0x20] sm:$0xff]
  %v145 = vld [vmem:[%s1 + $0x28] sm:$0xff]
  %v146 = vld [vmem:[%s1 + $0x30] sm:$0xff]
  %v147 = vld [vmem:[%s1 + $0x38] sm:$0xff]
  %v148 = vld [vmem:[%s1 + $0x40] sm:$0xff]
  %v149 = vld [vmem:[%s1 + $0x48] sm:$0xff]
  %v150 = vld [vmem:[%s1 + $0x50] sm:$0xff]
  %v151 = vld [vmem:[%s1 + $0x58] sm:$0xff]
  %v152 = vld [vmem:[%s1 + $0x60] sm:$0xff]
  %v153 = vld [vmem:[%s1 + $0x68] sm:$0xff]
  %v154 = vld [vmem:[%s1 + $0x70] sm:$0xff]
  %v155 = vld [vmem:[%s1 + $0x78] sm:$0xff]
  %v156 = vld [vmem:[%s1 + $0x80] sm:$0xff]
  %v157 = vld [vmem:[%s1 + $0x88] sm:$0xff]
  %v158 = vld [vmem:[%s1 + $0x90] sm:$0xff]
  %v159 = vld [vmem:[%s1 + $0x98] sm:$0xff]
  %v160 = vld [vmem:[%s1 + $0xa0] sm:$0xff]
  %v161 = vld [vmem:[%s1 + $0xa8] sm:$0xff]
  %v162 = vld [vmem:[%s1 + $0xb0] sm:$0xff]
  %v163 = vld [vmem:[%s1 + $0xb8] sm:$0xff]
  %v164 = vld [vmem:[%s1 + $0xc0] sm:$0xff]
  %v165 = vld [vmem:[%s1 + $0xc8] sm:$0xff]
  %v166 = vld [vmem:[%s1 + $0xd0] sm:$0xff]
  %v167 = vld [vmem:[%s1 + $0xd8] sm:$0xff]
  %v168 = vld [vmem:[%s1 + $0xe0] sm:$0xff]
  %v169 = vld [vmem:[%s1 + $0xe8] sm:$0xff]
  %v170 = vld [vmem:[%s1 + $0xf0] sm:$0xff]
  %v171 = vld [vmem:[%s1 + $0xf8] sm:$0xff]
  %v172 = vld [vmem:[%s1 + $0x100] sm:$0xff]
  %v173 = vld [vmem:[%s1 + $0x108] sm:$0xff]
  %v174 = vld [vmem:[%s1 + $0x110] sm:$0xff]
  %v175 = vld [vmem:[%s1 + $0x118] sm:$0xff]
  %v176 = vld [vmem:[%s1 + $0x120] sm:$0xff]
  %v177 = vld [vmem:[%s1 + $0x128] sm:$0xff]
  %v178 = vld [vmem:[%s1 + $0x130] sm:$0xff]
  %v179 = vld [vmem:[%s1 + $0x138] sm:$0xff]
  %v180 = vld [vmem:[%s1 + $0x140] sm:$0xff]
  %v181 = vld [vmem:[%s1 + $0x148] sm:$0xff]
  %v182 = vld [vmem:[%s1 + $0x150] sm:$0xff]
  %v183 = vld [vmem:[%s1 + $0x158] sm:$0xff]
  %v184 = vld [vmem:[%s1 + $0x160] sm:$0xff]
  %v185 = vld [vmem:[%s1 + $0x168] sm:$0xff]
  %v186 = vld [vmem:[%s1 + $0x170] sm:$0xff]
  %v187 = vld [vmem:[%s1 + $0x178] sm:$0xff]
  %v188 = vld [vmem:[%s1 + $0x180] sm:$0xff]
  %v189 = vld [vmem:[%s1 + $0x188] sm:$0xff]
  %v190 = vld [vmem:[%s1 + $0x190] sm:$0xff]
  %v191 = vld [vmem:[%s1 + $0x198] sm:$0xff]
  %v192 = vld [vmem:[%s1 + $0x1a0] sm:$0xff]
  %v193 = vld [vmem:[%s1 + $0x1a8] sm:$0xff]
  %v194 = vld [vmem:[%s1 + $0x1b0] sm:$0xff]
  %v195 = vld [vmem:[%s1 + $0x1b8] sm:$0xff]
  %v196 = vld [vmem:[%s1 + $0x1c0] sm:$0xff]
  %v197 = vld [vmem:[%s1 + $0x1c8] sm:$0xff]
  %v198 = vld [vmem:[%s1 + $0x1d0] sm:$0xff]
  %v199 = vld [vmem:[%s1 + $0x1d8] sm:$0xff]
  %v200 = vld [vmem:[%s1 + $0x1e0] sm:$0xff]
  %v201 = vld [vmem:[%s1 + $0x1e8] sm:$0xff]
  %v202 = vld [vmem:[%s1 + $0x1f0] sm:$0xff]
  %v203 = vld [vmem:[%s1 + $0x1f8] sm:$0xff]
  %v204 = vld [vmem:[%s1 + $0x200] sm:$0xff]
  %v205 = vld [vmem:[%s1 + $0x208] sm:$0xff]
  %v206 = vld [vmem:[%s1 + $0x210] sm:$0xff]
  %v207 = vld [vmem:[%s1 + $0x218] sm:$0xff]
  %v208 = vld [vmem:[%s1 + $0x220] sm:$0xff]
  %v209 = vld [vmem:[%s1 + $0x228] sm:$0xff]
  %v210 = vld [vmem:[%s1 + $0x230] sm:$0xff]
  %v211 = vld [vmem:[%s1 + $0x238] sm:$0xff]
  %v212 = vld [vmem:[%s1 + $0x240] sm:$0xff]
  %v213 = vld [vmem:[%s1 + $0x248] sm:$0xff]
  %v214 = vld [vmem:[%s1 + $0x250] sm:$0xff]
  %v215 = vld [vmem:[%s1 + $0x258] sm:$0xff]
  %v216 = vld [vmem:[%s1 + $0x260] sm:$0xff]
  %v217 = vld [vmem:[%s1 + $0x268] sm:$0xff]
  %v218 = vld [vmem:[%s1 + $0x270] sm:$0xff]
  %v219 = vld [vmem:[%s1 + $0x278] sm:$0xff]
  %v220 = vld [vmem:[%s1 + $0x280] sm:$0xff]
  %v221 = vld [vmem:[%s1 + $0x288] sm:$0xff]
  %v222 = vld [vmem:[%s1 + $0x290] sm:$0xff]
  %v223 = vld [vmem:[%s1 + $0x298] sm:$0xff]
  %v224 = vld [vmem:[%s1 + $0x2a0] sm:$0xff]
  %v225 = vld [vmem:[%s1 + $0x2a8] sm:$0xff]
  %v226 = vld [vmem:[%s1 + $0x2b0] sm:$0xff]
  %v227 = vld [vmem:[%s1 + $0x2b8] sm:$0xff]
  %v228 = vld [vmem:[%s1 + $0x2c0] sm:$0xff]
  %v229 = vld [vmem:[%s1 + $0x2c8] sm:$0xff]
  %v230 = vld [vmem:[%s1 + $0x2d0] sm:$0x3f]
  %v231 = vld [vmem:[%s2] sm:$0x1]
  %v233 = vperm.slane %v231, 0
  %vm235 = vcmask 703488
  %v237 = vsel %vm235, %v19, 0
  %v240 = vsel %vm235, %v25, 0
  %v243 = vsel %vm235, %v31, 0
  %v246 = vsel %vm235, %v37, 0
  %v249 = vsel %vm235, %v43, 0
  %v252 = vsel %vm235, %v49, 0
  %v255 = vsel %vm235, %v55, 0
  %v258 = vsel %vm235, %v61, 0
  %v261 = vsel %vm235, %v67, 0
  %v264 = vsel %vm235, %v73, 0
  %v267 = vsel %vm235, %v79, 0
  %v270 = vsel %vm235, %v85, 0
  %v273 = vsel %vm235, %v91, 0
  %v276 = vsel %vm235, %v97, 0
  %v279 = vsel %vm235, %v103, 0
  %v282 = vsel %vm235, %v109, 0
  %v285 = vsel %vm235, %v115, 0
  %v288 = vsel %vm235, %v121, 0
  %v291 = vsel %vm235, %v127, 0
  %v294 = vsel %vm235, %v133, 0
  %v297 = vsel %vm235, %v139, 0
  %vm299 = vcmask 1045504
  %v301 = vsel %vm299, %v230, 0
  %303 = vmatpush.msra.mxu0 %v155
  %304 = vmatpush.msra.mxu0 %v154
  %305 = vmatpush.msra.mxu0 %v153
  %306 = vmatpush.msra.mxu0 %v152
  %307 = vmatpush.msra.mxu0 %v151
  %308 = vmatpush.msra.mxu0 %v150
  %309 = vmatpush.msra.mxu0 %v149
  %310 = vmatpush.msra.mxu0 %v148
  %311 = vmatpush.msra.mxu0 %v147
  %312 = vmatpush.msra.mxu0 %v146
  %313 = vmatpush.msra.mxu0 %v145
  %314 = vmatpush.msra.mxu0 %v144
  %315 = vmatpush.msra.mxu0 %v143
  %316 = vmatpush.msra.mxu0 %v142
  %317 = vmatpush.msra.mxu0 %v141
  %318 = vmatpush.msra.mxu0 %v140
  %319 = vmatmul.f32.gmra.mxu0 %v14
  %v320 = vpop.f32.mrf.mxu0
  %v321 = vadd.f32 %v233, %v320
  %322 = vmatmul.f32.gmra.mxu0 %v20
  %v323 = vpop.f32.mrf.mxu0
  %v324 = vadd.f32 %v233, %v323
  %325 = vmatmul.f32.gmra.mxu0 %v26
  %v326 = vpop.f32.mrf.mxu0
  %v327 = vadd.f32 %v233, %v326
  %328 = vmatmul.f32.gmra.mxu0 %v32
  %v329 = vpop.f32.mrf.mxu0
  %v330 = vadd.f32 %v233, %v329
  %331 = vmatmul.f32.gmra.mxu0 %v38
  %v332 = vpop.f32.mrf.mxu0
  %v333 = vadd.f32 %v233, %v332
  %334 = vmatmul.f32.gmra.mxu0 %v44
  %v335 = vpop.f32.mrf.mxu0
  %v336 = vadd.f32 %v233, %v335
  %337 = vmatmul.f32.gmra.mxu0 %v50
  %v338 = vpop.f32.mrf.mxu0
  %v339 = vadd.f32 %v233, %v338
  %340 = vmatmul.f32.gmra.mxu0 %v56
  %v341 = vpop.f32.mrf.mxu0
  %v342 = vadd.f32 %v233, %v341
  %343 = vmatmul.f32.gmra.mxu0 %v62
  %v344 = vpop.f32.mrf.mxu0
  %v345 = vadd.f32 %v233, %v344
  %346 = vmatmul.f32.gmra.mxu0 %v68
  %v347 = vpop.f32.mrf.mxu0
  %v348 = vadd.f32 %v233, %v347
  %349 = vmatmul.f32.gmra.mxu0 %v74
  %v350 = vpop.f32.mrf.mxu0
  %v351 = vadd.f32 %v233, %v350
  %352 = vmatmul.f32.gmra.mxu0 %v80
  %v353 = vpop.f32.mrf.mxu0
  %v354 = vadd.f32 %v233, %v353
  %355 = vmatmul.f32.gmra.mxu0 %v86
  %v356 = vpop.f32.mrf.mxu0
  %v357 = vadd.f32 %v233, %v356
  %358 = vmatmul.f32.gmra.mxu0 %v92
  %v359 = vpop.f32.mrf.mxu0
  %v360 = vadd.f32 %v233, %v359
  %361 = vmatmul.f32.gmra.mxu0 %v98
  %v362 = vpop.f32.mrf.mxu0
  %v363 = vadd.f32 %v233, %v362
  %364 = vmatmul.f32.gmra.mxu0 %v104
  %v365 = vpop.f32.mrf.mxu0
  %v366 = vadd.f32 %v233, %v365
  %367 = vmatmul.f32.gmra.mxu0 %v110
  %v368 = vpop.f32.mrf.mxu0
  %v369 = vadd.f32 %v233, %v368
  %370 = vmatmul.f32.gmra.mxu0 %v116
  %v371 = vpop.f32.mrf.mxu0
  %v372 = vadd.f32 %v233, %v371
  %373 = vmatmul.f32.gmra.mxu0 %v122
  %v374 = vpop.f32.mrf.mxu0
  %v375 = vadd.f32 %v233, %v374
  %376 = vmatmul.f32.gmra.mxu0 %v128
  %v377 = vpop.f32.mrf.mxu0
  %v378 = vadd.f32 %v233, %v377
  %379 = vmatmul.f32.gmra.mxu0 %v134
  %v380 = vpop.f32.mrf.mxu0
  %v381 = vadd.f32 %v233, %v380
  %382 = vdwg.mxu0
  %383 = vmatpush.msra.mxu0 %v171
  %384 = vmatpush.msra.mxu0 %v170
  %385 = vmatpush.msra.mxu0 %v169
  %386 = vmatpush.msra.mxu0 %v168
  %387 = vmatpush.msra.mxu0 %v167
  %388 = vmatpush.msra.mxu0 %v166
  %389 = vmatpush.msra.mxu0 %v165
  %390 = vmatpush.msra.mxu0 %v164
  %391 = vmatpush.msra.mxu0 %v163
  %392 = vmatpush.msra.mxu0 %v162
  %393 = vmatpush.msra.mxu0 %v161
  %394 = vmatpush.msra.mxu0 %v160
  %395 = vmatpush.msra.mxu0 %v159
  %396 = vmatpush.msra.mxu0 %v158
  %397 = vmatpush.msra.mxu0 %v157
  %398 = vmatpush.msra.mxu0 %v156
  %399 = vmatmul.f32.gmra.mxu0 %v15
  %v400 = vpop.f32.mrf.mxu0
  %v401 = vadd.f32 %v321, %v400
  %402 = vmatmul.f32.gmra.mxu0 %v21
  %v403 = vpop.f32.mrf.mxu0
  %v404 = vadd.f32 %v324, %v403
  %405 = vmatmul.f32.gmra.mxu0 %v27
  %v406 = vpop.f32.mrf.mxu0
  %v407 = vadd.f32 %v327, %v406
  %408 = vmatmul.f32.gmra.mxu0 %v33
  %v409 = vpop.f32.mrf.mxu0
  %v410 = vadd.f32 %v330, %v409
  %411 = vmatmul.f32.gmra.mxu0 %v39
  %v412 = vpop.f32.mrf.mxu0
  %v413 = vadd.f32 %v333, %v412
  %414 = vmatmul.f32.gmra.mxu0 %v45
  %v415 = vpop.f32.mrf.mxu0
  %v416 = vadd.f32 %v336, %v415
  %417 = vmatmul.f32.gmra.mxu0 %v51
  %v418 = vpop.f32.mrf.mxu0
  %v419 = vadd.f32 %v339, %v418
  %420 = vmatmul.f32.gmra.mxu0 %v57
  %v421 = vpop.f32.mrf.mxu0
  %v422 = vadd.f32 %v342, %v421
  %423 = vmatmul.f32.gmra.mxu0 %v63
  %v424 = vpop.f32.mrf.mxu0
  %v425 = vadd.f32 %v345, %v424
  %426 = vmatmul.f32.gmra.mxu0 %v69
  %v427 = vpop.f32.mrf.mxu0
  %v428 = vadd.f32 %v348, %v427
  %429 = vmatmul.f32.gmra.mxu0 %v75
  %v430 = vpop.f32.mrf.mxu0
  %v431 = vadd.f32 %v351, %v430
  %432 = vmatmul.f32.gmra.mxu0 %v81
  %v433 = vpop.f32.mrf.mxu0
  %v434 = vadd.f32 %v354, %v433
  %435 = vmatmul.f32.gmra.mxu0 %v87
  %v436 = vpop.f32.mrf.mxu0
  %v437 = vadd.f32 %v357, %v436
  %438 = vmatmul.f32.gmra.mxu0 %v93
  %v439 = vpop.f32.mrf.mxu0
  %v440 = vadd.f32 %v360, %v439
  %441 = vmatmul.f32.gmra.mxu0 %v99
  %v442 = vpop.f32.mrf.mxu0
  %v443 = vadd.f32 %v363, %v442
  %444 = vmatmul.f32.gmra.mxu0 %v105
  %v445 = vpop.f32.mrf.mxu0
  %v446 = vadd.f32 %v366, %v445
  %447 = vmatmul.f32.gmra.mxu0 %v111
  %v448 = vpop.f32.mrf.mxu0
  %v449 = vadd.f32 %v369, %v448
  %450 = vmatmul.f32.gmra.mxu0 %v117
  %v451 = vpop.f32.mrf.mxu0
  %v452 = vadd.f32 %v372, %v451
  %453 = vmatmul.f32.gmra.mxu0 %v123
  %v454 = vpop.f32.mrf.mxu0
  %v455 = vadd.f32 %v375, %v454
  %456 = vmatmul.f32.gmra.mxu0 %v129
  %v457 = vpop.f32.mrf.mxu0
  %v458 = vadd.f32 %v378, %v457
  %459 = vmatmul.f32.gmra.mxu0 %v135
  %v460 = vpop.f32.mrf.mxu0
  %v461 = vadd.f32 %v381, %v460
  %462 = vdwg.mxu0
  %463 = vmatpush.msra.mxu0 %v187
  %464 = vmatpush.msra.mxu0 %v186
  %465 = vmatpush.msra.mxu0 %v185
  %466 = vmatpush.msra.mxu0 %v184
  %467 = vmatpush.msra.mxu0 %v183
  %468 = vmatpush.msra.mxu0 %v182
  %469 = vmatpush.msra.mxu0 %v181
  %470 = vmatpush.msra.mxu0 %v180
  %471 = vmatpush.msra.mxu0 %v179
  %472 = vmatpush.msra.mxu0 %v178
  %473 = vmatpush.msra.mxu0 %v177
  %474 = vmatpush.msra.mxu0 %v176
  %475 = vmatpush.msra.mxu0 %v175
  %476 = vmatpush.msra.mxu0 %v174
  %477 = vmatpush.msra.mxu0 %v173
  %478 = vmatpush.msra.mxu0 %v172
  %479 = vmatmul.f32.gmra.mxu0 %v16
  %v480 = vpop.f32.mrf.mxu0
  %v481 = vadd.f32 %v401, %v480
  %482 = vmatmul.f32.gmra.mxu0 %v22
  %v483 = vpop.f32.mrf.mxu0
  %v484 = vadd.f32 %v404, %v483
  %485 = vmatmul.f32.gmra.mxu0 %v28
  %v486 = vpop.f32.mrf.mxu0
  %v487 = vadd.f32 %v407, %v486
  %488 = vmatmul.f32.gmra.mxu0 %v34
  %v489 = vpop.f32.mrf.mxu0
  %v490 = vadd.f32 %v410, %v489
  %491 = vmatmul.f32.gmra.mxu0 %v40
  %v492 = vpop.f32.mrf.mxu0
  %v493 = vadd.f32 %v413, %v492
  %494 = vmatmul.f32.gmra.mxu0 %v46
  %v495 = vpop.f32.mrf.mxu0
  %v496 = vadd.f32 %v416, %v495
  %497 = vmatmul.f32.gmra.mxu0 %v52
  %v498 = vpop.f32.mrf.mxu0
  %v499 = vadd.f32 %v419, %v498
  %500 = vmatmul.f32.gmra.mxu0 %v58
  %v501 = vpop.f32.mrf.mxu0
  %v502 = vadd.f32 %v422, %v501
  %503 = vmatmul.f32.gmra.mxu0 %v64
  %v504 = vpop.f32.mrf.mxu0
  %v505 = vadd.f32 %v425, %v504
  %506 = vmatmul.f32.gmra.mxu0 %v70
  %v507 = vpop.f32.mrf.mxu0
  %v508 = vadd.f32 %v428, %v507
  %509 = vmatmul.f32.gmra.mxu0 %v76
  %v510 = vpop.f32.mrf.mxu0
  %v511 = vadd.f32 %v431, %v510
  %512 = vmatmul.f32.gmra.mxu0 %v82
  %v513 = vpop.f32.mrf.mxu0
  %v514 = vadd.f32 %v434, %v513
  %515 = vmatmul.f32.gmra.mxu0 %v88
  %v516 = vpop.f32.mrf.mxu0
  %v517 = vadd.f32 %v437, %v516
  %518 = vmatmul.f32.gmra.mxu0 %v94
  %v519 = vpop.f32.mrf.mxu0
  %v520 = vadd.f32 %v440, %v519
  %521 = vmatmul.f32.gmra.mxu0 %v100
  %v522 = vpop.f32.mrf.mxu0
  %v523 = vadd.f32 %v443, %v522
  %524 = vmatmul.f32.gmra.mxu0 %v106
  %v525 = vpop.f32.mrf.mxu0
  %v526 = vadd.f32 %v446, %v525
  %527 = vmatmul.f32.gmra.mxu0 %v112
  %v528 = vpop.f32.mrf.mxu0
  %v529 = vadd.f32 %v449, %v528
  %530 = vmatmul.f32.gmra.mxu0 %v118
  %v531 = vpop.f32.mrf.mxu0
  %v532 = vadd.f32 %v452, %v531
  %533 = vmatmul.f32.gmra.mxu0 %v124
  %v534 = vpop.f32.mrf.mxu0
  %v535 = vadd.f32 %v455, %v534
  %536 = vmatmul.f32.gmra.mxu0 %v130
  %v537 = vpop.f32.mrf.mxu0
  %v538 = vadd.f32 %v458, %v537
  %539 = vmatmul.f32.gmra.mxu0 %v136
  %v540 = vpop.f32.mrf.mxu0
  %v541 = vadd.f32 %v461, %v540
  %542 = vdwg.mxu0
  %543 = vmatpush.msra.mxu0 %v203
  %544 = vmatpush.msra.mxu0 %v202
  %545 = vmatpush.msra.mxu0 %v201
  %546 = vmatpush.msra.mxu0 %v200
  %547 = vmatpush.msra.mxu0 %v199
  %548 = vmatpush.msra.mxu0 %v198
  %549 = vmatpush.msra.mxu0 %v197
  %550 = vmatpush.msra.mxu0 %v196
  %551 = vmatpush.msra.mxu0 %v195
  %552 = vmatpush.msra.mxu0 %v194
  %553 = vmatpush.msra.mxu0 %v193
  %554 = vmatpush.msra.mxu0 %v192
  %555 = vmatpush.msra.mxu0 %v191
  %556 = vmatpush.msra.mxu0 %v190
  %557 = vmatpush.msra.mxu0 %v189
  %558 = vmatpush.msra.mxu0 %v188
  %559 = vmatmul.f32.gmra.mxu0 %v17
  %v560 = vpop.f32.mrf.mxu0
  %v561 = vadd.f32 %v481, %v560
  %562 = vmatmul.f32.gmra.mxu0 %v23
  %v563 = vpop.f32.mrf.mxu0
  %v564 = vadd.f32 %v484, %v563
  %565 = vmatmul.f32.gmra.mxu0 %v29
  %v566 = vpop.f32.mrf.mxu0
  %v567 = vadd.f32 %v487, %v566
  %568 = vmatmul.f32.gmra.mxu0 %v35
  %v569 = vpop.f32.mrf.mxu0
  %v570 = vadd.f32 %v490, %v569
  %571 = vmatmul.f32.gmra.mxu0 %v41
  %v572 = vpop.f32.mrf.mxu0
  %v573 = vadd.f32 %v493, %v572
  %574 = vmatmul.f32.gmra.mxu0 %v47
  %v575 = vpop.f32.mrf.mxu0
  %v576 = vadd.f32 %v496, %v575
  %577 = vmatmul.f32.gmra.mxu0 %v53
  %v578 = vpop.f32.mrf.mxu0
  %v579 = vadd.f32 %v499, %v578
  %580 = vmatmul.f32.gmra.mxu0 %v59
  %v581 = vpop.f32.mrf.mxu0
  %v582 = vadd.f32 %v502, %v581
  %583 = vmatmul.f32.gmra.mxu0 %v65
  %v584 = vpop.f32.mrf.mxu0
  %v585 = vadd.f32 %v505, %v584
  %586 = vmatmul.f32.gmra.mxu0 %v71
  %v587 = vpop.f32.mrf.mxu0
  %v588 = vadd.f32 %v508, %v587
  %589 = vmatmul.f32.gmra.mxu0 %v77
  %v590 = vpop.f32.mrf.mxu0
  %v591 = vadd.f32 %v511, %v590
  %592 = vmatmul.f32.gmra.mxu0 %v83
  %v593 = vpop.f32.mrf.mxu0
  %v594 = vadd.f32 %v514, %v593
  %595 = vmatmul.f32.gmra.mxu0 %v89
  %v596 = vpop.f32.mrf.mxu0
  %v597 = vadd.f32 %v517, %v596
  %598 = vmatmul.f32.gmra.mxu0 %v95
  %v599 = vpop.f32.mrf.mxu0
  %v600 = vadd.f32 %v520, %v599
  %601 = vmatmul.f32.gmra.mxu0 %v101
  %v602 = vpop.f32.mrf.mxu0
  %v603 = vadd.f32 %v523, %v602
  %604 = vmatmul.f32.gmra.mxu0 %v107
  %v605 = vpop.f32.mrf.mxu0
  %v606 = vadd.f32 %v526, %v605
  %607 = vmatmul.f32.gmra.mxu0 %v113
  %v608 = vpop.f32.mrf.mxu0
  %v609 = vadd.f32 %v529, %v608
  %610 = vmatmul.f32.gmra.mxu0 %v119
  %v611 = vpop.f32.mrf.mxu0
  %v612 = vadd.f32 %v532, %v611
  %613 = vmatmul.f32.gmra.mxu0 %v125
  %v614 = vpop.f32.mrf.mxu0
  %v615 = vadd.f32 %v535, %v614
  %616 = vmatmul.f32.gmra.mxu0 %v131
  %v617 = vpop.f32.mrf.mxu0
  %v618 = vadd.f32 %v538, %v617
  %619 = vmatmul.f32.gmra.mxu0 %v137
  %v620 = vpop.f32.mrf.mxu0
  %v621 = vadd.f32 %v541, %v620
  %622 = vdwg.mxu0
  %623 = vmatpush.msra.mxu0 %v219
  %624 = vmatpush.msra.mxu0 %v218
  %625 = vmatpush.msra.mxu0 %v217
  %626 = vmatpush.msra.mxu0 %v216
  %627 = vmatpush.msra.mxu0 %v215
  %628 = vmatpush.msra.mxu0 %v214
  %629 = vmatpush.msra.mxu0 %v213
  %630 = vmatpush.msra.mxu0 %v212
  %631 = vmatpush.msra.mxu0 %v211
  %632 = vmatpush.msra.mxu0 %v210
  %633 = vmatpush.msra.mxu0 %v209
  %634 = vmatpush.msra.mxu0 %v208
  %635 = vmatpush.msra.mxu0 %v207
  %636 = vmatpush.msra.mxu0 %v206
  %637 = vmatpush.msra.mxu0 %v205
  %638 = vmatpush.msra.mxu0 %v204
  %639 = vmatmul.f32.gmra.mxu0 %v18
  %v640 = vpop.f32.mrf.mxu0
  %v641 = vadd.f32 %v561, %v640
  %642 = vmatmul.f32.gmra.mxu0 %v24
  %v643 = vpop.f32.mrf.mxu0
  %v644 = vadd.f32 %v564, %v643
  %645 = vmatmul.f32.gmra.mxu0 %v30
  %v646 = vpop.f32.mrf.mxu0
  %v647 = vadd.f32 %v567, %v646
  %648 = vmatmul.f32.gmra.mxu0 %v36
  %v649 = vpop.f32.mrf.mxu0
  %v650 = vadd.f32 %v570, %v649
  %651 = vmatmul.f32.gmra.mxu0 %v42
  %v652 = vpop.f32.mrf.mxu0
  %v653 = vadd.f32 %v573, %v652
  %654 = vmatmul.f32.gmra.mxu0 %v48
  %v655 = vpop.f32.mrf.mxu0
  %v656 = vadd.f32 %v576, %v655
  %657 = vmatmul.f32.gmra.mxu0 %v54
  %v658 = vpop.f32.mrf.mxu0
  %v659 = vadd.f32 %v579, %v658
  %660 = vmatmul.f32.gmra.mxu0 %v60
  %v661 = vpop.f32.mrf.mxu0
  %v662 = vadd.f32 %v582, %v661
  %663 = vmatmul.f32.gmra.mxu0 %v66
  %v664 = vpop.f32.mrf.mxu0
  %v665 = vadd.f32 %v585, %v664
  %666 = vmatmul.f32.gmra.mxu0 %v72
  %v667 = vpop.f32.mrf.mxu0
  %v668 = vadd.f32 %v588, %v667
  %669 = vmatmul.f32.gmra.mxu0 %v78
  %v670 = vpop.f32.mrf.mxu0
  %v671 = vadd.f32 %v591, %v670
  %672 = vmatmul.f32.gmra.mxu0 %v84
  %v673 = vpop.f32.mrf.mxu0
  %v674 = vadd.f32 %v594, %v673
  %675 = vmatmul.f32.gmra.mxu0 %v90
  %v676 = vpop.f32.mrf.mxu0
  %v677 = vadd.f32 %v597, %v676
  %678 = vmatmul.f32.gmra.mxu0 %v96
  %v679 = vpop.f32.mrf.mxu0
  %v680 = vadd.f32 %v600, %v679
  %681 = vmatmul.f32.gmra.mxu0 %v102
  %v682 = vpop.f32.mrf.mxu0
  %v683 = vadd.f32 %v603, %v682
  %684 = vmatmul.f32.gmra.mxu0 %v108
  %v685 = vpop.f32.mrf.mxu0
  %v686 = vadd.f32 %v606, %v685
  %687 = vmatmul.f32.gmra.mxu0 %v114
  %v688 = vpop.f32.mrf.mxu0
  %v689 = vadd.f32 %v609, %v688
  %690 = vmatmul.f32.gmra.mxu0 %v120
  %v691 = vpop.f32.mrf.mxu0
  %v692 = vadd.f32 %v612, %v691
  %693 = vmatmul.f32.gmra.mxu0 %v126
  %v694 = vpop.f32.mrf.mxu0
  %v695 = vadd.f32 %v615, %v694
  %696 = vmatmul.f32.gmra.mxu0 %v132
  %v697 = vpop.f32.mrf.mxu0
  %v698 = vadd.f32 %v618, %v697
  %699 = vmatmul.f32.gmra.mxu0 %v138
  %v700 = vpop.f32.mrf.mxu0
  %v701 = vadd.f32 %v621, %v700
  %702 = vdwg.mxu0
  %703 = vmatpush.msra.mxu0 0.0
  %704 = vmatpush.msra.mxu0 0.0
  %705 = vmatpush.msra.mxu0 0.0
  %706 = vmatpush.msra.mxu0 0.0
  %707 = vmatpush.msra.mxu0 0.0
  %708 = vmatpush.msra.mxu0 %v301
  %709 = vmatpush.msra.mxu0 %v229
  %710 = vmatpush.msra.mxu0 %v228
  %711 = vmatpush.msra.mxu0 %v227
  %712 = vmatpush.msra.mxu0 %v226
  %713 = vmatpush.msra.mxu0 %v225
  %714 = vmatpush.msra.mxu0 %v224
  %715 = vmatpush.msra.mxu0 %v223
  %716 = vmatpush.msra.mxu0 %v222
  %717 = vmatpush.msra.mxu0 %v221
  %718 = vmatpush.msra.mxu0 %v220
  %719 = vmatmul.f32.gmra.mxu0 %v237
  %v720 = vpop.f32.mrf.mxu0
  %v721 = vadd.f32 %v641, %v720
  %722 = vmatmul.f32.gmra.mxu0 %v240
  %v723 = vpop.f32.mrf.mxu0
  %v724 = vadd.f32 %v644, %v723
  %725 = vmatmul.f32.gmra.mxu0 %v243
  %v726 = vpop.f32.mrf.mxu0
  %v727 = vadd.f32 %v647, %v726
  %728 = vmatmul.f32.gmra.mxu0 %v246
  %v729 = vpop.f32.mrf.mxu0
  %v730 = vadd.f32 %v650, %v729
  %731 = vmatmul.f32.gmra.mxu0 %v249
  %v732 = vpop.f32.mrf.mxu0
  %v733 = vadd.f32 %v653, %v732
  %734 = vmatmul.f32.gmra.mxu0 %v252
  %v735 = vpop.f32.mrf.mxu0
  %v736 = vadd.f32 %v656, %v735
  %737 = vmatmul.f32.gmra.mxu0 %v255
  %v738 = vpop.f32.mrf.mxu0
  %v739 = vadd.f32 %v659, %v738
  %740 = vmatmul.f32.gmra.mxu0 %v258
  %v741 = vpop.f32.mrf.mxu0
  %v742 = vadd.f32 %v662, %v741
  %743 = vmatmul.f32.gmra.mxu0 %v261
  %v744 = vpop.f32.mrf.mxu0
  %v745 = vadd.f32 %v665, %v744
  %746 = vmatmul.f32.gmra.mxu0 %v264
  %v747 = vpop.f32.mrf.mxu0
  %v748 = vadd.f32 %v668, %v747
  %749 = vmatmul.f32.gmra.mxu0 %v267
  %v750 = vpop.f32.mrf.mxu0
  %v751 = vadd.f32 %v671, %v750
  %752 = vmatmul.f32.gmra.mxu0 %v270
  %v753 = vpop.f32.mrf.mxu0
  %v754 = vadd.f32 %v674, %v753
  %755 = vmatmul.f32.gmra.mxu0 %v273
  %v756 = vpop.f32.mrf.mxu0
  %v757 = vadd.f32 %v677, %v756
  %758 = vmatmul.f32.gmra.mxu0 %v276
  %v759 = vpop.f32.mrf.mxu0
  %v760 = vadd.f32 %v680, %v759
  %761 = vmatmul.f32.gmra.mxu0 %v279
  %v762 = vpop.f32.mrf.mxu0
  %v763 = vadd.f32 %v683, %v762
  %764 = vmatmul.f32.gmra.mxu0 %v282
  %v765 = vpop.f32.mrf.mxu0
  %v766 = vadd.f32 %v686, %v765
  %767 = vmatmul.f32.gmra.mxu0 %v285
  %v768 = vpop.f32.mrf.mxu0
  %v769 = vadd.f32 %v689, %v768
  %770 = vmatmul.f32.gmra.mxu0 %v288
  %v771 = vpop.f32.mrf.mxu0
  %v772 = vadd.f32 %v692, %v771
  %773 = vmatmul.f32.gmra.mxu0 %v291
  %v774 = vpop.f32.mrf.mxu0
  %v775 = vadd.f32 %v695, %v774
  %776 = vmatmul.f32.gmra.mxu0 %v294
  %v777 = vpop.f32.mrf.mxu0
  %v778 = vadd.f32 %v698, %v777
  %779 = vmatmul.f32.gmra.mxu0 %v297
  %v780 = vpop.f32.mrf.mxu0
  %v781 = vadd.f32 %v701, %v780
  %782 = vdwg.mxu0
  %v783 = vmul.f32 %v721, 0.999995
  %v784 = vmul.f32 %v724, 0.999995
  %v785 = vmul.f32 %v727, 0.999995
  %v786 = vmul.f32 %v730, 0.999995
  %v787 = vmul.f32 %v733, 0.999995
  %v788 = vmul.f32 %v736, 0.999995
  %v789 = vmul.f32 %v739, 0.999995
  %v790 = vmul.f32 %v742, 0.999995
  %v791 = vmul.f32 %v745, 0.999995
  %v792 = vmul.f32 %v748, 0.999995
  %v793 = vmul.f32 %v751, 0.999995
  %v794 = vmul.f32 %v754, 0.999995
  %v795 = vmul.f32 %v757, 0.999995
  %v796 = vmul.f32 %v760, 0.999995
  %v797 = vmul.f32 %v763, 0.999995
  %v798 = vmul.f32 %v766, 0.999995
  %v799 = vmul.f32 %v769, 0.999995
  %v800 = vmul.f32 %v772, 0.999995
  %v801 = vmul.f32 %v775, 0.999995
  %v802 = vmul.f32 %v778, 0.999995
  %v803 = vmul.f32 %v781, 0.999995
  %v804 = vsub.f32 0.0, %v783
  %v805 = vsub.f32 0.0, %v784
  %v806 = vsub.f32 0.0, %v785
  %v807 = vsub.f32 0.0, %v786
  %v808 = vsub.f32 0.0, %v787
  %v809 = vsub.f32 0.0, %v788
  %v810 = vsub.f32 0.0, %v789
  %v811 = vsub.f32 0.0, %v790
  %v812 = vsub.f32 0.0, %v791
  %v813 = vsub.f32 0.0, %v792
  %v814 = vsub.f32 0.0, %v793
  %v815 = vsub.f32 0.0, %v794
  %v816 = vsub.f32 0.0, %v795
  %v817 = vsub.f32 0.0, %v796
  %v818 = vsub.f32 0.0, %v797
  %v819 = vsub.f32 0.0, %v798
  %v820 = vsub.f32 0.0, %v799
  %v821 = vsub.f32 0.0, %v800
  %v822 = vsub.f32 0.0, %v801
  %v823 = vsub.f32 0.0, %v802
  %v824 = vsub.f32 0.0, %v803
  %v825 = vmul.f32 %v804, 1.442695
  %v826 = vpow.pop %v825
  %v827 = vmul.f32 %v805, 1.442695
  %v828 = vpow.pop %v827
  %v829 = vmul.f32 %v806, 1.442695
  %v830 = vpow.pop %v829
  %v831 = vmul.f32 %v807, 1.442695
  %v832 = vpow.pop %v831
  %v833 = vmul.f32 %v808, 1.442695
  %v834 = vpow.pop %v833
  %v835 = vmul.f32 %v809, 1.442695
  %v836 = vpow.pop %v835
  %v837 = vmul.f32 %v810, 1.442695
  %v838 = vpow.pop %v837
  %v839 = vmul.f32 %v811, 1.442695
  %v840 = vpow.pop %v839
  %v841 = vmul.f32 %v812, 1.442695
  %v842 = vpow.pop %v841
  %v843 = vmul.f32 %v813, 1.442695
  %v844 = vpow.pop %v843
  %v845 = vmul.f32 %v814, 1.442695
  %v846 = vpow.pop %v845
  %v847 = vmul.f32 %v815, 1.442695
  %v848 = vpow.pop %v847
  %v849 = vmul.f32 %v816, 1.442695
  %v850 = vpow.pop %v849
  %v851 = vmul.f32 %v817, 1.442695
  %v852 = vpow.pop %v851
  %v853 = vmul.f32 %v818, 1.442695
  %v854 = vpow.pop %v853
  %v855 = vmul.f32 %v819, 1.442695
  %v856 = vpow.pop %v855
  %v857 = vmul.f32 %v820, 1.442695
  %v858 = vpow.pop %v857
  %v859 = vmul.f32 %v821, 1.442695
  %v860 = vpow.pop %v859
  %v861 = vmul.f32 %v822, 1.442695
  %v862 = vpow.pop %v861
  %v863 = vmul.f32 %v823, 1.442695
  %v864 = vpow.pop %v863
  %v865 = vmul.f32 %v824, 1.442695
  %v866 = vpow.pop %v865
  %v867 = vadd.f32 %v826, 1.0
  %v868 = vadd.f32 %v828, 1.0
  %v869 = vadd.f32 %v830, 1.0
  %v870 = vadd.f32 %v832, 1.0
  %v871 = vadd.f32 %v834, 1.0
  %v872 = vadd.f32 %v836, 1.0
  %v873 = vadd.f32 %v838, 1.0
  %v874 = vadd.f32 %v840, 1.0
  %v875 = vadd.f32 %v842, 1.0
  %v876 = vadd.f32 %v844, 1.0
  %v877 = vadd.f32 %v846, 1.0
  %v878 = vadd.f32 %v848, 1.0
  %v879 = vadd.f32 %v850, 1.0
  %v880 = vadd.f32 %v852, 1.0
  %v881 = vadd.f32 %v854, 1.0
  %v882 = vadd.f32 %v856, 1.0
  %v883 = vadd.f32 %v858, 1.0
  %v884 = vadd.f32 %v860, 1.0
  %v885 = vadd.f32 %v862, 1.0
  %v886 = vadd.f32 %v864, 1.0
  %v887 = vadd.f32 %v866, 1.0
  %v888 = vrcp.pop %v867
  %v889 = vmul.f32 %v867, %v888
  %v890 = vsub.f32 1.0, %v889
  %v891 = vmul.f32 %v888, %v890
  %v892 = vadd.f32 %v888, %v891
  %vm893 = vweird.f32 %v867
  %vm894 = vweird.f32 %v888
  %vm895 = vmor %vm893, %vm894
  %v896 = vsel %vm895, %v888, %v892
  %v897 = vand.u32 2147483647, %v867
  %vm898 = vcmp.eq.f32.partialorder %v897, 8.507059e+37
  %v899 = vand.u32 %v867, 2147483648
  %v900 = vor.u32 1.1754944e-38, %v899
  %v901 = vsel %vm898, %v900, %v896
  %v902 = vmul.f32 1.0, %v901
  %v903 = vrcp.pop %v868
  %v904 = vmul.f32 %v868, %v903
  %v905 = vsub.f32 1.0, %v904
  %v906 = vmul.f32 %v903, %v905
  %v907 = vadd.f32 %v903, %v906
  %vm908 = vweird.f32 %v868
  %vm909 = vweird.f32 %v903
  %vm910 = vmor %vm908, %vm909
  %v911 = vsel %vm910, %v903, %v907
  %v912 = vand.u32 2147483647, %v868
  %vm913 = vcmp.eq.f32.partialorder %v912, 8.507059e+37
  %v914 = vand.u32 %v868, 2147483648
  %v915 = vor.u32 1.1754944e-38, %v914
  %v916 = vsel %vm913, %v915, %v911
  %v917 = vmul.f32 1.0, %v916
  %v918 = vrcp.pop %v869
  %v919 = vmul.f32 %v869, %v918
  %v920 = vsub.f32 1.0, %v919
  %v921 = vmul.f32 %v918, %v920
  %v922 = vadd.f32 %v918, %v921
  %vm923 = vweird.f32 %v869
  %vm924 = vweird.f32 %v918
  %vm925 = vmor %vm923, %vm924
  %v926 = vsel %vm925, %v918, %v922
  %v927 = vand.u32 2147483647, %v869
  %vm928 = vcmp.eq.f32.partialorder %v927, 8.507059e+37
  %v929 = vand.u32 %v869, 2147483648
  %v930 = vor.u32 1.1754944e-38, %v929
  %v931 = vsel %vm928, %v930, %v926
  %v932 = vmul.f32 1.0, %v931
  %v933 = vrcp.pop %v870
  %v934 = vmul.f32 %v870, %v933
  %v935 = vsub.f32 1.0, %v934
  %v936 = vmul.f32 %v933, %v935
  %v937 = vadd.f32 %v933, %v936
  %vm938 = vweird.f32 %v870
  %vm939 = vweird.f32 %v933
  %vm940 = vmor %vm938, %vm939
  %v941 = vsel %vm940, %v933, %v937
  %v942 = vand.u32 2147483647, %v870
  %vm943 = vcmp.eq.f32.partialorder %v942, 8.507059e+37
  %v944 = vand.u32 %v870, 2147483648
  %v945 = vor.u32 1.1754944e-38, %v944
  %v946 = vsel %vm943, %v945, %v941
  %v947 = vmul.f32 1.0, %v946
  %v948 = vrcp.pop %v871
  %v949 = vmul.f32 %v871, %v948
  %v950 = vsub.f32 1.0, %v949
  %v951 = vmul.f32 %v948, %v950
  %v952 = vadd.f32 %v948, %v951
  %vm953 = vweird.f32 %v871
  %vm954 = vweird.f32 %v948
  %vm955 = vmor %vm953, %vm954
  %v956 = vsel %vm955, %v948, %v952
  %v957 = vand.u32 2147483647, %v871
  %vm958 = vcmp.eq.f32.partialorder %v957, 8.507059e+37
  %v959 = vand.u32 %v871, 2147483648
  %v960 = vor.u32 1.1754944e-38, %v959
  %v961 = vsel %vm958, %v960, %v956
  %v962 = vmul.f32 1.0, %v961
  %v963 = vrcp.pop %v872
  %v964 = vmul.f32 %v872, %v963
  %v965 = vsub.f32 1.0, %v964
  %v966 = vmul.f32 %v963, %v965
  %v967 = vadd.f32 %v963, %v966
  %vm968 = vweird.f32 %v872
  %vm969 = vweird.f32 %v963
  %vm970 = vmor %vm968, %vm969
  %v971 = vsel %vm970, %v963, %v967
  %v972 = vand.u32 2147483647, %v872
  %vm973 = vcmp.eq.f32.partialorder %v972, 8.507059e+37
  %v974 = vand.u32 %v872, 2147483648
  %v975 = vor.u32 1.1754944e-38, %v974
  %v976 = vsel %vm973, %v975, %v971
  %v977 = vmul.f32 1.0, %v976
  %v978 = vrcp.pop %v873
  %v979 = vmul.f32 %v873, %v978
  %v980 = vsub.f32 1.0, %v979
  %v981 = vmul.f32 %v978, %v980
  %v982 = vadd.f32 %v978, %v981
  %vm983 = vweird.f32 %v873
  %vm984 = vweird.f32 %v978
  %vm985 = vmor %vm983, %vm984
  %v986 = vsel %vm985, %v978, %v982
  %v987 = vand.u32 2147483647, %v873
  %vm988 = vcmp.eq.f32.partialorder %v987, 8.507059e+37
  %v989 = vand.u32 %v873, 2147483648
  %v990 = vor.u32 1.1754944e-38, %v989
  %v991 = vsel %vm988, %v990, %v986
  %v992 = vmul.f32 1.0, %v991
  %v993 = vrcp.pop %v874
  %v994 = vmul.f32 %v874, %v993
  %v995 = vsub.f32 1.0, %v994
  %v996 = vmul.f32 %v993, %v995
  %v997 = vadd.f32 %v993, %v996
  %vm998 = vweird.f32 %v874
  %vm999 = vweird.f32 %v993
  %vm1000 = vmor %vm998, %vm999
  %v1001 = vsel %vm1000, %v993, %v997
  %v1002 = vand.u32 2147483647, %v874
  %vm1003 = vcmp.eq.f32.partialorder %v1002, 8.507059e+37
  %v1004 = vand.u32 %v874, 2147483648
  %v1005 = vor.u32 1.1754944e-38, %v1004
  %v1006 = vsel %vm1003, %v1005, %v1001
  %v1007 = vmul.f32 1.0, %v1006
  %v1008 = vrcp.pop %v875
  %v1009 = vmul.f32 %v875, %v1008
  %v1010 = vsub.f32 1.0, %v1009
  %v1011 = vmul.f32 %v1008, %v1010
  %v1012 = vadd.f32 %v1008, %v1011
  %vm1013 = vweird.f32 %v875
  %vm1014 = vweird.f32 %v1008
  %vm1015 = vmor %vm1013, %vm1014
  %v1016 = vsel %vm1015, %v1008, %v1012
  %v1017 = vand.u32 2147483647, %v875
  %vm1018 = vcmp.eq.f32.partialorder %v1017, 8.507059e+37
  %v1019 = vand.u32 %v875, 2147483648
  %v1020 = vor.u32 1.1754944e-38, %v1019
  %v1021 = vsel %vm1018, %v1020, %v1016
  %v1022 = vmul.f32 1.0, %v1021
  %v1023 = vrcp.pop %v876
  %v1024 = vmul.f32 %v876, %v1023
  %v1025 = vsub.f32 1.0, %v1024
  %v1026 = vmul.f32 %v1023, %v1025
  %v1027 = vadd.f32 %v1023, %v1026
  %vm1028 = vweird.f32 %v876
  %vm1029 = vweird.f32 %v1023
  %vm1030 = vmor %vm1028, %vm1029
  %v1031 = vsel %vm1030, %v1023, %v1027
  %v1032 = vand.u32 2147483647, %v876
  %vm1033 = vcmp.eq.f32.partialorder %v1032, 8.507059e+37
  %v1034 = vand.u32 %v876, 2147483648
  %v1035 = vor.u32 1.1754944e-38, %v1034
  %v1036 = vsel %vm1033, %v1035, %v1031
  %v1037 = vmul.f32 1.0, %v1036
  %v1038 = vrcp.pop %v877
  %v1039 = vmul.f32 %v877, %v1038
  %v1040 = vsub.f32 1.0, %v1039
  %v1041 = vmul.f32 %v1038, %v1040
  %v1042 = vadd.f32 %v1038, %v1041
  %vm1043 = vweird.f32 %v877
  %vm1044 = vweird.f32 %v1038
  %vm1045 = vmor %vm1043, %vm1044
  %v1046 = vsel %vm1045, %v1038, %v1042
  %v1047 = vand.u32 2147483647, %v877
  %vm1048 = vcmp.eq.f32.partialorder %v1047, 8.507059e+37
  %v1049 = vand.u32 %v877, 2147483648
  %v1050 = vor.u32 1.1754944e-38, %v1049
  %v1051 = vsel %vm1048, %v1050, %v1046
  %v1052 = vmul.f32 1.0, %v1051
  %v1053 = vrcp.pop %v878
  %v1054 = vmul.f32 %v878, %v1053
  %v1055 = vsub.f32 1.0, %v1054
  %v1056 = vmul.f32 %v1053, %v1055
  %v1057 = vadd.f32 %v1053, %v1056
  %vm1058 = vweird.f32 %v878
  %vm1059 = vweird.f32 %v1053
  %vm1060 = vmor %vm1058, %vm1059
  %v1061 = vsel %vm1060, %v1053, %v1057
  %v1062 = vand.u32 2147483647, %v878
  %vm1063 = vcmp.eq.f32.partialorder %v1062, 8.507059e+37
  %v1064 = vand.u32 %v878, 2147483648
  %v1065 = vor.u32 1.1754944e-38, %v1064
  %v1066 = vsel %vm1063, %v1065, %v1061
  %v1067 = vmul.f32 1.0, %v1066
  %v1068 = vrcp.pop %v879
  %v1069 = vmul.f32 %v879, %v1068
  %v1070 = vsub.f32 1.0, %v1069
  %v1071 = vmul.f32 %v1068, %v1070
  %v1072 = vadd.f32 %v1068, %v1071
  %vm1073 = vweird.f32 %v879
  %vm1074 = vweird.f32 %v1068
  %vm1075 = vmor %vm1073, %vm1074
  %v1076 = vsel %vm1075, %v1068, %v1072
  %v1077 = vand.u32 2147483647, %v879
  %vm1078 = vcmp.eq.f32.partialorder %v1077, 8.507059e+37
  %v1079 = vand.u32 %v879, 2147483648
  %v1080 = vor.u32 1.1754944e-38, %v1079
  %v1081 = vsel %vm1078, %v1080, %v1076
  %v1082 = vmul.f32 1.0, %v1081
  %v1083 = vrcp.pop %v880
  %v1084 = vmul.f32 %v880, %v1083
  %v1085 = vsub.f32 1.0, %v1084
  %v1086 = vmul.f32 %v1083, %v1085
  %v1087 = vadd.f32 %v1083, %v1086
  %vm1088 = vweird.f32 %v880
  %vm1089 = vweird.f32 %v1083
  %vm1090 = vmor %vm1088, %vm1089
  %v1091 = vsel %vm1090, %v1083, %v1087
  %v1092 = vand.u32 2147483647, %v880
  %vm1093 = vcmp.eq.f32.partialorder %v1092, 8.507059e+37
  %v1094 = vand.u32 %v880, 2147483648
  %v1095 = vor.u32 1.1754944e-38, %v1094
  %v1096 = vsel %vm1093, %v1095, %v1091
  %v1097 = vmul.f32 1.0, %v1096
  %v1098 = vrcp.pop %v881
  %v1099 = vmul.f32 %v881, %v1098
  %v1100 = vsub.f32 1.0, %v1099
  %v1101 = vmul.f32 %v1098, %v1100
  %v1102 = vadd.f32 %v1098, %v1101
  %vm1103 = vweird.f32 %v881
  %vm1104 = vweird.f32 %v1098
  %vm1105 = vmor %vm1103, %vm1104
  %v1106 = vsel %vm1105, %v1098, %v1102
  %v1107 = vand.u32 2147483647, %v881
  %vm1108 = vcmp.eq.f32.partialorder %v1107, 8.507059e+37
  %v1109 = vand.u32 %v881, 2147483648
  %v1110 = vor.u32 1.1754944e-38, %v1109
  %v1111 = vsel %vm1108, %v1110, %v1106
  %v1112 = vmul.f32 1.0, %v1111
  %v1113 = vrcp.pop %v882
  %v1114 = vmul.f32 %v882, %v1113
  %v1115 = vsub.f32 1.0, %v1114
  %v1116 = vmul.f32 %v1113, %v1115
  %v1117 = vadd.f32 %v1113, %v1116
  %vm1118 = vweird.f32 %v882
  %vm1119 = vweird.f32 %v1113
  %vm1120 = vmor %vm1118, %vm1119
  %v1121 = vsel %vm1120, %v1113, %v1117
  %v1122 = vand.u32 2147483647, %v882
  %vm1123 = vcmp.eq.f32.partialorder %v1122, 8.507059e+37
  %v1124 = vand.u32 %v882, 2147483648
  %v1125 = vor.u32 1.1754944e-38, %v1124
  %v1126 = vsel %vm1123, %v1125, %v1121
  %v1127 = vmul.f32 1.0, %v1126
  %v1128 = vrcp.pop %v883
  %v1129 = vmul.f32 %v883, %v1128
  %v1130 = vsub.f32 1.0, %v1129
  %v1131 = vmul.f32 %v1128, %v1130
  %v1132 = vadd.f32 %v1128, %v1131
  %vm1133 = vweird.f32 %v883
  %vm1134 = vweird.f32 %v1128
  %vm1135 = vmor %vm1133, %vm1134
  %v1136 = vsel %vm1135, %v1128, %v1132
  %v1137 = vand.u32 2147483647, %v883
  %vm1138 = vcmp.eq.f32.partialorder %v1137, 8.507059e+37
  %v1139 = vand.u32 %v883, 2147483648
  %v1140 = vor.u32 1.1754944e-38, %v1139
  %v1141 = vsel %vm1138, %v1140, %v1136
  %v1142 = vmul.f32 1.0, %v1141
  %v1143 = vrcp.pop %v884
  %v1144 = vmul.f32 %v884, %v1143
  %v1145 = vsub.f32 1.0, %v1144
  %v1146 = vmul.f32 %v1143, %v1145
  %v1147 = vadd.f32 %v1143, %v1146
  %vm1148 = vweird.f32 %v884
  %vm1149 = vweird.f32 %v1143
  %vm1150 = vmor %vm1148, %vm1149
  %v1151 = vsel %vm1150, %v1143, %v1147
  %v1152 = vand.u32 2147483647, %v884
  %vm1153 = vcmp.eq.f32.partialorder %v1152, 8.507059e+37
  %v1154 = vand.u32 %v884, 2147483648
  %v1155 = vor.u32 1.1754944e-38, %v1154
  %v1156 = vsel %vm1153, %v1155, %v1151
  %v1157 = vmul.f32 1.0, %v1156
  %v1158 = vrcp.pop %v885
  %v1159 = vmul.f32 %v885, %v1158
  %v1160 = vsub.f32 1.0, %v1159
  %v1161 = vmul.f32 %v1158, %v1160
  %v1162 = vadd.f32 %v1158, %v1161
  %vm1163 = vweird.f32 %v885
  %vm1164 = vweird.f32 %v1158
  %vm1165 = vmor %vm1163, %vm1164
  %v1166 = vsel %vm1165, %v1158, %v1162
  %v1167 = vand.u32 2147483647, %v885
  %vm1168 = vcmp.eq.f32.partialorder %v1167, 8.507059e+37
  %v1169 = vand.u32 %v885, 2147483648
  %v1170 = vor.u32 1.1754944e-38, %v1169
  %v1171 = vsel %vm1168, %v1170, %v1166
  %v1172 = vmul.f32 1.0, %v1171
  %v1173 = vrcp.pop %v886
  %v1174 = vmul.f32 %v886, %v1173
  %v1175 = vsub.f32 1.0, %v1174
  %v1176 = vmul.f32 %v1173, %v1175
  %v1177 = vadd.f32 %v1173, %v1176
  %vm1178 = vweird.f32 %v886
  %vm1179 = vweird.f32 %v1173
  %vm1180 = vmor %vm1178, %vm1179
  %v1181 = vsel %vm1180, %v1173, %v1177
  %v1182 = vand.u32 2147483647, %v886
  %vm1183 = vcmp.eq.f32.partialorder %v1182, 8.507059e+37
  %v1184 = vand.u32 %v886, 2147483648
  %v1185 = vor.u32 1.1754944e-38, %v1184
  %v1186 = vsel %vm1183, %v1185, %v1181
  %v1187 = vmul.f32 1.0, %v1186
  %v1188 = vrcp.pop %v887
  %v1189 = vmul.f32 %v887, %v1188
  %v1190 = vsub.f32 1.0, %v1189
  %v1191 = vmul.f32 %v1188, %v1190
  %v1192 = vadd.f32 %v1188, %v1191
  %vm1193 = vweird.f32 %v887
  %vm1194 = vweird.f32 %v1188
  %vm1195 = vmor %vm1193, %vm1194
  %v1196 = vsel %vm1195, %v1188, %v1192
  %v1197 = vand.u32 2147483647, %v887
  %vm1198 = vcmp.eq.f32.partialorder %v1197, 8.507059e+37
  %v1199 = vand.u32 %v887, 2147483648
  %v1200 = vor.u32 1.1754944e-38, %v1199
  %v1201 = vsel %vm1198, %v1200, %v1196
  %v1202 = vmul.f32 1.0, %v1201
  %1224 = vrot.lane.b32.xlu0 %v902, 112
  %v1225 = vpop.permute.xlu0 %1224
  %1226 = vrot.lane.b32.xlu0 %v917, 112
  %v1227 = vpop.permute.xlu0 %1226
  %1228 = vrot.lane.b32.xlu0 %v932, 112
  %v1229 = vpop.permute.xlu0 %1228
  %1230 = vrot.lane.b32.xlu0 %v947, 112
  %v1231 = vpop.permute.xlu0 %1230
  %1232 = vrot.lane.b32.xlu0 %v962, 112
  %v1233 = vpop.permute.xlu0 %1232
  %1234 = vrot.lane.b32.xlu0 %v977, 112
  %v1235 = vpop.permute.xlu0 %1234
  %1236 = vrot.lane.b32.xlu0 %v992, 112
  %v1237 = vpop.permute.xlu0 %1236
  %1238 = vrot.lane.b32.xlu0 %v1007, 112
  %v1239 = vpop.permute.xlu0 %1238
  %1240 = vrot.lane.b32.xlu0 %v1022, 112
  %v1241 = vpop.permute.xlu0 %1240
  %1242 = vrot.lane.b32.xlu0 %v1037, 112
  %v1243 = vpop.permute.xlu0 %1242
  %1244 = vrot.lane.b32.xlu0 %v1052, 112
  %v1245 = vpop.permute.xlu0 %1244
  %1246 = vrot.lane.b32.xlu0 %v1067, 112
  %v1247 = vpop.permute.xlu0 %1246
  %1248 = vrot.lane.b32.xlu0 %v1082, 112
  %v1249 = vpop.permute.xlu0 %1248
  %1250 = vrot.lane.b32.xlu0 %v1097, 112
  %v1251 = vpop.permute.xlu0 %1250
  %1252 = vrot.lane.b32.xlu0 %v1112, 112
  %v1253 = vpop.permute.xlu0 %1252
  %1254 = vrot.lane.b32.xlu0 %v1127, 112
  %v1255 = vpop.permute.xlu0 %1254
  %1256 = vrot.lane.b32.xlu0 %v1142, 112
  %v1257 = vpop.permute.xlu0 %1256
  %1258 = vrot.lane.b32.xlu0 %v1157, 112
  %v1259 = vpop.permute.xlu0 %1258
  %1260 = vrot.lane.b32.xlu0 %v1172, 112
  %v1261 = vpop.permute.xlu0 %1260
  %1262 = vrot.lane.b32.xlu0 %v1187, 112
  %v1263 = vpop.permute.xlu0 %1262
  %1264 = vrot.lane.b32.xlu0 %v1202, 112
  %v1265 = vpop.permute.xlu0 %1264
  %v1287 = vmul.f32 %v783, %v1225
  %v1288 = vmul.f32 %v784, %v1227
  %v1289 = vmul.f32 %v785, %v1229
  %v1290 = vmul.f32 %v786, %v1231
  %v1291 = vmul.f32 %v787, %v1233
  %v1292 = vmul.f32 %v788, %v1235
  %v1293 = vmul.f32 %v789, %v1237
  %v1294 = vmul.f32 %v790, %v1239
  %v1295 = vmul.f32 %v791, %v1241
  %v1296 = vmul.f32 %v792, %v1243
  %v1297 = vmul.f32 %v793, %v1245
  %v1298 = vmul.f32 %v794, %v1247
  %v1299 = vmul.f32 %v795, %v1249
  %v1300 = vmul.f32 %v796, %v1251
  %v1301 = vmul.f32 %v797, %v1253
  %v1302 = vmul.f32 %v798, %v1255
  %v1303 = vmul.f32 %v799, %v1257
  %v1304 = vmul.f32 %v800, %v1259
  %v1305 = vmul.f32 %v801, %v1261
  %v1306 = vmul.f32 %v802, %v1263
  %v1307 = vmul.f32 %v803, %v1265
  %vm1308 = vcmask 130048
  %1309 = vst.msk [vmem:[%s3] sm:$0xff] %vm1308, %v1287
  %1310 = vst.msk [vmem:[%s3 + $0x8] sm:$0xff] %vm1308, %v1288
  %1311 = vst.msk [vmem:[%s3 + $0x10] sm:$0xff] %vm1308, %v1289
  %1312 = vst.msk [vmem:[%s3 + $0x18] sm:$0xff] %vm1308, %v1290
  %1313 = vst.msk [vmem:[%s3 + $0x20] sm:$0xff] %vm1308, %v1291
  %1314 = vst.msk [vmem:[%s3 + $0x28] sm:$0xff] %vm1308, %v1292
  %1315 = vst.msk [vmem:[%s3 + $0x30] sm:$0xff] %vm1308, %v1293
  %1316 = vst.msk [vmem:[%s3 + $0x38] sm:$0xff] %vm1308, %v1294
  %1317 = vst.msk [vmem:[%s3 + $0x40] sm:$0xff] %vm1308, %v1295
  %1318 = vst.msk [vmem:[%s3 + $0x48] sm:$0xff] %vm1308, %v1296
  %1319 = vst.msk [vmem:[%s3 + $0x50] sm:$0xff] %vm1308, %v1297
  %1320 = vst.msk [vmem:[%s3 + $0x58] sm:$0xff] %vm1308, %v1298
  %1321 = vst.msk [vmem:[%s3 + $0x60] sm:$0xff] %vm1308, %v1299
  %1322 = vst.msk [vmem:[%s3 + $0x68] sm:$0xff] %vm1308, %v1300
  %1323 = vst.msk [vmem:[%s3 + $0x70] sm:$0xff] %vm1308, %v1301
  %1324 = vst.msk [vmem:[%s3 + $0x78] sm:$0xff] %vm1308, %v1302
  %1325 = vst.msk [vmem:[%s3 + $0x80] sm:$0xff] %vm1308, %v1303
  %1326 = vst.msk [vmem:[%s3 + $0x88] sm:$0xff] %vm1308, %v1304
  %1327 = vst.msk [vmem:[%s3 + $0x90] sm:$0xff] %vm1308, %v1305
  %1328 = vst.msk [vmem:[%s3 + $0x98] sm:$0xff] %vm1308, %v1306
  %vm1329 = vcmask 123904
  %1330 = vst.msk [vmem:[%s3 + $0xa0] sm:$0x3] %vm1329, %v1307
  // Predicated region
  $region14: #{degli_forward.12} parent=0 // pred_check
    _
  $region15: #{degli_forward.12} parent=0 // pred_check_branch
    %1332 = sbr.rel (0) target = $region17
  $region16: #{degli_forward.12} parent=0 // pred_region
    _
  $region17: #{degli_forward.12} parent=0 // pred_fallthru
    _
  // Predicated region
  $region18: #{degli_forward.12} parent=0 // pred_check
    _
  $region19: #{degli_forward.12} parent=0 // pred_check_branch
    %1334 = sbr.rel (0) target = $region21
  $region20: #{degli_forward.12} parent=0 // pred_region
    _
  $region21: #{degli_forward.12} parent=0 // pred_fallthru
    _

// kernel: degli_forward.13
$region0: #{degli_forward.13}
  #allocation0 [shape = 'u32[]', space=smem, size = 0x4, offset = 0x4, fixed_abs, tag = 'smem constant byte address 0x4 - core index']
  #allocation1 [shape = 'u32[72,128]{1,0:T(1,128)}', space=vmem, size = 0x9000, scoped, tag = 'internal scratch']
  %s0 = inlined_call_operand.vmem [shape: f32[162,784], index: 0, kind: input, shape index: {}]
  %s1 = inlined_call_operand.vmem [shape: f32[784,32], index: 1, kind: input, shape index: {}]
  %s2 = inlined_call_operand.vmem [shape: f32[1,32], index: 2, kind: input, shape index: {}]
  %s3 = inlined_call_operand.vmem [shape: f32[162,16], index: 3, kind: output, shape index: {}]
  %s4 = sld [smem:[#allocation0]]
  $region22: #{degli_forward.13} parent=0
    _
  %s6 = ssub.s32 1, %s4
  %s7 = scalar_select 0, %s6, %s4
  // Predicated region
  $region2: #{degli_forward.13} parent=0 // pred_check
    _
  $region3: #{degli_forward.13} parent=0 // pred_check_branch
    %9 = sbr.rel (0) target = $region5
  $region4: #{degli_forward.13} parent=0 // pred_region
    _
  $region5: #{degli_forward.13} parent=0 // pred_fallthru
    _
  // Predicated region
  $region6: #{degli_forward.13} parent=0 // pred_check
    _
  $region7: #{degli_forward.13} parent=0 // pred_check_branch
    %11 = sbr.rel (0) target = $region9
  $region8: #{degli_forward.13} parent=0 // pred_region
    _
  $region9: #{degli_forward.13} parent=0 // pred_fallthru
    _
  // Predicated region
  $region10: #{degli_forward.13} parent=0 // pred_check
    _
  $region11: #{degli_forward.13} parent=0 // pred_check_branch
    %13 = sbr.rel (0) target = $region13
  $region12: #{degli_forward.13} parent=0 // pred_region
    _
  $region13: #{degli_forward.13} parent=0 // pred_fallthru
    _
  %v14 = vld [vmem:[%s0] sm:$0xff]
  %v15 = vld [vmem:[%s0 + $0x8] sm:$0xff]
  %v16 = vld [vmem:[%s0 + $0x10] sm:$0xff]
  %v17 = vld [vmem:[%s0 + $0x18] sm:$0xff]
  %v18 = vld [vmem:[%s0 + $0x20] sm:$0xff]
  %v19 = vld [vmem:[%s0 + $0x28] sm:$0xff]
  %v20 = vld [vmem:[%s0 + $0x30] sm:$0xff]
  %v21 = vld [vmem:[%s0 + $0x38] sm:$0xff]
  %v22 = vld [vmem:[%s0 + $0x40] sm:$0xff]
  %v23 = vld [vmem:[%s0 + $0x48] sm:$0xff]
  %v24 = vld [vmem:[%s0 + $0x50] sm:$0xff]
  %v25 = vld [vmem:[%s0 + $0x58] sm:$0xff]
  %v26 = vld [vmem:[%s0 + $0x60] sm:$0xff]
  %v27 = vld [vmem:[%s0 + $0x68] sm:$0xff]
  %v28 = vld [vmem:[%s0 + $0x70] sm:$0xff]
  %v29 = vld [vmem:[%s0 + $0x78] sm:$0xff]
  %v30 = vld [vmem:[%s0 + $0x80] sm:$0xff]
  %v31 = vld [vmem:[%s0 + $0x88] sm:$0xff]
  %v32 = vld [vmem:[%s0 + $0x90] sm:$0xff]
  %v33 = vld [vmem:[%s0 + $0x98] sm:$0xff]
  %v34 = vld [vmem:[%s0 + $0xa0] sm:$0xff]
  %v35 = vld [vmem:[%s0 + $0xa8] sm:$0xff]
  %v36 = vld [vmem:[%s0 + $0xb0] sm:$0xff]
  %v37 = vld [vmem:[%s0 + $0xb8] sm:$0xff]
  %v38 = vld [vmem:[%s0 + $0xc0] sm:$0xff]
  %v39 = vld [vmem:[%s0 + $0xc8] sm:$0xff]
  %v40 = vld [vmem:[%s0 + $0xd0] sm:$0xff]
  %v41 = vld [vmem:[%s0 + $0xd8] sm:$0xff]
  %v42 = vld [vmem:[%s0 + $0xe0] sm:$0xff]
  %v43 = vld [vmem:[%s0 + $0xe8] sm:$0xff]
  %v44 = vld [vmem:[%s0 + $0xf0] sm:$0xff]
  %v45 = vld [vmem:[%s0 + $0xf8] sm:$0xff]
  %v46 = vld [vmem:[%s0 + $0x100] sm:$0xff]
  %v47 = vld [vmem:[%s0 + $0x108] sm:$0xff]
  %v48 = vld [vmem:[%s0 + $0x110] sm:$0xff]
  %v49 = vld [vmem:[%s0 + $0x118] sm:$0xff]
  %v50 = vld [vmem:[%s0 + $0x120] sm:$0xff]
  %v51 = vld [vmem:[%s0 + $0x128] sm:$0xff]
  %v52 = vld [vmem:[%s0 + $0x130] sm:$0xff]
  %v53 = vld [vmem:[%s0 + $0x138] sm:$0xff]
  %v54 = vld [vmem:[%s0 + $0x140] sm:$0xff]
  %v55 = vld [vmem:[%s0 + $0x148] sm:$0xff]
  %v56 = vld [vmem:[%s0 + $0x150] sm:$0xff]
  %v57 = vld [vmem:[%s0 + $0x158] sm:$0xff]
  %v58 = vld [vmem:[%s0 + $0x160] sm:$0xff]
  %v59 = vld [vmem:[%s0 + $0x168] sm:$0xff]
  %v60 = vld [vmem:[%s0 + $0x170] sm:$0xff]
  %v61 = vld [vmem:[%s0 + $0x178] sm:$0xff]
  %v62 = vld [vmem:[%s0 + $0x180] sm:$0xff]
  %v63 = vld [vmem:[%s0 + $0x188] sm:$0xff]
  %v64 = vld [vmem:[%s0 + $0x190] sm:$0xff]
  %v65 = vld [vmem:[%s0 + $0x198] sm:$0xff]
  %v66 = vld [vmem:[%s0 + $0x1a0] sm:$0xff]
  %v67 = vld [vmem:[%s0 + $0x1a8] sm:$0xff]
  %v68 = vld [vmem:[%s0 + $0x1b0] sm:$0xff]
  %v69 = vld [vmem:[%s0 + $0x1b8] sm:$0xff]
  %v70 = vld [vmem:[%s0 + $0x1c0] sm:$0xff]
  %v71 = vld [vmem:[%s0 + $0x1c8] sm:$0xff]
  %v72 = vld [vmem:[%s0 + $0x1d0] sm:$0xff]
  %v73 = vld [vmem:[%s0 + $0x1d8] sm:$0xff]
  %v74 = vld [vmem:[%s0 + $0x1e0] sm:$0xff]
  %v75 = vld [vmem:[%s0 + $0x1e8] sm:$0xff]
  %v76 = vld [vmem:[%s0 + $0x1f0] sm:$0xff]
  %v77 = vld [vmem:[%s0 + $0x1f8] sm:$0xff]
  %v78 = vld [vmem:[%s0 + $0x200] sm:$0xff]
  %v79 = vld [vmem:[%s0 + $0x208] sm:$0xff]
  %v80 = vld [vmem:[%s0 + $0x210] sm:$0xff]
  %v81 = vld [vmem:[%s0 + $0x218] sm:$0xff]
  %v82 = vld [vmem:[%s0 + $0x220] sm:$0xff]
  %v83 = vld [vmem:[%s0 + $0x228] sm:$0xff]
  %v84 = vld [vmem:[%s0 + $0x230] sm:$0xff]
  %v85 = vld [vmem:[%s0 + $0x238] sm:$0xff]
  %v86 = vld [vmem:[%s0 + $0x240] sm:$0xff]
  %v87 = vld [vmem:[%s0 + $0x248] sm:$0xff]
  %v88 = vld [vmem:[%s0 + $0x250] sm:$0xff]
  %v89 = vld [vmem:[%s0 + $0x258] sm:$0xff]
  %v90 = vld [vmem:[%s0 + $0x260] sm:$0xff]
  %v91 = vld [vmem:[%s0 + $0x268] sm:$0xff]
  %v92 = vld [vmem:[%s0 + $0x270] sm:$0xff]
  %v93 = vld [vmem:[%s0 + $0x278] sm:$0xff]
  %v94 = vld [vmem:[%s0 + $0x280] sm:$0xff]
  %v95 = vld [vmem:[%s0 + $0x288] sm:$0xff]
  %v96 = vld [vmem:[%s0 + $0x290] sm:$0xff]
  %v97 = vld [vmem:[%s0 + $0x298] sm:$0xff]
  %v98 = vld [vmem:[%s0 + $0x2a0] sm:$0xff]
  %v99 = vld [vmem:[%s0 + $0x2a8] sm:$0xff]
  %v100 = vld [vmem:[%s0 + $0x2b0] sm:$0xff]
  %v101 = vld [vmem:[%s0 + $0x2b8] sm:$0xff]
  %v102 = vld [vmem:[%s0 + $0x2c0] sm:$0xff]
  %v103 = vld [vmem:[%s0 + $0x2c8] sm:$0xff]
  %v104 = vld [vmem:[%s0 + $0x2d0] sm:$0xff]
  %v105 = vld [vmem:[%s0 + $0x2d8] sm:$0xff]
  %v106 = vld [vmem:[%s0 + $0x2e0] sm:$0xff]
  %v107 = vld [vmem:[%s0 + $0x2e8] sm:$0xff]
  %v108 = vld [vmem:[%s0 + $0x2f0] sm:$0xff]
  %v109 = vld [vmem:[%s0 + $0x2f8] sm:$0xff]
  %v110 = vld [vmem:[%s0 + $0x300] sm:$0xff]
  %v111 = vld [vmem:[%s0 + $0x308] sm:$0xff]
  %v112 = vld [vmem:[%s0 + $0x310] sm:$0xff]
  %v113 = vld [vmem:[%s0 + $0x318] sm:$0xff]
  %v114 = vld [vmem:[%s0 + $0x320] sm:$0xff]
  %v115 = vld [vmem:[%s0 + $0x328] sm:$0xff]
  %v116 = vld [vmem:[%s0 + $0x330] sm:$0xff]
  %v117 = vld [vmem:[%s0 + $0x338] sm:$0xff]
  %v118 = vld [vmem:[%s0 + $0x340] sm:$0xff]
  %v119 = vld [vmem:[%s0 + $0x348] sm:$0xff]
  %v120 = vld [vmem:[%s0 + $0x350] sm:$0xff]
  %v121 = vld [vmem:[%s0 + $0x358] sm:$0xff]
  %v122 = vld [vmem:[%s0 + $0x360] sm:$0xff]
  %v123 = vld [vmem:[%s0 + $0x368] sm:$0xff]
  %v124 = vld [vmem:[%s0 + $0x370] sm:$0xff]
  %v125 = vld [vmem:[%s0 + $0x378] sm:$0xff]
  %v126 = vld [vmem:[%s0 + $0x380] sm:$0xff]
  %v127 = vld [vmem:[%s0 + $0x388] sm:$0xff]
  %v128 = vld [vmem:[%s0 + $0x390] sm:$0xff]
  %v129 = vld [vmem:[%s0 + $0x398] sm:$0xff]
  %v130 = vld [vmem:[%s0 + $0x3a0] sm:$0xff]
  %v131 = vld [vmem:[%s0 + $0x3a8] sm:$0xff]
  %v132 = vld [vmem:[%s0 + $0x3b0] sm:$0xff]
  %v133 = vld [vmem:[%s0 + $0x3b8] sm:$0xff]
  %v134 = vld [vmem:[%s0 + $0x3c0] sm:$0xff]
  %v135 = vld [vmem:[%s0 + $0x3c8] sm:$0xff]
  %v136 = vld [vmem:[%s0 + $0x3d0] sm:$0xff]
  %v137 = vld [vmem:[%s0 + $0x3d8] sm:$0xff]
  %v138 = vld [vmem:[%s0 + $0x3e0] sm:$0xff]
  %v139 = vld [vmem:[%s0 + $0x3e8] sm:$0xff]
  %v140 = vld [vmem:[%s0 + $0x3f0] sm:$0xff]
  %v141 = vld [vmem:[%s0 + $0x3f8] sm:$0xff]
  %v142 = vld [vmem:[%s0 + $0x400] sm:$0xff]
  %v143 = vld [vmem:[%s0 + $0x408] sm:$0xff]
  %v144 = vld [vmem:[%s0 + $0x410] sm:$0xff]
  %v145 = vld [vmem:[%s0 + $0x418] sm:$0xff]
  %v146 = vld [vmem:[%s0 + $0x420] sm:$0xff]
  %v147 = vld [vmem:[%s0 + $0x428] sm:$0xff]
  %v148 = vld [vmem:[%s0 + $0x430] sm:$0xff]
  %v149 = vld [vmem:[%s0 + $0x438] sm:$0xff]
  %v150 = vld [vmem:[%s0 + $0x440] sm:$0xff]
  %v151 = vld [vmem:[%s0 + $0x448] sm:$0xff]
  %v152 = vld [vmem:[%s0 + $0x450] sm:$0xff]
  %v153 = vld [vmem:[%s0 + $0x458] sm:$0xff]
  %v154 = vld [vmem:[%s0 + $0x460] sm:$0x3]
  %v155 = vld [vmem:[%s0 + $0x468] sm:$0x3]
  %v156 = vld [vmem:[%s0 + $0x470] sm:$0x3]
  %v157 = vld [vmem:[%s0 + $0x478] sm:$0x3]
  %v158 = vld [vmem:[%s0 + $0x480] sm:$0x3]
  %v159 = vld [vmem:[%s0 + $0x488] sm:$0x3]
  %v160 = vld [vmem:[%s0 + $0x490] sm:$0x3]
  %v161 = vld [vmem:[%s1] sm:$0xff]
  %v162 = vld [vmem:[%s1 + $0x8] sm:$0xff]
  %v163 = vld [vmem:[%s1 + $0x10] sm:$0xff]
  %v164 = vld [vmem:[%s1 + $0x18] sm:$0xff]
  %v165 = vld [vmem:[%s1 + $0x20] sm:$0xff]
  %v166 = vld [vmem:[%s1 + $0x28] sm:$0xff]
  %v167 = vld [vmem:[%s1 + $0x30] sm:$0xff]
  %v168 = vld [vmem:[%s1 + $0x38] sm:$0xff]
  %v169 = vld [vmem:[%s1 + $0x40] sm:$0xff]
  %v170 = vld [vmem:[%s1 + $0x48] sm:$0xff]
  %v171 = vld [vmem:[%s1 + $0x50] sm:$0xff]
  %v172 = vld [vmem:[%s1 + $0x58] sm:$0xff]
  %v173 = vld [vmem:[%s1 + $0x60] sm:$0xff]
  %v174 = vld [vmem:[%s1 + $0x68] sm:$0xff]
  %v175 = vld [vmem:[%s1 + $0x70] sm:$0xff]
  %v176 = vld [vmem:[%s1 + $0x78] sm:$0xff]
  %v177 = vld [vmem:[%s1 + $0x80] sm:$0xff]
  %v178 = vld [vmem:[%s1 + $0x88] sm:$0xff]
  %v179 = vld [vmem:[%s1 + $0x90] sm:$0xff]
  %v180 = vld [vmem:[%s1 + $0x98] sm:$0xff]
  %v181 = vld [vmem:[%s1 + $0xa0] sm:$0xff]
  %v182 = vld [vmem:[%s1 + $0xa8] sm:$0xff]
  %v183 = vld [vmem:[%s1 + $0xb0] sm:$0xff]
  %v184 = vld [vmem:[%s1 + $0xb8] sm:$0xff]
  %v185 = vld [vmem:[%s1 + $0xc0] sm:$0xff]
  %v186 = vld [vmem:[%s1 + $0xc8] sm:$0xff]
  %v187 = vld [vmem:[%s1 + $0xd0] sm:$0xff]
  %v188 = vld [vmem:[%s1 + $0xd8] sm:$0xff]
  %v189 = vld [vmem:[%s1 + $0xe0] sm:$0xff]
  %v190 = vld [vmem:[%s1 + $0xe8] sm:$0xff]
  %v191 = vld [vmem:[%s1 + $0xf0] sm:$0xff]
  %v192 = vld [vmem:[%s1 + $0xf8] sm:$0xff]
  %v193 = vld [vmem:[%s1 + $0x100] sm:$0xff]
  %v194 = vld [vmem:[%s1 + $0x108] sm:$0xff]
  %v195 = vld [vmem:[%s1 + $0x110] sm:$0xff]
  %v196 = vld [vmem:[%s1 + $0x118] sm:$0xff]
  %v197 = vld [vmem:[%s1 + $0x120] sm:$0xff]
  %v198 = vld [vmem:[%s1 + $0x128] sm:$0xff]
  %v199 = vld [vmem:[%s1 + $0x130] sm:$0xff]
  %v200 = vld [vmem:[%s1 + $0x138] sm:$0xff]
  %v201 = vld [vmem:[%s1 + $0x140] sm:$0xff]
  %v202 = vld [vmem:[%s1 + $0x148] sm:$0xff]
  %v203 = vld [vmem:[%s1 + $0x150] sm:$0xff]
  %v204 = vld [vmem:[%s1 + $0x158] sm:$0xff]
  %v205 = vld [vmem:[%s1 + $0x160] sm:$0xff]
  %v206 = vld [vmem:[%s1 + $0x168] sm:$0xff]
  %v207 = vld [vmem:[%s1 + $0x170] sm:$0xff]
  %v208 = vld [vmem:[%s1 + $0x178] sm:$0xff]
  %v209 = vld [vmem:[%s1 + $0x180] sm:$0xff]
  %v210 = vld [vmem:[%s1 + $0x188] sm:$0xff]
  %v211 = vld [vmem:[%s1 + $0x190] sm:$0xff]
  %v212 = vld [vmem:[%s1 + $0x198] sm:$0xff]
  %v213 = vld [vmem:[%s1 + $0x1a0] sm:$0xff]
  %v214 = vld [vmem:[%s1 + $0x1a8] sm:$0xff]
  %v215 = vld [vmem:[%s1 + $0x1b0] sm:$0xff]
  %v216 = vld [vmem:[%s1 + $0x1b8] sm:$0xff]
  %v217 = vld [vmem:[%s1 + $0x1c0] sm:$0xff]
  %v218 = vld [vmem:[%s1 + $0x1c8] sm:$0xff]
  %v219 = vld [vmem:[%s1 + $0x1d0] sm:$0xff]
  %v220 = vld [vmem:[%s1 + $0x1d8] sm:$0xff]
  %v221 = vld [vmem:[%s1 + $0x1e0] sm:$0xff]
  %v222 = vld [vmem:[%s1 + $0x1e8] sm:$0xff]
  %v223 = vld [vmem:[%s1 + $0x1f0] sm:$0xff]
  %v224 = vld [vmem:[%s1 + $0x1f8] sm:$0xff]
  %v225 = vld [vmem:[%s1 + $0x200] sm:$0xff]
  %v226 = vld [vmem:[%s1 + $0x208] sm:$0xff]
  %v227 = vld [vmem:[%s1 + $0x210] sm:$0xff]
  %v228 = vld [vmem:[%s1 + $0x218] sm:$0xff]
  %v229 = vld [vmem:[%s1 + $0x220] sm:$0xff]
  %v230 = vld [vmem:[%s1 + $0x228] sm:$0xff]
  %v231 = vld [vmem:[%s1 + $0x230] sm:$0xff]
  %v232 = vld [vmem:[%s1 + $0x238] sm:$0xff]
  %v233 = vld [vmem:[%s1 + $0x240] sm:$0xff]
  %v234 = vld [vmem:[%s1 + $0x248] sm:$0xff]
  %v235 = vld [vmem:[%s1 + $0x250] sm:$0xff]
  %v236 = vld [vmem:[%s1 + $0x258] sm:$0xff]
  %v237 = vld [vmem:[%s1 + $0x260] sm:$0xff]
  %v238 = vld [vmem:[%s1 + $0x268] sm:$0xff]
  %v239 = vld [vmem:[%s1 + $0x270] sm:$0xff]
  %v240 = vld [vmem:[%s1 + $0x278] sm:$0xff]
  %v241 = vld [vmem:[%s1 + $0x280] sm:$0xff]
  %v242 = vld [vmem:[%s1 + $0x288] sm:$0xff]
  %v243 = vld [vmem:[%s1 + $0x290] sm:$0xff]
  %v244 = vld [vmem:[%s1 + $0x298] sm:$0xff]
  %v245 = vld [vmem:[%s1 + $0x2a0] sm:$0xff]
  %v246 = vld [vmem:[%s1 + $0x2a8] sm:$0xff]
  %v247 = vld [vmem:[%s1 + $0x2b0] sm:$0xff]
  %v248 = vld [vmem:[%s1 + $0x2b8] sm:$0xff]
  %v249 = vld [vmem:[%s1 + $0x2c0] sm:$0xff]
  %v250 = vld [vmem:[%s1 + $0x2c8] sm:$0xff]
  %v251 = vld [vmem:[%s1 + $0x2d0] sm:$0xff]
  %v252 = vld [vmem:[%s1 + $0x2d8] sm:$0xff]
  %v253 = vld [vmem:[%s1 + $0x2e0] sm:$0xff]
  %v254 = vld [vmem:[%s1 + $0x2e8] sm:$0xff]
  %v255 = vld [vmem:[%s1 + $0x2f0] sm:$0xff]
  %v256 = vld [vmem:[%s1 + $0x2f8] sm:$0xff]
  %v257 = vld [vmem:[%s1 + $0x300] sm:$0xff]
  %v258 = vld [vmem:[%s1 + $0x308] sm:$0xff]
  %v259 = vld [vmem:[%s2] sm:$0x1]
  %v261 = vperm.slane %v259, 0
  %vm263 = vcmask 130048
  %v265 = vsel %vm263, %v20, 0
  %v268 = vsel %vm263, %v27, 0
  %v271 = vsel %vm263, %v34, 0
  %v274 = vsel %vm263, %v41, 0
  %v277 = vsel %vm263, %v48, 0
  %v280 = vsel %vm263, %v55, 0
  %v283 = vsel %vm263, %v62, 0
  %v286 = vsel %vm263, %v69, 0
  %v289 = vsel %vm263, %v76, 0
  %v292 = vsel %vm263, %v83, 0
  %v295 = vsel %vm263, %v90, 0
  %v298 = vsel %vm263, %v97, 0
  %v301 = vsel %vm263, %v104, 0
  %v304 = vsel %vm263, %v111, 0
  %v307 = vsel %vm263, %v118, 0
  %v310 = vsel %vm263, %v125, 0
  %v313 = vsel %vm263, %v132, 0
  %v316 = vsel %vm263, %v139, 0
  %v319 = vsel %vm263, %v146, 0
  %v322 = vsel %vm263, %v153, 0
  %v325 = vsel %vm263, %v160, 0
  %327 = vmatpush.msra.mxu0 %v176
  %328 = vmatpush.msra.mxu0 %v175
  %329 = vmatpush.msra.mxu0 %v174
  %330 = vmatpush.msra.mxu0 %v173
  %331 = vmatpush.msra.mxu0 %v172
  %332 = vmatpush.msra.mxu0 %v171
  %333 = vmatpush.msra.mxu0 %v170
  %334 = vmatpush.msra.mxu0 %v169
  %335 = vmatpush.msra.mxu0 %v168
  %336 = vmatpush.msra.mxu0 %v167
  %337 = vmatpush.msra.mxu0 %v166
  %338 = vmatpush.msra.mxu0 %v165
  %339 = vmatpush.msra.mxu0 %v164
  %340 = vmatpush.msra.mxu0 %v163
  %341 = vmatpush.msra.mxu0 %v162
  %342 = vmatpush.msra.mxu0 %v161
  %343 = vmatmul.f32.gmra.mxu0 %v14
  %v344 = vpop.f32.mrf.mxu0
  %v345 = vadd.f32 %v261, %v344
  %346 = vmatmul.f32.gmra.mxu0 %v21
  %v347 = vpop.f32.mrf.mxu0
  %v348 = vadd.f32 %v261, %v347
  %349 = vmatmul.f32.gmra.mxu0 %v28
  %v350 = vpop.f32.mrf.mxu0
  %v351 = vadd.f32 %v261, %v350
  %352 = vmatmul.f32.gmra.mxu0 %v35
  %v353 = vpop.f32.mrf.mxu0
  %v354 = vadd.f32 %v261, %v353
  %355 = vmatmul.f32.gmra.mxu0 %v42
  %v356 = vpop.f32.mrf.mxu0
  %v357 = vadd.f32 %v261, %v356
  %358 = vmatmul.f32.gmra.mxu0 %v49
  %v359 = vpop.f32.mrf.mxu0
  %v360 = vadd.f32 %v261, %v359
  %361 = vmatmul.f32.gmra.mxu0 %v56
  %v362 = vpop.f32.mrf.mxu0
  %v363 = vadd.f32 %v261, %v362
  %364 = vmatmul.f32.gmra.mxu0 %v63
  %v365 = vpop.f32.mrf.mxu0
  %v366 = vadd.f32 %v261, %v365
  %367 = vmatmul.f32.gmra.mxu0 %v70
  %v368 = vpop.f32.mrf.mxu0
  %v369 = vadd.f32 %v261, %v368
  %370 = vmatmul.f32.gmra.mxu0 %v77
  %v371 = vpop.f32.mrf.mxu0
  %v372 = vadd.f32 %v261, %v371
  %373 = vmatmul.f32.gmra.mxu0 %v84
  %v374 = vpop.f32.mrf.mxu0
  %v375 = vadd.f32 %v261, %v374
  %376 = vmatmul.f32.gmra.mxu0 %v91
  %v377 = vpop.f32.mrf.mxu0
  %v378 = vadd.f32 %v261, %v377
  %379 = vmatmul.f32.gmra.mxu0 %v98
  %v380 = vpop.f32.mrf.mxu0
  %v381 = vadd.f32 %v261, %v380
  %382 = vmatmul.f32.gmra.mxu0 %v105
  %v383 = vpop.f32.mrf.mxu0
  %v384 = vadd.f32 %v261, %v383
  %385 = vmatmul.f32.gmra.mxu0 %v112
  %v386 = vpop.f32.mrf.mxu0
  %v387 = vadd.f32 %v261, %v386
  %388 = vmatmul.f32.gmra.mxu0 %v119
  %v389 = vpop.f32.mrf.mxu0
  %v390 = vadd.f32 %v261, %v389
  %391 = vmatmul.f32.gmra.mxu0 %v126
  %v392 = vpop.f32.mrf.mxu0
  %v393 = vadd.f32 %v261, %v392
  %394 = vmatmul.f32.gmra.mxu0 %v133
  %v395 = vpop.f32.mrf.mxu0
  %v396 = vadd.f32 %v261, %v395
  %397 = vmatmul.f32.gmra.mxu0 %v140
  %v398 = vpop.f32.mrf.mxu0
  %v399 = vadd.f32 %v261, %v398
  %400 = vmatmul.f32.gmra.mxu0 %v147
  %v401 = vpop.f32.mrf.mxu0
  %v402 = vadd.f32 %v261, %v401
  %403 = vmatmul.f32.gmra.mxu0 %v154
  %v404 = vpop.f32.mrf.mxu0
  %v405 = vadd.f32 %v261, %v404
  %406 = vdwg.mxu0
  %407 = vmatpush.msra.mxu0 %v192
  %408 = vmatpush.msra.mxu0 %v191
  %409 = vmatpush.msra.mxu0 %v190
  %410 = vmatpush.msra.mxu0 %v189
  %411 = vmatpush.msra.mxu0 %v188
  %412 = vmatpush.msra.mxu0 %v187
  %413 = vmatpush.msra.mxu0 %v186
  %414 = vmatpush.msra.mxu0 %v185
  %415 = vmatpush.msra.mxu0 %v184
  %416 = vmatpush.msra.mxu0 %v183
  %417 = vmatpush.msra.mxu0 %v182
  %418 = vmatpush.msra.mxu0 %v181
  %419 = vmatpush.msra.mxu0 %v180
  %420 = vmatpush.msra.mxu0 %v179
  %421 = vmatpush.msra.mxu0 %v178
  %422 = vmatpush.msra.mxu0 %v177
  %423 = vmatmul.f32.gmra.mxu0 %v15
  %v424 = vpop.f32.mrf.mxu0
  %v425 = vadd.f32 %v345, %v424
  %426 = vmatmul.f32.gmra.mxu0 %v22
  %v427 = vpop.f32.mrf.mxu0
  %v428 = vadd.f32 %v348, %v427
  %429 = vmatmul.f32.gmra.mxu0 %v29
  %v430 = vpop.f32.mrf.mxu0
  %v431 = vadd.f32 %v351, %v430
  %432 = vmatmul.f32.gmra.mxu0 %v36
  %v433 = vpop.f32.mrf.mxu0
  %v434 = vadd.f32 %v354, %v433
  %435 = vmatmul.f32.gmra.mxu0 %v43
  %v436 = vpop.f32.mrf.mxu0
  %v437 = vadd.f32 %v357, %v436
  %438 = vmatmul.f32.gmra.mxu0 %v50
  %v439 = vpop.f32.mrf.mxu0
  %v440 = vadd.f32 %v360, %v439
  %441 = vmatmul.f32.gmra.mxu0 %v57
  %v442 = vpop.f32.mrf.mxu0
  %v443 = vadd.f32 %v363, %v442
  %444 = vmatmul.f32.gmra.mxu0 %v64
  %v445 = vpop.f32.mrf.mxu0
  %v446 = vadd.f32 %v366, %v445
  %447 = vmatmul.f32.gmra.mxu0 %v71
  %v448 = vpop.f32.mrf.mxu0
  %v449 = vadd.f32 %v369, %v448
  %450 = vmatmul.f32.gmra.mxu0 %v78
  %v451 = vpop.f32.mrf.mxu0
  %v452 = vadd.f32 %v372, %v451
  %453 = vmatmul.f32.gmra.mxu0 %v85
  %v454 = vpop.f32.mrf.mxu0
  %v455 = vadd.f32 %v375, %v454
  %456 = vmatmul.f32.gmra.mxu0 %v92
  %v457 = vpop.f32.mrf.mxu0
  %v458 = vadd.f32 %v378, %v457
  %459 = vmatmul.f32.gmra.mxu0 %v99
  %v460 = vpop.f32.mrf.mxu0
  %v461 = vadd.f32 %v381, %v460
  %462 = vmatmul.f32.gmra.mxu0 %v106
  %v463 = vpop.f32.mrf.mxu0
  %v464 = vadd.f32 %v384, %v463
  %465 = vmatmul.f32.gmra.mxu0 %v113
  %v466 = vpop.f32.mrf.mxu0
  %v467 = vadd.f32 %v387, %v466
  %468 = vmatmul.f32.gmra.mxu0 %v120
  %v469 = vpop.f32.mrf.mxu0
  %v470 = vadd.f32 %v390, %v469
  %471 = vmatmul.f32.gmra.mxu0 %v127
  %v472 = vpop.f32.mrf.mxu0
  %v473 = vadd.f32 %v393, %v472
  %474 = vmatmul.f32.gmra.mxu0 %v134
  %v475 = vpop.f32.mrf.mxu0
  %v476 = vadd.f32 %v396, %v475
  %477 = vmatmul.f32.gmra.mxu0 %v141
  %v478 = vpop.f32.mrf.mxu0
  %v479 = vadd.f32 %v399, %v478
  %480 = vmatmul.f32.gmra.mxu0 %v148
  %v481 = vpop.f32.mrf.mxu0
  %v482 = vadd.f32 %v402, %v481
  %483 = vmatmul.f32.gmra.mxu0 %v155
  %v484 = vpop.f32.mrf.mxu0
  %v485 = vadd.f32 %v405, %v484
  %486 = vdwg.mxu0
  %487 = vmatpush.msra.mxu0 %v208
  %488 = vmatpush.msra.mxu0 %v207
  %489 = vmatpush.msra.mxu0 %v206
  %490 = vmatpush.msra.mxu0 %v205
  %491 = vmatpush.msra.mxu0 %v204
  %492 = vmatpush.msra.mxu0 %v203
  %493 = vmatpush.msra.mxu0 %v202
  %494 = vmatpush.msra.mxu0 %v201
  %495 = vmatpush.msra.mxu0 %v200
  %496 = vmatpush.msra.mxu0 %v199
  %497 = vmatpush.msra.mxu0 %v198
  %498 = vmatpush.msra.mxu0 %v197
  %499 = vmatpush.msra.mxu0 %v196
  %500 = vmatpush.msra.mxu0 %v195
  %501 = vmatpush.msra.mxu0 %v194
  %502 = vmatpush.msra.mxu0 %v193
  %503 = vmatmul.f32.gmra.mxu0 %v16
  %v504 = vpop.f32.mrf.mxu0
  %v505 = vadd.f32 %v425, %v504
  %506 = vmatmul.f32.gmra.mxu0 %v23
  %v507 = vpop.f32.mrf.mxu0
  %v508 = vadd.f32 %v428, %v507
  %509 = vmatmul.f32.gmra.mxu0 %v30
  %v510 = vpop.f32.mrf.mxu0
  %v511 = vadd.f32 %v431, %v510
  %512 = vmatmul.f32.gmra.mxu0 %v37
  %v513 = vpop.f32.mrf.mxu0
  %v514 = vadd.f32 %v434, %v513
  %515 = vmatmul.f32.gmra.mxu0 %v44
  %v516 = vpop.f32.mrf.mxu0
  %v517 = vadd.f32 %v437, %v516
  %518 = vmatmul.f32.gmra.mxu0 %v51
  %v519 = vpop.f32.mrf.mxu0
  %v520 = vadd.f32 %v440, %v519
  %521 = vmatmul.f32.gmra.mxu0 %v58
  %v522 = vpop.f32.mrf.mxu0
  %v523 = vadd.f32 %v443, %v522
  %524 = vmatmul.f32.gmra.mxu0 %v65
  %v525 = vpop.f32.mrf.mxu0
  %v526 = vadd.f32 %v446, %v525
  %527 = vmatmul.f32.gmra.mxu0 %v72
  %v528 = vpop.f32.mrf.mxu0
  %v529 = vadd.f32 %v449, %v528
  %530 = vmatmul.f32.gmra.mxu0 %v79
  %v531 = vpop.f32.mrf.mxu0
  %v532 = vadd.f32 %v452, %v531
  %533 = vmatmul.f32.gmra.mxu0 %v86
  %v534 = vpop.f32.mrf.mxu0
  %v535 = vadd.f32 %v455, %v534
  %536 = vmatmul.f32.gmra.mxu0 %v93
  %v537 = vpop.f32.mrf.mxu0
  %v538 = vadd.f32 %v458, %v537
  %539 = vmatmul.f32.gmra.mxu0 %v100
  %v540 = vpop.f32.mrf.mxu0
  %v541 = vadd.f32 %v461, %v540
  %542 = vmatmul.f32.gmra.mxu0 %v107
  %v543 = vpop.f32.mrf.mxu0
  %v544 = vadd.f32 %v464, %v543
  %545 = vmatmul.f32.gmra.mxu0 %v114
  %v546 = vpop.f32.mrf.mxu0
  %v547 = vadd.f32 %v467, %v546
  %548 = vmatmul.f32.gmra.mxu0 %v121
  %v549 = vpop.f32.mrf.mxu0
  %v550 = vadd.f32 %v470, %v549
  %551 = vmatmul.f32.gmra.mxu0 %v128
  %v552 = vpop.f32.mrf.mxu0
  %v553 = vadd.f32 %v473, %v552
  %554 = vmatmul.f32.gmra.mxu0 %v135
  %v555 = vpop.f32.mrf.mxu0
  %v556 = vadd.f32 %v476, %v555
  %557 = vmatmul.f32.gmra.mxu0 %v142
  %v558 = vpop.f32.mrf.mxu0
  %v559 = vadd.f32 %v479, %v558
  %560 = vmatmul.f32.gmra.mxu0 %v149
  %v561 = vpop.f32.mrf.mxu0
  %v562 = vadd.f32 %v482, %v561
  %563 = vmatmul.f32.gmra.mxu0 %v156
  %v564 = vpop.f32.mrf.mxu0
  %v565 = vadd.f32 %v485, %v564
  %566 = vdwg.mxu0
  %567 = vmatpush.msra.mxu0 %v224
  %568 = vmatpush.msra.mxu0 %v223
  %569 = vmatpush.msra.mxu0 %v222
  %570 = vmatpush.msra.mxu0 %v221
  %571 = vmatpush.msra.mxu0 %v220
  %572 = vmatpush.msra.mxu0 %v219
  %573 = vmatpush.msra.mxu0 %v218
  %574 = vmatpush.msra.mxu0 %v217
  %575 = vmatpush.msra.mxu0 %v216
  %576 = vmatpush.msra.mxu0 %v215
  %577 = vmatpush.msra.mxu0 %v214
  %578 = vmatpush.msra.mxu0 %v213
  %579 = vmatpush.msra.mxu0 %v212
  %580 = vmatpush.msra.mxu0 %v211
  %581 = vmatpush.msra.mxu0 %v210
  %582 = vmatpush.msra.mxu0 %v209
  %583 = vmatmul.f32.gmra.mxu0 %v17
  %v584 = vpop.f32.mrf.mxu0
  %v585 = vadd.f32 %v505, %v584
  %586 = vmatmul.f32.gmra.mxu0 %v24
  %v587 = vpop.f32.mrf.mxu0
  %v588 = vadd.f32 %v508, %v587
  %589 = vmatmul.f32.gmra.mxu0 %v31
  %v590 = vpop.f32.mrf.mxu0
  %v591 = vadd.f32 %v511, %v590
  %592 = vmatmul.f32.gmra.mxu0 %v38
  %v593 = vpop.f32.mrf.mxu0
  %v594 = vadd.f32 %v514, %v593
  %595 = vmatmul.f32.gmra.mxu0 %v45
  %v596 = vpop.f32.mrf.mxu0
  %v597 = vadd.f32 %v517, %v596
  %598 = vmatmul.f32.gmra.mxu0 %v52
  %v599 = vpop.f32.mrf.mxu0
  %v600 = vadd.f32 %v520, %v599
  %601 = vmatmul.f32.gmra.mxu0 %v59
  %v602 = vpop.f32.mrf.mxu0
  %v603 = vadd.f32 %v523, %v602
  %604 = vmatmul.f32.gmra.mxu0 %v66
  %v605 = vpop.f32.mrf.mxu0
  %v606 = vadd.f32 %v526, %v605
  %607 = vmatmul.f32.gmra.mxu0 %v73
  %v608 = vpop.f32.mrf.mxu0
  %v609 = vadd.f32 %v529, %v608
  %610 = vmatmul.f32.gmra.mxu0 %v80
  %v611 = vpop.f32.mrf.mxu0
  %v612 = vadd.f32 %v532, %v611
  %613 = vmatmul.f32.gmra.mxu0 %v87
  %v614 = vpop.f32.mrf.mxu0
  %v615 = vadd.f32 %v535, %v614
  %616 = vmatmul.f32.gmra.mxu0 %v94
  %v617 = vpop.f32.mrf.mxu0
  %v618 = vadd.f32 %v538, %v617
  %619 = vmatmul.f32.gmra.mxu0 %v101
  %v620 = vpop.f32.mrf.mxu0
  %v621 = vadd.f32 %v541, %v620
  %622 = vmatmul.f32.gmra.mxu0 %v108
  %v623 = vpop.f32.mrf.mxu0
  %v624 = vadd.f32 %v544, %v623
  %625 = vmatmul.f32.gmra.mxu0 %v115
  %v626 = vpop.f32.mrf.mxu0
  %v627 = vadd.f32 %v547, %v626
  %628 = vmatmul.f32.gmra.mxu0 %v122
  %v629 = vpop.f32.mrf.mxu0
  %v630 = vadd.f32 %v550, %v629
  %631 = vmatmul.f32.gmra.mxu0 %v129
  %v632 = vpop.f32.mrf.mxu0
  %v633 = vadd.f32 %v553, %v632
  %634 = vmatmul.f32.gmra.mxu0 %v136
  %v635 = vpop.f32.mrf.mxu0
  %v636 = vadd.f32 %v556, %v635
  %637 = vmatmul.f32.gmra.mxu0 %v143
  %v638 = vpop.f32.mrf.mxu0
  %v639 = vadd.f32 %v559, %v638
  %640 = vmatmul.f32.gmra.mxu0 %v150
  %v641 = vpop.f32.mrf.mxu0
  %v642 = vadd.f32 %v562, %v641
  %643 = vmatmul.f32.gmra.mxu0 %v157
  %v644 = vpop.f32.mrf.mxu0
  %v645 = vadd.f32 %v565, %v644
  %646 = vdwg.mxu0
  %647 = vmatpush.msra.mxu0 %v240
  %648 = vmatpush.msra.mxu0 %v239
  %649 = vmatpush.msra.mxu0 %v238
  %650 = vmatpush.msra.mxu0 %v237
  %651 = vmatpush.msra.mxu0 %v236
  %652 = vmatpush.msra.mxu0 %v235
  %653 = vmatpush.msra.mxu0 %v234
  %654 = vmatpush.msra.mxu0 %v233
  %655 = vmatpush.msra.mxu0 %v232
  %656 = vmatpush.msra.mxu0 %v231
  %657 = vmatpush.msra.mxu0 %v230
  %658 = vmatpush.msra.mxu0 %v229
  %659 = vmatpush.msra.mxu0 %v228
  %660 = vmatpush.msra.mxu0 %v227
  %661 = vmatpush.msra.mxu0 %v226
  %662 = vmatpush.msra.mxu0 %v225
  %663 = vmatmul.f32.gmra.mxu0 %v18
  %v664 = vpop.f32.mrf.mxu0
  %v665 = vadd.f32 %v585, %v664
  %666 = vmatmul.f32.gmra.mxu0 %v25
  %v667 = vpop.f32.mrf.mxu0
  %v668 = vadd.f32 %v588, %v667
  %669 = vmatmul.f32.gmra.mxu0 %v32
  %v670 = vpop.f32.mrf.mxu0
  %v671 = vadd.f32 %v591, %v670
  %672 = vmatmul.f32.gmra.mxu0 %v39
  %v673 = vpop.f32.mrf.mxu0
  %v674 = vadd.f32 %v594, %v673
  %675 = vmatmul.f32.gmra.mxu0 %v46
  %v676 = vpop.f32.mrf.mxu0
  %v677 = vadd.f32 %v597, %v676
  %678 = vmatmul.f32.gmra.mxu0 %v53
  %v679 = vpop.f32.mrf.mxu0
  %v680 = vadd.f32 %v600, %v679
  %681 = vmatmul.f32.gmra.mxu0 %v60
  %v682 = vpop.f32.mrf.mxu0
  %v683 = vadd.f32 %v603, %v682
  %684 = vmatmul.f32.gmra.mxu0 %v67
  %v685 = vpop.f32.mrf.mxu0
  %v686 = vadd.f32 %v606, %v685
  %687 = vmatmul.f32.gmra.mxu0 %v74
  %v688 = vpop.f32.mrf.mxu0
  %v689 = vadd.f32 %v609, %v688
  %690 = vmatmul.f32.gmra.mxu0 %v81
  %v691 = vpop.f32.mrf.mxu0
  %v692 = vadd.f32 %v612, %v691
  %693 = vmatmul.f32.gmra.mxu0 %v88
  %v694 = vpop.f32.mrf.mxu0
  %v695 = vadd.f32 %v615, %v694
  %696 = vmatmul.f32.gmra.mxu0 %v95
  %v697 = vpop.f32.mrf.mxu0
  %v698 = vadd.f32 %v618, %v697
  %699 = vmatmul.f32.gmra.mxu0 %v102
  %v700 = vpop.f32.mrf.mxu0
  %v701 = vadd.f32 %v621, %v700
  %702 = vmatmul.f32.gmra.mxu0 %v109
  %v703 = vpop.f32.mrf.mxu0
  %v704 = vadd.f32 %v624, %v703
  %705 = vmatmul.f32.gmra.mxu0 %v116
  %v706 = vpop.f32.mrf.mxu0
  %v707 = vadd.f32 %v627, %v706
  %708 = vmatmul.f32.gmra.mxu0 %v123
  %v709 = vpop.f32.mrf.mxu0
  %v710 = vadd.f32 %v630, %v709
  %711 = vmatmul.f32.gmra.mxu0 %v130
  %v712 = vpop.f32.mrf.mxu0
  %v713 = vadd.f32 %v633, %v712
  %714 = vmatmul.f32.gmra.mxu0 %v137
  %v715 = vpop.f32.mrf.mxu0
  %v716 = vadd.f32 %v636, %v715
  %717 = vmatmul.f32.gmra.mxu0 %v144
  %v718 = vpop.f32.mrf.mxu0
  %v719 = vadd.f32 %v639, %v718
  %720 = vmatmul.f32.gmra.mxu0 %v151
  %v721 = vpop.f32.mrf.mxu0
  %v722 = vadd.f32 %v642, %v721
  %723 = vmatmul.f32.gmra.mxu0 %v158
  %v724 = vpop.f32.mrf.mxu0
  %v725 = vadd.f32 %v645, %v724
  %726 = vdwg.mxu0
  %727 = vmatpush.msra.mxu0 %v256
  %728 = vmatpush.msra.mxu0 %v255
  %729 = vmatpush.msra.mxu0 %v254
  %730 = vmatpush.msra.mxu0 %v253
  %731 = vmatpush.msra.mxu0 %v252
  %732 = vmatpush.msra.mxu0 %v251
  %733 = vmatpush.msra.mxu0 %v250
  %734 = vmatpush.msra.mxu0 %v249
  %735 = vmatpush.msra.mxu0 %v248
  %736 = vmatpush.msra.mxu0 %v247
  %737 = vmatpush.msra.mxu0 %v246
  %738 = vmatpush.msra.mxu0 %v245
  %739 = vmatpush.msra.mxu0 %v244
  %740 = vmatpush.msra.mxu0 %v243
  %741 = vmatpush.msra.mxu0 %v242
  %742 = vmatpush.msra.mxu0 %v241
  %743 = vmatmul.f32.gmra.mxu0 %v19
  %v744 = vpop.f32.mrf.mxu0
  %v745 = vadd.f32 %v665, %v744
  %746 = vmatmul.f32.gmra.mxu0 %v26
  %v747 = vpop.f32.mrf.mxu0
  %v748 = vadd.f32 %v668, %v747
  %749 = vmatmul.f32.gmra.mxu0 %v33
  %v750 = vpop.f32.mrf.mxu0
  %v751 = vadd.f32 %v671, %v750
  %752 = vmatmul.f32.gmra.mxu0 %v40
  %v753 = vpop.f32.mrf.mxu0
  %v754 = vadd.f32 %v674, %v753
  %755 = vmatmul.f32.gmra.mxu0 %v47
  %v756 = vpop.f32.mrf.mxu0
  %v757 = vadd.f32 %v677, %v756
  %758 = vmatmul.f32.gmra.mxu0 %v54
  %v759 = vpop.f32.mrf.mxu0
  %v760 = vadd.f32 %v680, %v759
  %761 = vmatmul.f32.gmra.mxu0 %v61
  %v762 = vpop.f32.mrf.mxu0
  %v763 = vadd.f32 %v683, %v762
  %764 = vmatmul.f32.gmra.mxu0 %v68
  %v765 = vpop.f32.mrf.mxu0
  %v766 = vadd.f32 %v686, %v765
  %767 = vmatmul.f32.gmra.mxu0 %v75
  %v768 = vpop.f32.mrf.mxu0
  %v769 = vadd.f32 %v689, %v768
  %770 = vmatmul.f32.gmra.mxu0 %v82
  %v771 = vpop.f32.mrf.mxu0
  %v772 = vadd.f32 %v692, %v771
  %773 = vmatmul.f32.gmra.mxu0 %v89
  %v774 = vpop.f32.mrf.mxu0
  %v775 = vadd.f32 %v695, %v774
  %776 = vmatmul.f32.gmra.mxu0 %v96
  %v777 = vpop.f32.mrf.mxu0
  %v778 = vadd.f32 %v698, %v777
  %779 = vmatmul.f32.gmra.mxu0 %v103
  %v780 = vpop.f32.mrf.mxu0
  %v781 = vadd.f32 %v701, %v780
  %782 = vmatmul.f32.gmra.mxu0 %v110
  %v783 = vpop.f32.mrf.mxu0
  %v784 = vadd.f32 %v704, %v783
  %785 = vmatmul.f32.gmra.mxu0 %v117
  %v786 = vpop.f32.mrf.mxu0
  %v787 = vadd.f32 %v707, %v786
  %788 = vmatmul.f32.gmra.mxu0 %v124
  %v789 = vpop.f32.mrf.mxu0
  %v790 = vadd.f32 %v710, %v789
  %791 = vmatmul.f32.gmra.mxu0 %v131
  %v792 = vpop.f32.mrf.mxu0
  %v793 = vadd.f32 %v713, %v792
  %794 = vmatmul.f32.gmra.mxu0 %v138
  %v795 = vpop.f32.mrf.mxu0
  %v796 = vadd.f32 %v716, %v795
  %797 = vmatmul.f32.gmra.mxu0 %v145
  %v798 = vpop.f32.mrf.mxu0
  %v799 = vadd.f32 %v719, %v798
  %800 = vmatmul.f32.gmra.mxu0 %v152
  %v801 = vpop.f32.mrf.mxu0
  %v802 = vadd.f32 %v722, %v801
  %803 = vmatmul.f32.gmra.mxu0 %v159
  %v804 = vpop.f32.mrf.mxu0
  %v805 = vadd.f32 %v725, %v804
  %806 = vdwg.mxu0
  %807 = vmatpush.msra.mxu0 0.0
  %808 = vmatpush.msra.mxu0 0.0
  %809 = vmatpush.msra.mxu0 0.0
  %810 = vmatpush.msra.mxu0 0.0
  %811 = vmatpush.msra.mxu0 0.0
  %812 = vmatpush.msra.mxu0 0.0
  %813 = vmatpush.msra.mxu0 0.0
  %814 = vmatpush.msra.mxu0 0.0
  %815 = vmatpush.msra.mxu0 0.0
  %816 = vmatpush.msra.mxu0 0.0
  %817 = vmatpush.msra.mxu0 0.0
  %818 = vmatpush.msra.mxu0 0.0
  %819 = vmatpush.msra.mxu0 0.0
  %820 = vmatpush.msra.mxu0 0.0
  %821 = vmatpush.msra.mxu0 %v258
  %822 = vmatpush.msra.mxu0 %v257
  %823 = vmatmul.f32.gmra.mxu0 %v265
  %v824 = vpop.f32.mrf.mxu0
  %v825 = vadd.f32 %v745, %v824
  %826 = vmatmul.f32.gmra.mxu0 %v268
  %v827 = vpop.f32.mrf.mxu0
  %v828 = vadd.f32 %v748, %v827
  %829 = vmatmul.f32.gmra.mxu0 %v271
  %v830 = vpop.f32.mrf.mxu0
  %v831 = vadd.f32 %v751, %v830
  %832 = vmatmul.f32.gmra.mxu0 %v274
  %v833 = vpop.f32.mrf.mxu0
  %v834 = vadd.f32 %v754, %v833
  %835 = vmatmul.f32.gmra.mxu0 %v277
  %v836 = vpop.f32.mrf.mxu0
  %v837 = vadd.f32 %v757, %v836
  %838 = vmatmul.f32.gmra.mxu0 %v280
  %v839 = vpop.f32.mrf.mxu0
  %v840 = vadd.f32 %v760, %v839
  %841 = vmatmul.f32.gmra.mxu0 %v283
  %v842 = vpop.f32.mrf.mxu0
  %v843 = vadd.f32 %v763, %v842
  %844 = vmatmul.f32.gmra.mxu0 %v286
  %v845 = vpop.f32.mrf.mxu0
  %v846 = vadd.f32 %v766, %v845
  %847 = vmatmul.f32.gmra.mxu0 %v289
  %v848 = vpop.f32.mrf.mxu0
  %v849 = vadd.f32 %v769, %v848
  %850 = vmatmul.f32.gmra.mxu0 %v292
  %v851 = vpop.f32.mrf.mxu0
  %v852 = vadd.f32 %v772, %v851
  %853 = vmatmul.f32.gmra.mxu0 %v295
  %v854 = vpop.f32.mrf.mxu0
  %v855 = vadd.f32 %v775, %v854
  %856 = vmatmul.f32.gmra.mxu0 %v298
  %v857 = vpop.f32.mrf.mxu0
  %v858 = vadd.f32 %v778, %v857
  %859 = vmatmul.f32.gmra.mxu0 %v301
  %v860 = vpop.f32.mrf.mxu0
  %v861 = vadd.f32 %v781, %v860
  %862 = vmatmul.f32.gmra.mxu0 %v304
  %v863 = vpop.f32.mrf.mxu0
  %v864 = vadd.f32 %v784, %v863
  %865 = vmatmul.f32.gmra.mxu0 %v307
  %v866 = vpop.f32.mrf.mxu0
  %v867 = vadd.f32 %v787, %v866
  %868 = vmatmul.f32.gmra.mxu0 %v310
  %v869 = vpop.f32.mrf.mxu0
  %v870 = vadd.f32 %v790, %v869
  %871 = vmatmul.f32.gmra.mxu0 %v313
  %v872 = vpop.f32.mrf.mxu0
  %v873 = vadd.f32 %v793, %v872
  %874 = vmatmul.f32.gmra.mxu0 %v316
  %v875 = vpop.f32.mrf.mxu0
  %v876 = vadd.f32 %v796, %v875
  %877 = vmatmul.f32.gmra.mxu0 %v319
  %v878 = vpop.f32.mrf.mxu0
  %v879 = vadd.f32 %v799, %v878
  %880 = vmatmul.f32.gmra.mxu0 %v322
  %v881 = vpop.f32.mrf.mxu0
  %v882 = vadd.f32 %v802, %v881
  %883 = vmatmul.f32.gmra.mxu0 %v325
  %v884 = vpop.f32.mrf.mxu0
  %v885 = vadd.f32 %v805, %v884
  %886 = vdwg.mxu0
  %v887 = vmul.f32 %v825, 0.999995
  %v888 = vmul.f32 %v828, 0.999995
  %v889 = vmul.f32 %v831, 0.999995
  %v890 = vmul.f32 %v834, 0.999995
  %v891 = vmul.f32 %v837, 0.999995
  %v892 = vmul.f32 %v840, 0.999995
  %v893 = vmul.f32 %v843, 0.999995
  %v894 = vmul.f32 %v846, 0.999995
  %v895 = vmul.f32 %v849, 0.999995
  %v896 = vmul.f32 %v852, 0.999995
  %v897 = vmul.f32 %v855, 0.999995
  %v898 = vmul.f32 %v858, 0.999995
  %v899 = vmul.f32 %v861, 0.999995
  %v900 = vmul.f32 %v864, 0.999995
  %v901 = vmul.f32 %v867, 0.999995
  %v902 = vmul.f32 %v870, 0.999995
  %v903 = vmul.f32 %v873, 0.999995
  %v904 = vmul.f32 %v876, 0.999995
  %v905 = vmul.f32 %v879, 0.999995
  %v906 = vmul.f32 %v882, 0.999995
  %v907 = vmul.f32 %v885, 0.999995
  %v908 = vsub.f32 0.0, %v887
  %v909 = vsub.f32 0.0, %v888
  %v910 = vsub.f32 0.0, %v889
  %v911 = vsub.f32 0.0, %v890
  %v912 = vsub.f32 0.0, %v891
  %v913 = vsub.f32 0.0, %v892
  %v914 = vsub.f32 0.0, %v893
  %v915 = vsub.f32 0.0, %v894
  %v916 = vsub.f32 0.0, %v895
  %v917 = vsub.f32 0.0, %v896
  %v918 = vsub.f32 0.0, %v897
  %v919 = vsub.f32 0.0, %v898
  %v920 = vsub.f32 0.0, %v899
  %v921 = vsub.f32 0.0, %v900
  %v922 = vsub.f32 0.0, %v901
  %v923 = vsub.f32 0.0, %v902
  %v924 = vsub.f32 0.0, %v903
  %v925 = vsub.f32 0.0, %v904
  %v926 = vsub.f32 0.0, %v905
  %v927 = vsub.f32 0.0, %v906
  %v928 = vsub.f32 0.0, %v907
  %v929 = vmul.f32 %v908, 1.442695
  %v930 = vpow.pop %v929
  %v931 = vmul.f32 %v909, 1.442695
  %v932 = vpow.pop %v931
  %v933 = vmul.f32 %v910, 1.442695
  %v934 = vpow.pop %v933
  %v935 = vmul.f32 %v911, 1.442695
  %v936 = vpow.pop %v935
  %v937 = vmul.f32 %v912, 1.442695
  %v938 = vpow.pop %v937
  %v939 = vmul.f32 %v913, 1.442695
  %v940 = vpow.pop %v939
  %v941 = vmul.f32 %v914, 1.442695
  %v942 = vpow.pop %v941
  %v943 = vmul.f32 %v915, 1.442695
  %v944 = vpow.pop %v943
  %v945 = vmul.f32 %v916, 1.442695
  %v946 = vpow.pop %v945
  %v947 = vmul.f32 %v917, 1.442695
  %v948 = vpow.pop %v947
  %v949 = vmul.f32 %v918, 1.442695
  %v950 = vpow.pop %v949
  %v951 = vmul.f32 %v919, 1.442695
  %v952 = vpow.pop %v951
  %v953 = vmul.f32 %v920, 1.442695
  %v954 = vpow.pop %v953
  %v955 = vmul.f32 %v921, 1.442695
  %v956 = vpow.pop %v955
  %v957 = vmul.f32 %v922, 1.442695
  %v958 = vpow.pop %v957
  %v959 = vmul.f32 %v923, 1.442695
  %v960 = vpow.pop %v959
  %v961 = vmul.f32 %v924, 1.442695
  %v962 = vpow.pop %v961
  %v963 = vmul.f32 %v925, 1.442695
  %v964 = vpow.pop %v963
  %v965 = vmul.f32 %v926, 1.442695
  %v966 = vpow.pop %v965
  %v967 = vmul.f32 %v927, 1.442695
  %v968 = vpow.pop %v967
  %v969 = vmul.f32 %v928, 1.442695
  %v970 = vpow.pop %v969
  %v971 = vadd.f32 %v930, 1.0
  %v972 = vadd.f32 %v932, 1.0
  %v973 = vadd.f32 %v934, 1.0
  %v974 = vadd.f32 %v936, 1.0
  %v975 = vadd.f32 %v938, 1.0
  %v976 = vadd.f32 %v940, 1.0
  %v977 = vadd.f32 %v942, 1.0
  %v978 = vadd.f32 %v944, 1.0
  %v979 = vadd.f32 %v946, 1.0
  %v980 = vadd.f32 %v948, 1.0
  %v981 = vadd.f32 %v950, 1.0
  %v982 = vadd.f32 %v952, 1.0
  %v983 = vadd.f32 %v954, 1.0
  %v984 = vadd.f32 %v956, 1.0
  %v985 = vadd.f32 %v958, 1.0
  %v986 = vadd.f32 %v960, 1.0
  %v987 = vadd.f32 %v962, 1.0
  %v988 = vadd.f32 %v964, 1.0
  %v989 = vadd.f32 %v966, 1.0
  %v990 = vadd.f32 %v968, 1.0
  %v991 = vadd.f32 %v970, 1.0
  %v992 = vrcp.pop %v971
  %v993 = vmul.f32 %v971, %v992
  %v994 = vsub.f32 1.0, %v993
  %v995 = vmul.f32 %v992, %v994
  %v996 = vadd.f32 %v992, %v995
  %vm997 = vweird.f32 %v971
  %vm998 = vweird.f32 %v992
  %vm999 = vmor %vm997, %vm998
  %v1000 = vsel %vm999, %v992, %v996
  %v1001 = vand.u32 2147483647, %v971
  %vm1002 = vcmp.eq.f32.partialorder %v1001, 8.507059e+37
  %v1003 = vand.u32 %v971, 2147483648
  %v1004 = vor.u32 1.1754944e-38, %v1003
  %v1005 = vsel %vm1002, %v1004, %v1000
  %v1006 = vmul.f32 1.0, %v1005
  %v1007 = vrcp.pop %v972
  %v1008 = vmul.f32 %v972, %v1007
  %v1009 = vsub.f32 1.0, %v1008
  %v1010 = vmul.f32 %v1007, %v1009
  %v1011 = vadd.f32 %v1007, %v1010
  %vm1012 = vweird.f32 %v972
  %vm1013 = vweird.f32 %v1007
  %vm1014 = vmor %vm1012, %vm1013
  %v1015 = vsel %vm1014, %v1007, %v1011
  %v1016 = vand.u32 2147483647, %v972
  %vm1017 = vcmp.eq.f32.partialorder %v1016, 8.507059e+37
  %v1018 = vand.u32 %v972, 2147483648
  %v1019 = vor.u32 1.1754944e-38, %v1018
  %v1020 = vsel %vm1017, %v1019, %v1015
  %v1021 = vmul.f32 1.0, %v1020
  %v1022 = vrcp.pop %v973
  %v1023 = vmul.f32 %v973, %v1022
  %v1024 = vsub.f32 1.0, %v1023
  %v1025 = vmul.f32 %v1022, %v1024
  %v1026 = vadd.f32 %v1022, %v1025
  %vm1027 = vweird.f32 %v973
  %vm1028 = vweird.f32 %v1022
  %vm1029 = vmor %vm1027, %vm1028
  %v1030 = vsel %vm1029, %v1022, %v1026
  %v1031 = vand.u32 2147483647, %v973
  %vm1032 = vcmp.eq.f32.partialorder %v1031, 8.507059e+37
  %v1033 = vand.u32 %v973, 2147483648
  %v1034 = vor.u32 1.1754944e-38, %v1033
  %v1035 = vsel %vm1032, %v1034, %v1030
  %v1036 = vmul.f32 1.0, %v1035
  %v1037 = vrcp.pop %v974
  %v1038 = vmul.f32 %v974, %v1037
  %v1039 = vsub.f32 1.0, %v1038
  %v1040 = vmul.f32 %v1037, %v1039
  %v1041 = vadd.f32 %v1037, %v1040
  %vm1042 = vweird.f32 %v974
  %vm1043 = vweird.f32 %v1037
  %vm1044 = vmor %vm1042, %vm1043
  %v1045 = vsel %vm1044, %v1037, %v1041
  %v1046 = vand.u32 2147483647, %v974
  %vm1047 = vcmp.eq.f32.partialorder %v1046, 8.507059e+37
  %v1048 = vand.u32 %v974, 2147483648
  %v1049 = vor.u32 1.1754944e-38, %v1048
  %v1050 = vsel %vm1047, %v1049, %v1045
  %v1051 = vmul.f32 1.0, %v1050
  %v1052 = vrcp.pop %v975
  %v1053 = vmul.f32 %v975, %v1052
  %v1054 = vsub.f32 1.0, %v1053
  %v1055 = vmul.f32 %v1052, %v1054
  %v1056 = vadd.f32 %v1052, %v1055
  %vm1057 = vweird.f32 %v975
  %vm1058 = vweird.f32 %v1052
  %vm1059 = vmor %vm1057, %vm1058
  %v1060 = vsel %vm1059, %v1052, %v1056
  %v1061 = vand.u32 2147483647, %v975
  %vm1062 = vcmp.eq.f32.partialorder %v1061, 8.507059e+37
  %v1063 = vand.u32 %v975, 2147483648
  %v1064 = vor.u32 1.1754944e-38, %v1063
  %v1065 = vsel %vm1062, %v1064, %v1060
  %v1066 = vmul.f32 1.0, %v1065
  %v1067 = vrcp.pop %v976
  %v1068 = vmul.f32 %v976, %v1067
  %v1069 = vsub.f32 1.0, %v1068
  %v1070 = vmul.f32 %v1067, %v1069
  %v1071 = vadd.f32 %v1067, %v1070
  %vm1072 = vweird.f32 %v976
  %vm1073 = vweird.f32 %v1067
  %vm1074 = vmor %vm1072, %vm1073
  %v1075 = vsel %vm1074, %v1067, %v1071
  %v1076 = vand.u32 2147483647, %v976
  %vm1077 = vcmp.eq.f32.partialorder %v1076, 8.507059e+37
  %v1078 = vand.u32 %v976, 2147483648
  %v1079 = vor.u32 1.1754944e-38, %v1078
  %v1080 = vsel %vm1077, %v1079, %v1075
  %v1081 = vmul.f32 1.0, %v1080
  %v1082 = vrcp.pop %v977
  %v1083 = vmul.f32 %v977, %v1082
  %v1084 = vsub.f32 1.0, %v1083
  %v1085 = vmul.f32 %v1082, %v1084
  %v1086 = vadd.f32 %v1082, %v1085
  %vm1087 = vweird.f32 %v977
  %vm1088 = vweird.f32 %v1082
  %vm1089 = vmor %vm1087, %vm1088
  %v1090 = vsel %vm1089, %v1082, %v1086
  %v1091 = vand.u32 2147483647, %v977
  %vm1092 = vcmp.eq.f32.partialorder %v1091, 8.507059e+37
  %v1093 = vand.u32 %v977, 2147483648
  %v1094 = vor.u32 1.1754944e-38, %v1093
  %v1095 = vsel %vm1092, %v1094, %v1090
  %v1096 = vmul.f32 1.0, %v1095
  %v1097 = vrcp.pop %v978
  %v1098 = vmul.f32 %v978, %v1097
  %v1099 = vsub.f32 1.0, %v1098
  %v1100 = vmul.f32 %v1097, %v1099
  %v1101 = vadd.f32 %v1097, %v1100
  %vm1102 = vweird.f32 %v978
  %vm1103 = vweird.f32 %v1097
  %vm1104 = vmor %vm1102, %vm1103
  %v1105 = vsel %vm1104, %v1097, %v1101
  %v1106 = vand.u32 2147483647, %v978
  %vm1107 = vcmp.eq.f32.partialorder %v1106, 8.507059e+37
  %v1108 = vand.u32 %v978, 2147483648
  %v1109 = vor.u32 1.1754944e-38, %v1108
  %v1110 = vsel %vm1107, %v1109, %v1105
  %v1111 = vmul.f32 1.0, %v1110
  %v1112 = vrcp.pop %v979
  %v1113 = vmul.f32 %v979, %v1112
  %v1114 = vsub.f32 1.0, %v1113
  %v1115 = vmul.f32 %v1112, %v1114
  %v1116 = vadd.f32 %v1112, %v1115
  %vm1117 = vweird.f32 %v979
  %vm1118 = vweird.f32 %v1112
  %vm1119 = vmor %vm1117, %vm1118
  %v1120 = vsel %vm1119, %v1112, %v1116
  %v1121 = vand.u32 2147483647, %v979
  %vm1122 = vcmp.eq.f32.partialorder %v1121, 8.507059e+37
  %v1123 = vand.u32 %v979, 2147483648
  %v1124 = vor.u32 1.1754944e-38, %v1123
  %v1125 = vsel %vm1122, %v1124, %v1120
  %v1126 = vmul.f32 1.0, %v1125
  %v1127 = vrcp.pop %v980
  %v1128 = vmul.f32 %v980, %v1127
  %v1129 = vsub.f32 1.0, %v1128
  %v1130 = vmul.f32 %v1127, %v1129
  %v1131 = vadd.f32 %v1127, %v1130
  %vm1132 = vweird.f32 %v980
  %vm1133 = vweird.f32 %v1127
  %vm1134 = vmor %vm1132, %vm1133
  %v1135 = vsel %vm1134, %v1127, %v1131
  %v1136 = vand.u32 2147483647, %v980
  %vm1137 = vcmp.eq.f32.partialorder %v1136, 8.507059e+37
  %v1138 = vand.u32 %v980, 2147483648
  %v1139 = vor.u32 1.1754944e-38, %v1138
  %v1140 = vsel %vm1137, %v1139, %v1135
  %v1141 = vmul.f32 1.0, %v1140
  %v1142 = vrcp.pop %v981
  %v1143 = vmul.f32 %v981, %v1142
  %v1144 = vsub.f32 1.0, %v1143
  %v1145 = vmul.f32 %v1142, %v1144
  %v1146 = vadd.f32 %v1142, %v1145
  %vm1147 = vweird.f32 %v981
  %vm1148 = vweird.f32 %v1142
  %vm1149 = vmor %vm1147, %vm1148
  %v1150 = vsel %vm1149, %v1142, %v1146
  %v1151 = vand.u32 2147483647, %v981
  %vm1152 = vcmp.eq.f32.partialorder %v1151, 8.507059e+37
  %v1153 = vand.u32 %v981, 2147483648
  %v1154 = vor.u32 1.1754944e-38, %v1153
  %v1155 = vsel %vm1152, %v1154, %v1150
  %v1156 = vmul.f32 1.0, %v1155
  %v1157 = vrcp.pop %v982
  %v1158 = vmul.f32 %v982, %v1157
  %v1159 = vsub.f32 1.0, %v1158
  %v1160 = vmul.f32 %v1157, %v1159
  %v1161 = vadd.f32 %v1157, %v1160
  %vm1162 = vweird.f32 %v982
  %vm1163 = vweird.f32 %v1157
  %vm1164 = vmor %vm1162, %vm1163
  %v1165 = vsel %vm1164, %v1157, %v1161
  %v1166 = vand.u32 2147483647, %v982
  %vm1167 = vcmp.eq.f32.partialorder %v1166, 8.507059e+37
  %v1168 = vand.u32 %v982, 2147483648
  %v1169 = vor.u32 1.1754944e-38, %v1168
  %v1170 = vsel %vm1167, %v1169, %v1165
  %v1171 = vmul.f32 1.0, %v1170
  %v1172 = vrcp.pop %v983
  %v1173 = vmul.f32 %v983, %v1172
  %v1174 = vsub.f32 1.0, %v1173
  %v1175 = vmul.f32 %v1172, %v1174
  %v1176 = vadd.f32 %v1172, %v1175
  %vm1177 = vweird.f32 %v983
  %vm1178 = vweird.f32 %v1172
  %vm1179 = vmor %vm1177, %vm1178
  %v1180 = vsel %vm1179, %v1172, %v1176
  %v1181 = vand.u32 2147483647, %v983
  %vm1182 = vcmp.eq.f32.partialorder %v1181, 8.507059e+37
  %v1183 = vand.u32 %v983, 2147483648
  %v1184 = vor.u32 1.1754944e-38, %v1183
  %v1185 = vsel %vm1182, %v1184, %v1180
  %v1186 = vmul.f32 1.0, %v1185
  %v1187 = vrcp.pop %v984
  %v1188 = vmul.f32 %v984, %v1187
  %v1189 = vsub.f32 1.0, %v1188
  %v1190 = vmul.f32 %v1187, %v1189
  %v1191 = vadd.f32 %v1187, %v1190
  %vm1192 = vweird.f32 %v984
  %vm1193 = vweird.f32 %v1187
  %vm1194 = vmor %vm1192, %vm1193
  %v1195 = vsel %vm1194, %v1187, %v1191
  %v1196 = vand.u32 2147483647, %v984
  %vm1197 = vcmp.eq.f32.partialorder %v1196, 8.507059e+37
  %v1198 = vand.u32 %v984, 2147483648
  %v1199 = vor.u32 1.1754944e-38, %v1198
  %v1200 = vsel %vm1197, %v1199, %v1195
  %v1201 = vmul.f32 1.0, %v1200
  %v1202 = vrcp.pop %v985
  %v1203 = vmul.f32 %v985, %v1202
  %v1204 = vsub.f32 1.0, %v1203
  %v1205 = vmul.f32 %v1202, %v1204
  %v1206 = vadd.f32 %v1202, %v1205
  %vm1207 = vweird.f32 %v985
  %vm1208 = vweird.f32 %v1202
  %vm1209 = vmor %vm1207, %vm1208
  %v1210 = vsel %vm1209, %v1202, %v1206
  %v1211 = vand.u32 2147483647, %v985
  %vm1212 = vcmp.eq.f32.partialorder %v1211, 8.507059e+37
  %v1213 = vand.u32 %v985, 2147483648
  %v1214 = vor.u32 1.1754944e-38, %v1213
  %v1215 = vsel %vm1212, %v1214, %v1210
  %v1216 = vmul.f32 1.0, %v1215
  %v1217 = vrcp.pop %v986
  %v1218 = vmul.f32 %v986, %v1217
  %v1219 = vsub.f32 1.0, %v1218
  %v1220 = vmul.f32 %v1217, %v1219
  %v1221 = vadd.f32 %v1217, %v1220
  %vm1222 = vweird.f32 %v986
  %vm1223 = vweird.f32 %v1217
  %vm1224 = vmor %vm1222, %vm1223
  %v1225 = vsel %vm1224, %v1217, %v1221
  %v1226 = vand.u32 2147483647, %v986
  %vm1227 = vcmp.eq.f32.partialorder %v1226, 8.507059e+37
  %v1228 = vand.u32 %v986, 2147483648
  %v1229 = vor.u32 1.1754944e-38, %v1228
  %v1230 = vsel %vm1227, %v1229, %v1225
  %v1231 = vmul.f32 1.0, %v1230
  %v1232 = vrcp.pop %v987
  %v1233 = vmul.f32 %v987, %v1232
  %v1234 = vsub.f32 1.0, %v1233
  %v1235 = vmul.f32 %v1232, %v1234
  %v1236 = vadd.f32 %v1232, %v1235
  %vm1237 = vweird.f32 %v987
  %vm1238 = vweird.f32 %v1232
  %vm1239 = vmor %vm1237, %vm1238
  %v1240 = vsel %vm1239, %v1232, %v1236
  %v1241 = vand.u32 2147483647, %v987
  %vm1242 = vcmp.eq.f32.partialorder %v1241, 8.507059e+37
  %v1243 = vand.u32 %v987, 2147483648
  %v1244 = vor.u32 1.1754944e-38, %v1243
  %v1245 = vsel %vm1242, %v1244, %v1240
  %v1246 = vmul.f32 1.0, %v1245
  %v1247 = vrcp.pop %v988
  %v1248 = vmul.f32 %v988, %v1247
  %v1249 = vsub.f32 1.0, %v1248
  %v1250 = vmul.f32 %v1247, %v1249
  %v1251 = vadd.f32 %v1247, %v1250
  %vm1252 = vweird.f32 %v988
  %vm1253 = vweird.f32 %v1247
  %vm1254 = vmor %vm1252, %vm1253
  %v1255 = vsel %vm1254, %v1247, %v1251
  %v1256 = vand.u32 2147483647, %v988
  %vm1257 = vcmp.eq.f32.partialorder %v1256, 8.507059e+37
  %v1258 = vand.u32 %v988, 2147483648
  %v1259 = vor.u32 1.1754944e-38, %v1258
  %v1260 = vsel %vm1257, %v1259, %v1255
  %v1261 = vmul.f32 1.0, %v1260
  %v1262 = vrcp.pop %v989
  %v1263 = vmul.f32 %v989, %v1262
  %v1264 = vsub.f32 1.0, %v1263
  %v1265 = vmul.f32 %v1262, %v1264
  %v1266 = vadd.f32 %v1262, %v1265
  %vm1267 = vweird.f32 %v989
  %vm1268 = vweird.f32 %v1262
  %vm1269 = vmor %vm1267, %vm1268
  %v1270 = vsel %vm1269, %v1262, %v1266
  %v1271 = vand.u32 2147483647, %v989
  %vm1272 = vcmp.eq.f32.partialorder %v1271, 8.507059e+37
  %v1273 = vand.u32 %v989, 2147483648
  %v1274 = vor.u32 1.1754944e-38, %v1273
  %v1275 = vsel %vm1272, %v1274, %v1270
  %v1276 = vmul.f32 1.0, %v1275
  %v1277 = vrcp.pop %v990
  %v1278 = vmul.f32 %v990, %v1277
  %v1279 = vsub.f32 1.0, %v1278
  %v1280 = vmul.f32 %v1277, %v1279
  %v1281 = vadd.f32 %v1277, %v1280
  %vm1282 = vweird.f32 %v990
  %vm1283 = vweird.f32 %v1277
  %vm1284 = vmor %vm1282, %vm1283
  %v1285 = vsel %vm1284, %v1277, %v1281
  %v1286 = vand.u32 2147483647, %v990
  %vm1287 = vcmp.eq.f32.partialorder %v1286, 8.507059e+37
  %v1288 = vand.u32 %v990, 2147483648
  %v1289 = vor.u32 1.1754944e-38, %v1288
  %v1290 = vsel %vm1287, %v1289, %v1285
  %v1291 = vmul.f32 1.0, %v1290
  %v1292 = vrcp.pop %v991
  %v1293 = vmul.f32 %v991, %v1292
  %v1294 = vsub.f32 1.0, %v1293
  %v1295 = vmul.f32 %v1292, %v1294
  %v1296 = vadd.f32 %v1292, %v1295
  %vm1297 = vweird.f32 %v991
  %vm1298 = vweird.f32 %v1292
  %vm1299 = vmor %vm1297, %vm1298
  %v1300 = vsel %vm1299, %v1292, %v1296
  %v1301 = vand.u32 2147483647, %v991
  %vm1302 = vcmp.eq.f32.partialorder %v1301, 8.507059e+37
  %v1303 = vand.u32 %v991, 2147483648
  %v1304 = vor.u32 1.1754944e-38, %v1303
  %v1305 = vsel %vm1302, %v1304, %v1300
  %v1306 = vmul.f32 1.0, %v1305
  %1328 = vrot.lane.b32.xlu0 %v1006, 112
  %v1329 = vpop.permute.xlu0 %1328
  %1330 = vrot.lane.b32.xlu0 %v1021, 112
  %v1331 = vpop.permute.xlu0 %1330
  %1332 = vrot.lane.b32.xlu0 %v1036, 112
  %v1333 = vpop.permute.xlu0 %1332
  %1334 = vrot.lane.b32.xlu0 %v1051, 112
  %v1335 = vpop.permute.xlu0 %1334
  %1336 = vrot.lane.b32.xlu0 %v1066, 112
  %v1337 = vpop.permute.xlu0 %1336
  %1338 = vrot.lane.b32.xlu0 %v1081, 112
  %v1339 = vpop.permute.xlu0 %1338
  %1340 = vrot.lane.b32.xlu0 %v1096, 112
  %v1341 = vpop.permute.xlu0 %1340
  %1342 = vrot.lane.b32.xlu0 %v1111, 112
  %v1343 = vpop.permute.xlu0 %1342
  %1344 = vrot.lane.b32.xlu0 %v1126, 112
  %v1345 = vpop.permute.xlu0 %1344
  %1346 = vrot.lane.b32.xlu0 %v1141, 112
  %v1347 = vpop.permute.xlu0 %1346
  %1348 = vrot.lane.b32.xlu0 %v1156, 112
  %v1349 = vpop.permute.xlu0 %1348
  %1350 = vrot.lane.b32.xlu0 %v1171, 112
  %v1351 = vpop.permute.xlu0 %1350
  %1352 = vrot.lane.b32.xlu0 %v1186, 112
  %v1353 = vpop.permute.xlu0 %1352
  %1354 = vrot.lane.b32.xlu0 %v1201, 112
  %v1355 = vpop.permute.xlu0 %1354
  %1356 = vrot.lane.b32.xlu0 %v1216, 112
  %v1357 = vpop.permute.xlu0 %1356
  %1358 = vrot.lane.b32.xlu0 %v1231, 112
  %v1359 = vpop.permute.xlu0 %1358
  %1360 = vrot.lane.b32.xlu0 %v1246, 112
  %v1361 = vpop.permute.xlu0 %1360
  %1362 = vrot.lane.b32.xlu0 %v1261, 112
  %v1363 = vpop.permute.xlu0 %1362
  %1364 = vrot.lane.b32.xlu0 %v1276, 112
  %v1365 = vpop.permute.xlu0 %1364
  %1366 = vrot.lane.b32.xlu0 %v1291, 112
  %v1367 = vpop.permute.xlu0 %1366
  %1368 = vrot.lane.b32.xlu0 %v1306, 112
  %v1369 = vpop.permute.xlu0 %1368
  %v1391 = vmul.f32 %v887, %v1329
  %v1392 = vmul.f32 %v888, %v1331
  %v1393 = vmul.f32 %v889, %v1333
  %v1394 = vmul.f32 %v890, %v1335
  %v1395 = vmul.f32 %v891, %v1337
  %v1396 = vmul.f32 %v892, %v1339
  %v1397 = vmul.f32 %v893, %v1341
  %v1398 = vmul.f32 %v894, %v1343
  %v1399 = vmul.f32 %v895, %v1345
  %v1400 = vmul.f32 %v896, %v1347
  %v1401 = vmul.f32 %v897, %v1349
  %v1402 = vmul.f32 %v898, %v1351
  %v1403 = vmul.f32 %v899, %v1353
  %v1404 = vmul.f32 %v900, %v1355
  %v1405 = vmul.f32 %v901, %v1357
  %v1406 = vmul.f32 %v902, %v1359
  %v1407 = vmul.f32 %v903, %v1361
  %v1408 = vmul.f32 %v904, %v1363
  %v1409 = vmul.f32 %v905, %v1365
  %v1410 = vmul.f32 %v906, %v1367
  %v1411 = vmul.f32 %v907, %v1369
  %1412 = vst.msk [vmem:[%s3] sm:$0xff] %vm263, %v1391
  %1413 = vst.msk [vmem:[%s3 + $0x8] sm:$0xff] %vm263, %v1392
  %1414 = vst.msk [vmem:[%s3 + $0x10] sm:$0xff] %vm263, %v1393
  %1415 = vst.msk [vmem:[%s3 + $0x18] sm:$0xff] %vm263, %v1394
  %1416 = vst.msk [vmem:[%s3 + $0x20] sm:$0xff] %vm263, %v1395
  %1417 = vst.msk [vmem:[%s3 + $0x28] sm:$0xff] %vm263, %v1396
  %1418 = vst.msk [vmem:[%s3 + $0x30] sm:$0xff] %vm263, %v1397
  %1419 = vst.msk [vmem:[%s3 + $0x38] sm:$0xff] %vm263, %v1398
  %1420 = vst.msk [vmem:[%s3 + $0x40] sm:$0xff] %vm263, %v1399
  %1421 = vst.msk [vmem:[%s3 + $0x48] sm:$0xff] %vm263, %v1400
  %1422 = vst.msk [vmem:[%s3 + $0x50] sm:$0xff] %vm263, %v1401
  %1423 = vst.msk [vmem:[%s3 + $0x58] sm:$0xff] %vm263, %v1402
  %1424 = vst.msk [vmem:[%s3 + $0x60] sm:$0xff] %vm263, %v1403
  %1425 = vst.msk [vmem:[%s3 + $0x68] sm:$0xff] %vm263, %v1404
  %1426 = vst.msk [vmem:[%s3 + $0x70] sm:$0xff] %vm263, %v1405
  %1427 = vst.msk [vmem:[%s3 + $0x78] sm:$0xff] %vm263, %v1406
  %1428 = vst.msk [vmem:[%s3 + $0x80] sm:$0xff] %vm263, %v1407
  %1429 = vst.msk [vmem:[%s3 + $0x88] sm:$0xff] %vm263, %v1408
  %1430 = vst.msk [vmem:[%s3 + $0x90] sm:$0xff] %vm263, %v1409
  %1431 = vst.msk [vmem:[%s3 + $0x98] sm:$0xff] %vm263, %v1410
  %vm1432 = vcmask 123904
  %1433 = vst.msk [vmem:[%s3 + $0xa0] sm:$0x3] %vm1432, %v1411
  // Predicated region
  $region14: #{degli_forward.13} parent=0 // pred_check
    _
  $region15: #{degli_forward.13} parent=0 // pred_check_branch
    %1435 = sbr.rel (0) target = $region17
  $region16: #{degli_forward.13} parent=0 // pred_region
    _
  $region17: #{degli_forward.13} parent=0 // pred_fallthru
    _
  // Predicated region
  $region18: #{degli_forward.13} parent=0 // pred_check
    _
  $region19: #{degli_forward.13} parent=0 // pred_check_branch
    %1437 = sbr.rel (0) target = $region21
  $region20: #{degli_forward.13} parent=0 // pred_region
    _
  $region21: #{degli_forward.13} parent=0 // pred_fallthru
    _

// kernel: degli_forward.14
$region0: #{degli_forward.14}
  #allocation0 [shape = 'u32[]', space=smem, size = 0x4, offset = 0x4, fixed_abs, tag = 'smem constant byte address 0x4 - core index']
  #allocation1 [shape = 'u32[72,128]{1,0:T(1,128)}', space=vmem, size = 0x9000, scoped, tag = 'internal scratch']
  %s0 = inlined_call_operand.vmem [shape: f32[162,784], index: 0, kind: input, shape index: {}]
  %s1 = inlined_call_operand.vmem [shape: f32[784,32], index: 1, kind: input, shape index: {}]
  %s2 = inlined_call_operand.vmem [shape: f32[1,32], index: 2, kind: input, shape index: {}]
  %s3 = inlined_call_operand.vmem [shape: f32[162,16], index: 3, kind: output, shape index: {}]
  %s4 = sld [smem:[#allocation0]]
  $region22: #{degli_forward.14} parent=0
    _
  %s6 = ssub.s32 1, %s4
  %s7 = scalar_select 0, %s6, %s4
  // Predicated region
  $region2: #{degli_forward.14} parent=0 // pred_check
    _
  $region3: #{degli_forward.14} parent=0 // pred_check_branch
    %9 = sbr.rel (0) target = $region5
  $region4: #{degli_forward.14} parent=0 // pred_region
    _
  $region5: #{degli_forward.14} parent=0 // pred_fallthru
    _
  // Predicated region
  $region6: #{degli_forward.14} parent=0 // pred_check
    _
  $region7: #{degli_forward.14} parent=0 // pred_check_branch
    %11 = sbr.rel (0) target = $region9
  $region8: #{degli_forward.14} parent=0 // pred_region
    _
  $region9: #{degli_forward.14} parent=0 // pred_fallthru
    _
  // Predicated region
  $region10: #{degli_forward.14} parent=0 // pred_check
    _
  $region11: #{degli_forward.14} parent=0 // pred_check_branch
    %13 = sbr.rel (0) target = $region13
  $region12: #{degli_forward.14} parent=0 // pred_region
    _
  $region13: #{degli_forward.14} parent=0 // pred_fallthru
    _
  %v14 = vld [vmem:[%s0] sm:$0xff]
  %v15 = vld [vmem:[%s0 + $0x8] sm:$0xff]
  %v16 = vld [vmem:[%s0 + $0x10] sm:$0xff]
  %v17 = vld [vmem:[%s0 + $0x18] sm:$0xff]
  %v18 = vld [vmem:[%s0 + $0x20] sm:$0xff]
  %v19 = vld [vmem:[%s0 + $0x28] sm:$0xff]
  %v20 = vld [vmem:[%s0 + $0x30] sm:$0xff]
  %v21 = vld [vmem:[%s0 + $0x38] sm:$0xff]
  %v22 = vld [vmem:[%s0 + $0x40] sm:$0xff]
  %v23 = vld [vmem:[%s0 + $0x48] sm:$0xff]
  %v24 = vld [vmem:[%s0 + $0x50] sm:$0xff]
  %v25 = vld [vmem:[%s0 + $0x58] sm:$0xff]
  %v26 = vld [vmem:[%s0 + $0x60] sm:$0xff]
  %v27 = vld [vmem:[%s0 + $0x68] sm:$0xff]
  %v28 = vld [vmem:[%s0 + $0x70] sm:$0xff]
  %v29 = vld [vmem:[%s0 + $0x78] sm:$0xff]
  %v30 = vld [vmem:[%s0 + $0x80] sm:$0xff]
  %v31 = vld [vmem:[%s0 + $0x88] sm:$0xff]
  %v32 = vld [vmem:[%s0 + $0x90] sm:$0xff]
  %v33 = vld [vmem:[%s0 + $0x98] sm:$0xff]
  %v34 = vld [vmem:[%s0 + $0xa0] sm:$0xff]
  %v35 = vld [vmem:[%s0 + $0xa8] sm:$0xff]
  %v36 = vld [vmem:[%s0 + $0xb0] sm:$0xff]
  %v37 = vld [vmem:[%s0 + $0xb8] sm:$0xff]
  %v38 = vld [vmem:[%s0 + $0xc0] sm:$0xff]
  %v39 = vld [vmem:[%s0 + $0xc8] sm:$0xff]
  %v40 = vld [vmem:[%s0 + $0xd0] sm:$0xff]
  %v41 = vld [vmem:[%s0 + $0xd8] sm:$0xff]
  %v42 = vld [vmem:[%s0 + $0xe0] sm:$0xff]
  %v43 = vld [vmem:[%s0 + $0xe8] sm:$0xff]
  %v44 = vld [vmem:[%s0 + $0xf0] sm:$0xff]
  %v45 = vld [vmem:[%s0 + $0xf8] sm:$0xff]
  %v46 = vld [vmem:[%s0 + $0x100] sm:$0xff]
  %v47 = vld [vmem:[%s0 + $0x108] sm:$0xff]
  %v48 = vld [vmem:[%s0 + $0x110] sm:$0xff]
  %v49 = vld [vmem:[%s0 + $0x118] sm:$0xff]
  %v50 = vld [vmem:[%s0 + $0x120] sm:$0xff]
  %v51 = vld [vmem:[%s0 + $0x128] sm:$0xff]
  %v52 = vld [vmem:[%s0 + $0x130] sm:$0xff]
  %v53 = vld [vmem:[%s0 + $0x138] sm:$0xff]
  %v54 = vld [vmem:[%s0 + $0x140] sm:$0xff]
  %v55 = vld [vmem:[%s0 + $0x148] sm:$0xff]
  %v56 = vld [vmem:[%s0 + $0x150] sm:$0xff]
  %v57 = vld [vmem:[%s0 + $0x158] sm:$0xff]
  %v58 = vld [vmem:[%s0 + $0x160] sm:$0xff]
  %v59 = vld [vmem:[%s0 + $0x168] sm:$0xff]
  %v60 = vld [vmem:[%s0 + $0x170] sm:$0xff]
  %v61 = vld [vmem:[%s0 + $0x178] sm:$0xff]
  %v62 = vld [vmem:[%s0 + $0x180] sm:$0xff]
  %v63 = vld [vmem:[%s0 + $0x188] sm:$0xff]
  %v64 = vld [vmem:[%s0 + $0x190] sm:$0xff]
  %v65 = vld [vmem:[%s0 + $0x198] sm:$0xff]
  %v66 = vld [vmem:[%s0 + $0x1a0] sm:$0xff]
  %v67 = vld [vmem:[%s0 + $0x1a8] sm:$0xff]
  %v68 = vld [vmem:[%s0 + $0x1b0] sm:$0xff]
  %v69 = vld [vmem:[%s0 + $0x1b8] sm:$0xff]
  %v70 = vld [vmem:[%s0 + $0x1c0] sm:$0xff]
  %v71 = vld [vmem:[%s0 + $0x1c8] sm:$0xff]
  %v72 = vld [vmem:[%s0 + $0x1d0] sm:$0xff]
  %v73 = vld [vmem:[%s0 + $0x1d8] sm:$0xff]
  %v74 = vld [vmem:[%s0 + $0x1e0] sm:$0xff]
  %v75 = vld [vmem:[%s0 + $0x1e8] sm:$0xff]
  %v76 = vld [vmem:[%s0 + $0x1f0] sm:$0xff]
  %v77 = vld [vmem:[%s0 + $0x1f8] sm:$0xff]
  %v78 = vld [vmem:[%s0 + $0x200] sm:$0xff]
  %v79 = vld [vmem:[%s0 + $0x208] sm:$0xff]
  %v80 = vld [vmem:[%s0 + $0x210] sm:$0xff]
  %v81 = vld [vmem:[%s0 + $0x218] sm:$0xff]
  %v82 = vld [vmem:[%s0 + $0x220] sm:$0xff]
  %v83 = vld [vmem:[%s0 + $0x228] sm:$0xff]
  %v84 = vld [vmem:[%s0 + $0x230] sm:$0xff]
  %v85 = vld [vmem:[%s0 + $0x238] sm:$0xff]
  %v86 = vld [vmem:[%s0 + $0x240] sm:$0xff]
  %v87 = vld [vmem:[%s0 + $0x248] sm:$0xff]
  %v88 = vld [vmem:[%s0 + $0x250] sm:$0xff]
  %v89 = vld [vmem:[%s0 + $0x258] sm:$0xff]
  %v90 = vld [vmem:[%s0 + $0x260] sm:$0xff]
  %v91 = vld [vmem:[%s0 + $0x268] sm:$0xff]
  %v92 = vld [vmem:[%s0 + $0x270] sm:$0xff]
  %v93 = vld [vmem:[%s0 + $0x278] sm:$0xff]
  %v94 = vld [vmem:[%s0 + $0x280] sm:$0xff]
  %v95 = vld [vmem:[%s0 + $0x288] sm:$0xff]
  %v96 = vld [vmem:[%s0 + $0x290] sm:$0xff]
  %v97 = vld [vmem:[%s0 + $0x298] sm:$0xff]
  %v98 = vld [vmem:[%s0 + $0x2a0] sm:$0xff]
  %v99 = vld [vmem:[%s0 + $0x2a8] sm:$0xff]
  %v100 = vld [vmem:[%s0 + $0x2b0] sm:$0xff]
  %v101 = vld [vmem:[%s0 + $0x2b8] sm:$0xff]
  %v102 = vld [vmem:[%s0 + $0x2c0] sm:$0xff]
  %v103 = vld [vmem:[%s0 + $0x2c8] sm:$0xff]
  %v104 = vld [vmem:[%s0 + $0x2d0] sm:$0xff]
  %v105 = vld [vmem:[%s0 + $0x2d8] sm:$0xff]
  %v106 = vld [vmem:[%s0 + $0x2e0] sm:$0xff]
  %v107 = vld [vmem:[%s0 + $0x2e8] sm:$0xff]
  %v108 = vld [vmem:[%s0 + $0x2f0] sm:$0xff]
  %v109 = vld [vmem:[%s0 + $0x2f8] sm:$0xff]
  %v110 = vld [vmem:[%s0 + $0x300] sm:$0xff]
  %v111 = vld [vmem:[%s0 + $0x308] sm:$0xff]
  %v112 = vld [vmem:[%s0 + $0x310] sm:$0xff]
  %v113 = vld [vmem:[%s0 + $0x318] sm:$0xff]
  %v114 = vld [vmem:[%s0 + $0x320] sm:$0xff]
  %v115 = vld [vmem:[%s0 + $0x328] sm:$0xff]
  %v116 = vld [vmem:[%s0 + $0x330] sm:$0xff]
  %v117 = vld [vmem:[%s0 + $0x338] sm:$0xff]
  %v118 = vld [vmem:[%s0 + $0x340] sm:$0xff]
  %v119 = vld [vmem:[%s0 + $0x348] sm:$0xff]
  %v120 = vld [vmem:[%s0 + $0x350] sm:$0xff]
  %v121 = vld [vmem:[%s0 + $0x358] sm:$0xff]
  %v122 = vld [vmem:[%s0 + $0x360] sm:$0xff]
  %v123 = vld [vmem:[%s0 + $0x368] sm:$0xff]
  %v124 = vld [vmem:[%s0 + $0x370] sm:$0xff]
  %v125 = vld [vmem:[%s0 + $0x378] sm:$0xff]
  %v126 = vld [vmem:[%s0 + $0x380] sm:$0xff]
  %v127 = vld [vmem:[%s0 + $0x388] sm:$0xff]
  %v128 = vld [vmem:[%s0 + $0x390] sm:$0xff]
  %v129 = vld [vmem:[%s0 + $0x398] sm:$0xff]
  %v130 = vld [vmem:[%s0 + $0x3a0] sm:$0xff]
  %v131 = vld [vmem:[%s0 + $0x3a8] sm:$0xff]
  %v132 = vld [vmem:[%s0 + $0x3b0] sm:$0xff]
  %v133 = vld [vmem:[%s0 + $0x3b8] sm:$0xff]
  %v134 = vld [vmem:[%s0 + $0x3c0] sm:$0xff]
  %v135 = vld [vmem:[%s0 + $0x3c8] sm:$0xff]
  %v136 = vld [vmem:[%s0 + $0x3d0] sm:$0xff]
  %v137 = vld [vmem:[%s0 + $0x3d8] sm:$0xff]
  %v138 = vld [vmem:[%s0 + $0x3e0] sm:$0xff]
  %v139 = vld [vmem:[%s0 + $0x3e8] sm:$0xff]
  %v140 = vld [vmem:[%s0 + $0x3f0] sm:$0xff]
  %v141 = vld [vmem:[%s0 + $0x3f8] sm:$0xff]
  %v142 = vld [vmem:[%s0 + $0x400] sm:$0xff]
  %v143 = vld [vmem:[%s0 + $0x408] sm:$0xff]
  %v144 = vld [vmem:[%s0 + $0x410] sm:$0xff]
  %v145 = vld [vmem:[%s0 + $0x418] sm:$0xff]
  %v146 = vld [vmem:[%s0 + $0x420] sm:$0xff]
  %v147 = vld [vmem:[%s0 + $0x428] sm:$0xff]
  %v148 = vld [vmem:[%s0 + $0x430] sm:$0xff]
  %v149 = vld [vmem:[%s0 + $0x438] sm:$0xff]
  %v150 = vld [vmem:[%s0 + $0x440] sm:$0xff]
  %v151 = vld [vmem:[%s0 + $0x448] sm:$0xff]
  %v152 = vld [vmem:[%s0 + $0x450] sm:$0xff]
  %v153 = vld [vmem:[%s0 + $0x458] sm:$0xff]
  %v154 = vld [vmem:[%s0 + $0x460] sm:$0x3]
  %v155 = vld [vmem:[%s0 + $0x468] sm:$0x3]
  %v156 = vld [vmem:[%s0 + $0x470] sm:$0x3]
  %v157 = vld [vmem:[%s0 + $0x478] sm:$0x3]
  %v158 = vld [vmem:[%s0 + $0x480] sm:$0x3]
  %v159 = vld [vmem:[%s0 + $0x488] sm:$0x3]
  %v160 = vld [vmem:[%s0 + $0x490] sm:$0x3]
  %v161 = vld [vmem:[%s1] sm:$0xff]
  %v162 = vld [vmem:[%s1 + $0x8] sm:$0xff]
  %v163 = vld [vmem:[%s1 + $0x10] sm:$0xff]
  %v164 = vld [vmem:[%s1 + $0x18] sm:$0xff]
  %v165 = vld [vmem:[%s1 + $0x20] sm:$0xff]
  %v166 = vld [vmem:[%s1 + $0x28] sm:$0xff]
  %v167 = vld [vmem:[%s1 + $0x30] sm:$0xff]
  %v168 = vld [vmem:[%s1 + $0x38] sm:$0xff]
  %v169 = vld [vmem:[%s1 + $0x40] sm:$0xff]
  %v170 = vld [vmem:[%s1 + $0x48] sm:$0xff]
  %v171 = vld [vmem:[%s1 + $0x50] sm:$0xff]
  %v172 = vld [vmem:[%s1 + $0x58] sm:$0xff]
  %v173 = vld [vmem:[%s1 + $0x60] sm:$0xff]
  %v174 = vld [vmem:[%s1 + $0x68] sm:$0xff]
  %v175 = vld [vmem:[%s1 + $0x70] sm:$0xff]
  %v176 = vld [vmem:[%s1 + $0x78] sm:$0xff]
  %v177 = vld [vmem:[%s1 + $0x80] sm:$0xff]
  %v178 = vld [vmem:[%s1 + $0x88] sm:$0xff]
  %v179 = vld [vmem:[%s1 + $0x90] sm:$0xff]
  %v180 = vld [vmem:[%s1 + $0x98] sm:$0xff]
  %v181 = vld [vmem:[%s1 + $0xa0] sm:$0xff]
  %v182 = vld [vmem:[%s1 + $0xa8] sm:$0xff]
  %v183 = vld [vmem:[%s1 + $0xb0] sm:$0xff]
  %v184 = vld [vmem:[%s1 + $0xb8] sm:$0xff]
  %v185 = vld [vmem:[%s1 + $0xc0] sm:$0xff]
  %v186 = vld [vmem:[%s1 + $0xc8] sm:$0xff]
  %v187 = vld [vmem:[%s1 + $0xd0] sm:$0xff]
  %v188 = vld [vmem:[%s1 + $0xd8] sm:$0xff]
  %v189 = vld [vmem:[%s1 + $0xe0] sm:$0xff]
  %v190 = vld [vmem:[%s1 + $0xe8] sm:$0xff]
  %v191 = vld [vmem:[%s1 + $0xf0] sm:$0xff]
  %v192 = vld [vmem:[%s1 + $0xf8] sm:$0xff]
  %v193 = vld [vmem:[%s1 + $0x100] sm:$0xff]
  %v194 = vld [vmem:[%s1 + $0x108] sm:$0xff]
  %v195 = vld [vmem:[%s1 + $0x110] sm:$0xff]
  %v196 = vld [vmem:[%s1 + $0x118] sm:$0xff]
  %v197 = vld [vmem:[%s1 + $0x120] sm:$0xff]
  %v198 = vld [vmem:[%s1 + $0x128] sm:$0xff]
  %v199 = vld [vmem:[%s1 + $0x130] sm:$0xff]
  %v200 = vld [vmem:[%s1 + $0x138] sm:$0xff]
  %v201 = vld [vmem:[%s1 + $0x140] sm:$0xff]
  %v202 = vld [vmem:[%s1 + $0x148] sm:$0xff]
  %v203 = vld [vmem:[%s1 + $0x150] sm:$0xff]
  %v204 = vld [vmem:[%s1 + $0x158] sm:$0xff]
  %v205 = vld [vmem:[%s1 + $0x160] sm:$0xff]
  %v206 = vld [vmem:[%s1 + $0x168] sm:$0xff]
  %v207 = vld [vmem:[%s1 + $0x170] sm:$0xff]
  %v208 = vld [vmem:[%s1 + $0x178] sm:$0xff]
  %v209 = vld [vmem:[%s1 + $0x180] sm:$0xff]
  %v210 = vld [vmem:[%s1 + $0x188] sm:$0xff]
  %v211 = vld [vmem:[%s1 + $0x190] sm:$0xff]
  %v212 = vld [vmem:[%s1 + $0x198] sm:$0xff]
  %v213 = vld [vmem:[%s1 + $0x1a0] sm:$0xff]
  %v214 = vld [vmem:[%s1 + $0x1a8] sm:$0xff]
  %v215 = vld [vmem:[%s1 + $0x1b0] sm:$0xff]
  %v216 = vld [vmem:[%s1 + $0x1b8] sm:$0xff]
  %v217 = vld [vmem:[%s1 + $0x1c0] sm:$0xff]
  %v218 = vld [vmem:[%s1 + $0x1c8] sm:$0xff]
  %v219 = vld [vmem:[%s1 + $0x1d0] sm:$0xff]
  %v220 = vld [vmem:[%s1 + $0x1d8] sm:$0xff]
  %v221 = vld [vmem:[%s1 + $0x1e0] sm:$0xff]
  %v222 = vld [vmem:[%s1 + $0x1e8] sm:$0xff]
  %v223 = vld [vmem:[%s1 + $0x1f0] sm:$0xff]
  %v224 = vld [vmem:[%s1 + $0x1f8] sm:$0xff]
  %v225 = vld [vmem:[%s1 + $0x200] sm:$0xff]
  %v226 = vld [vmem:[%s1 + $0x208] sm:$0xff]
  %v227 = vld [vmem:[%s1 + $0x210] sm:$0xff]
  %v228 = vld [vmem:[%s1 + $0x218] sm:$0xff]
  %v229 = vld [vmem:[%s1 + $0x220] sm:$0xff]
  %v230 = vld [vmem:[%s1 + $0x228] sm:$0xff]
  %v231 = vld [vmem:[%s1 + $0x230] sm:$0xff]
  %v232 = vld [vmem:[%s1 + $0x238] sm:$0xff]
  %v233 = vld [vmem:[%s1 + $0x240] sm:$0xff]
  %v234 = vld [vmem:[%s1 + $0x248] sm:$0xff]
  %v235 = vld [vmem:[%s1 + $0x250] sm:$0xff]
  %v236 = vld [vmem:[%s1 + $0x258] sm:$0xff]
  %v237 = vld [vmem:[%s1 + $0x260] sm:$0xff]
  %v238 = vld [vmem:[%s1 + $0x268] sm:$0xff]
  %v239 = vld [vmem:[%s1 + $0x270] sm:$0xff]
  %v240 = vld [vmem:[%s1 + $0x278] sm:$0xff]
  %v241 = vld [vmem:[%s1 + $0x280] sm:$0xff]
  %v242 = vld [vmem:[%s1 + $0x288] sm:$0xff]
  %v243 = vld [vmem:[%s1 + $0x290] sm:$0xff]
  %v244 = vld [vmem:[%s1 + $0x298] sm:$0xff]
  %v245 = vld [vmem:[%s1 + $0x2a0] sm:$0xff]
  %v246 = vld [vmem:[%s1 + $0x2a8] sm:$0xff]
  %v247 = vld [vmem:[%s1 + $0x2b0] sm:$0xff]
  %v248 = vld [vmem:[%s1 + $0x2b8] sm:$0xff]
  %v249 = vld [vmem:[%s1 + $0x2c0] sm:$0xff]
  %v250 = vld [vmem:[%s1 + $0x2c8] sm:$0xff]
  %v251 = vld [vmem:[%s1 + $0x2d0] sm:$0xff]
  %v252 = vld [vmem:[%s1 + $0x2d8] sm:$0xff]
  %v253 = vld [vmem:[%s1 + $0x2e0] sm:$0xff]
  %v254 = vld [vmem:[%s1 + $0x2e8] sm:$0xff]
  %v255 = vld [vmem:[%s1 + $0x2f0] sm:$0xff]
  %v256 = vld [vmem:[%s1 + $0x2f8] sm:$0xff]
  %v257 = vld [vmem:[%s1 + $0x300] sm:$0xff]
  %v258 = vld [vmem:[%s1 + $0x308] sm:$0xff]
  %v259 = vld [vmem:[%s2] sm:$0x1]
  %v261 = vperm.slane %v259, 0
  %vm263 = vcmask 130048
  %v265 = vsel %vm263, %v20, 0
  %v268 = vsel %vm263, %v27, 0
  %v271 = vsel %vm263, %v34, 0
  %v274 = vsel %vm263, %v41, 0
  %v277 = vsel %vm263, %v48, 0
  %v280 = vsel %vm263, %v55, 0
  %v283 = vsel %vm263, %v62, 0
  %v286 = vsel %vm263, %v69, 0
  %v289 = vsel %vm263, %v76, 0
  %v292 = vsel %vm263, %v83, 0
  %v295 = vsel %vm263, %v90, 0
  %v298 = vsel %vm263, %v97, 0
  %v301 = vsel %vm263, %v104, 0
  %v304 = vsel %vm263, %v111, 0
  %v307 = vsel %vm263, %v118, 0
  %v310 = vsel %vm263, %v125, 0
  %v313 = vsel %vm263, %v132, 0
  %v316 = vsel %vm263, %v139, 0
  %v319 = vsel %vm263, %v146, 0
  %v322 = vsel %vm263, %v153, 0
  %v325 = vsel %vm263, %v160, 0
  %327 = vmatpush.msra.mxu0 %v176
  %328 = vmatpush.msra.mxu0 %v175
  %329 = vmatpush.msra.mxu0 %v174
  %330 = vmatpush.msra.mxu0 %v173
  %331 = vmatpush.msra.mxu0 %v172
  %332 = vmatpush.msra.mxu0 %v171
  %333 = vmatpush.msra.mxu0 %v170
  %334 = vmatpush.msra.mxu0 %v169
  %335 = vmatpush.msra.mxu0 %v168
  %336 = vmatpush.msra.mxu0 %v167
  %337 = vmatpush.msra.mxu0 %v166
  %338 = vmatpush.msra.mxu0 %v165
  %339 = vmatpush.msra.mxu0 %v164
  %340 = vmatpush.msra.mxu0 %v163
  %341 = vmatpush.msra.mxu0 %v162
  %342 = vmatpush.msra.mxu0 %v161
  %343 = vmatmul.f32.gmra.mxu0 %v14
  %v344 = vpop.f32.mrf.mxu0
  %v345 = vadd.f32 %v261, %v344
  %346 = vmatmul.f32.gmra.mxu0 %v21
  %v347 = vpop.f32.mrf.mxu0
  %v348 = vadd.f32 %v261, %v347
  %349 = vmatmul.f32.gmra.mxu0 %v28
  %v350 = vpop.f32.mrf.mxu0
  %v351 = vadd.f32 %v261, %v350
  %352 = vmatmul.f32.gmra.mxu0 %v35
  %v353 = vpop.f32.mrf.mxu0
  %v354 = vadd.f32 %v261, %v353
  %355 = vmatmul.f32.gmra.mxu0 %v42
  %v356 = vpop.f32.mrf.mxu0
  %v357 = vadd.f32 %v261, %v356
  %358 = vmatmul.f32.gmra.mxu0 %v49
  %v359 = vpop.f32.mrf.mxu0
  %v360 = vadd.f32 %v261, %v359
  %361 = vmatmul.f32.gmra.mxu0 %v56
  %v362 = vpop.f32.mrf.mxu0
  %v363 = vadd.f32 %v261, %v362
  %364 = vmatmul.f32.gmra.mxu0 %v63
  %v365 = vpop.f32.mrf.mxu0
  %v366 = vadd.f32 %v261, %v365
  %367 = vmatmul.f32.gmra.mxu0 %v70
  %v368 = vpop.f32.mrf.mxu0
  %v369 = vadd.f32 %v261, %v368
  %370 = vmatmul.f32.gmra.mxu0 %v77
  %v371 = vpop.f32.mrf.mxu0
  %v372 = vadd.f32 %v261, %v371
  %373 = vmatmul.f32.gmra.mxu0 %v84
  %v374 = vpop.f32.mrf.mxu0
  %v375 = vadd.f32 %v261, %v374
  %376 = vmatmul.f32.gmra.mxu0 %v91
  %v377 = vpop.f32.mrf.mxu0
  %v378 = vadd.f32 %v261, %v377
  %379 = vmatmul.f32.gmra.mxu0 %v98
  %v380 = vpop.f32.mrf.mxu0
  %v381 = vadd.f32 %v261, %v380
  %382 = vmatmul.f32.gmra.mxu0 %v105
  %v383 = vpop.f32.mrf.mxu0
  %v384 = vadd.f32 %v261, %v383
  %385 = vmatmul.f32.gmra.mxu0 %v112
  %v386 = vpop.f32.mrf.mxu0
  %v387 = vadd.f32 %v261, %v386
  %388 = vmatmul.f32.gmra.mxu0 %v119
  %v389 = vpop.f32.mrf.mxu0
  %v390 = vadd.f32 %v261, %v389
  %391 = vmatmul.f32.gmra.mxu0 %v126
  %v392 = vpop.f32.mrf.mxu0
  %v393 = vadd.f32 %v261, %v392
  %394 = vmatmul.f32.gmra.mxu0 %v133
  %v395 = vpop.f32.mrf.mxu0
  %v396 = vadd.f32 %v261, %v395
  %397 = vmatmul.f32.gmra.mxu0 %v140
  %v398 = vpop.f32.mrf.mxu0
  %v399 = vadd.f32 %v261, %v398
  %400 = vmatmul.f32.gmra.mxu0 %v147
  %v401 = vpop.f32.mrf.mxu0
  %v402 = vadd.f32 %v261, %v401
  %403 = vmatmul.f32.gmra.mxu0 %v154
  %v404 = vpop.f32.mrf.mxu0
  %v405 = vadd.f32 %v261, %v404
  %406 = vdwg.mxu0
  %407 = vmatpush.msra.mxu0 %v192
  %408 = vmatpush.msra.mxu0 %v191
  %409 = vmatpush.msra.mxu0 %v190
  %410 = vmatpush.msra.mxu0 %v189
  %411 = vmatpush.msra.mxu0 %v188
  %412 = vmatpush.msra.mxu0 %v187
  %413 = vmatpush.msra.mxu0 %v186
  %414 = vmatpush.msra.mxu0 %v185
  %415 = vmatpush.msra.mxu0 %v184
  %416 = vmatpush.msra.mxu0 %v183
  %417 = vmatpush.msra.mxu0 %v182
  %418 = vmatpush.msra.mxu0 %v181
  %419 = vmatpush.msra.mxu0 %v180
  %420 = vmatpush.msra.mxu0 %v179
  %421 = vmatpush.msra.mxu0 %v178
  %422 = vmatpush.msra.mxu0 %v177
  %423 = vmatmul.f32.gmra.mxu0 %v15
  %v424 = vpop.f32.mrf.mxu0
  %v425 = vadd.f32 %v345, %v424
  %426 = vmatmul.f32.gmra.mxu0 %v22
  %v427 = vpop.f32.mrf.mxu0
  %v428 = vadd.f32 %v348, %v427
  %429 = vmatmul.f32.gmra.mxu0 %v29
  %v430 = vpop.f32.mrf.mxu0
  %v431 = vadd.f32 %v351, %v430
  %432 = vmatmul.f32.gmra.mxu0 %v36
  %v433 = vpop.f32.mrf.mxu0
  %v434 = vadd.f32 %v354, %v433
  %435 = vmatmul.f32.gmra.mxu0 %v43
  %v436 = vpop.f32.mrf.mxu0
  %v437 = vadd.f32 %v357, %v436
  %438 = vmatmul.f32.gmra.mxu0 %v50
  %v439 = vpop.f32.mrf.mxu0
  %v440 = vadd.f32 %v360, %v439
  %441 = vmatmul.f32.gmra.mxu0 %v57
  %v442 = vpop.f32.mrf.mxu0
  %v443 = vadd.f32 %v363, %v442
  %444 = vmatmul.f32.gmra.mxu0 %v64
  %v445 = vpop.f32.mrf.mxu0
  %v446 = vadd.f32 %v366, %v445
  %447 = vmatmul.f32.gmra.mxu0 %v71
  %v448 = vpop.f32.mrf.mxu0
  %v449 = vadd.f32 %v369, %v448
  %450 = vmatmul.f32.gmra.mxu0 %v78
  %v451 = vpop.f32.mrf.mxu0
  %v452 = vadd.f32 %v372, %v451
  %453 = vmatmul.f32.gmra.mxu0 %v85
  %v454 = vpop.f32.mrf.mxu0
  %v455 = vadd.f32 %v375, %v454
  %456 = vmatmul.f32.gmra.mxu0 %v92
  %v457 = vpop.f32.mrf.mxu0
  %v458 = vadd.f32 %v378, %v457
  %459 = vmatmul.f32.gmra.mxu0 %v99
  %v460 = vpop.f32.mrf.mxu0
  %v461 = vadd.f32 %v381, %v460
  %462 = vmatmul.f32.gmra.mxu0 %v106
  %v463 = vpop.f32.mrf.mxu0
  %v464 = vadd.f32 %v384, %v463
  %465 = vmatmul.f32.gmra.mxu0 %v113
  %v466 = vpop.f32.mrf.mxu0
  %v467 = vadd.f32 %v387, %v466
  %468 = vmatmul.f32.gmra.mxu0 %v120
  %v469 = vpop.f32.mrf.mxu0
  %v470 = vadd.f32 %v390, %v469
  %471 = vmatmul.f32.gmra.mxu0 %v127
  %v472 = vpop.f32.mrf.mxu0
  %v473 = vadd.f32 %v393, %v472
  %474 = vmatmul.f32.gmra.mxu0 %v134
  %v475 = vpop.f32.mrf.mxu0
  %v476 = vadd.f32 %v396, %v475
  %477 = vmatmul.f32.gmra.mxu0 %v141
  %v478 = vpop.f32.mrf.mxu0
  %v479 = vadd.f32 %v399, %v478
  %480 = vmatmul.f32.gmra.mxu0 %v148
  %v481 = vpop.f32.mrf.mxu0
  %v482 = vadd.f32 %v402, %v481
  %483 = vmatmul.f32.gmra.mxu0 %v155
  %v484 = vpop.f32.mrf.mxu0
  %v485 = vadd.f32 %v405, %v484
  %486 = vdwg.mxu0
  %487 = vmatpush.msra.mxu0 %v208
  %488 = vmatpush.msra.mxu0 %v207
  %489 = vmatpush.msra.mxu0 %v206
  %490 = vmatpush.msra.mxu0 %v205
  %491 = vmatpush.msra.mxu0 %v204
  %492 = vmatpush.msra.mxu0 %v203
  %493 = vmatpush.msra.mxu0 %v202
  %494 = vmatpush.msra.mxu0 %v201
  %495 = vmatpush.msra.mxu0 %v200
  %496 = vmatpush.msra.mxu0 %v199
  %497 = vmatpush.msra.mxu0 %v198
  %498 = vmatpush.msra.mxu0 %v197
  %499 = vmatpush.msra.mxu0 %v196
  %500 = vmatpush.msra.mxu0 %v195
  %501 = vmatpush.msra.mxu0 %v194
  %502 = vmatpush.msra.mxu0 %v193
  %503 = vmatmul.f32.gmra.mxu0 %v16
  %v504 = vpop.f32.mrf.mxu0
  %v505 = vadd.f32 %v425, %v504
  %506 = vmatmul.f32.gmra.mxu0 %v23
  %v507 = vpop.f32.mrf.mxu0
  %v508 = vadd.f32 %v428, %v507
  %509 = vmatmul.f32.gmra.mxu0 %v30
  %v510 = vpop.f32.mrf.mxu0
  %v511 = vadd.f32 %v431, %v510
  %512 = vmatmul.f32.gmra.mxu0 %v37
  %v513 = vpop.f32.mrf.mxu0
  %v514 = vadd.f32 %v434, %v513
  %515 = vmatmul.f32.gmra.mxu0 %v44
  %v516 = vpop.f32.mrf.mxu0
  %v517 = vadd.f32 %v437, %v516
  %518 = vmatmul.f32.gmra.mxu0 %v51
  %v519 = vpop.f32.mrf.mxu0
  %v520 = vadd.f32 %v440, %v519
  %521 = vmatmul.f32.gmra.mxu0 %v58
  %v522 = vpop.f32.mrf.mxu0
  %v523 = vadd.f32 %v443, %v522
  %524 = vmatmul.f32.gmra.mxu0 %v65
  %v525 = vpop.f32.mrf.mxu0
  %v526 = vadd.f32 %v446, %v525
  %527 = vmatmul.f32.gmra.mxu0 %v72
  %v528 = vpop.f32.mrf.mxu0
  %v529 = vadd.f32 %v449, %v528
  %530 = vmatmul.f32.gmra.mxu0 %v79
  %v531 = vpop.f32.mrf.mxu0
  %v532 = vadd.f32 %v452, %v531
  %533 = vmatmul.f32.gmra.mxu0 %v86
  %v534 = vpop.f32.mrf.mxu0
  %v535 = vadd.f32 %v455, %v534
  %536 = vmatmul.f32.gmra.mxu0 %v93
  %v537 = vpop.f32.mrf.mxu0
  %v538 = vadd.f32 %v458, %v537
  %539 = vmatmul.f32.gmra.mxu0 %v100
  %v540 = vpop.f32.mrf.mxu0
  %v541 = vadd.f32 %v461, %v540
  %542 = vmatmul.f32.gmra.mxu0 %v107
  %v543 = vpop.f32.mrf.mxu0
  %v544 = vadd.f32 %v464, %v543
  %545 = vmatmul.f32.gmra.mxu0 %v114
  %v546 = vpop.f32.mrf.mxu0
  %v547 = vadd.f32 %v467, %v546
  %548 = vmatmul.f32.gmra.mxu0 %v121
  %v549 = vpop.f32.mrf.mxu0
  %v550 = vadd.f32 %v470, %v549
  %551 = vmatmul.f32.gmra.mxu0 %v128
  %v552 = vpop.f32.mrf.mxu0
  %v553 = vadd.f32 %v473, %v552
  %554 = vmatmul.f32.gmra.mxu0 %v135
  %v555 = vpop.f32.mrf.mxu0
  %v556 = vadd.f32 %v476, %v555
  %557 = vmatmul.f32.gmra.mxu0 %v142
  %v558 = vpop.f32.mrf.mxu0
  %v559 = vadd.f32 %v479, %v558
  %560 = vmatmul.f32.gmra.mxu0 %v149
  %v561 = vpop.f32.mrf.mxu0
  %v562 = vadd.f32 %v482, %v561
  %563 = vmatmul.f32.gmra.mxu0 %v156
  %v564 = vpop.f32.mrf.mxu0
  %v565 = vadd.f32 %v485, %v564
  %566 = vdwg.mxu0
  %567 = vmatpush.msra.mxu0 %v224
  %568 = vmatpush.msra.mxu0 %v223
  %569 = vmatpush.msra.mxu0 %v222
  %570 = vmatpush.msra.mxu0 %v221
  %571 = vmatpush.msra.mxu0 %v220
  %572 = vmatpush.msra.mxu0 %v219
  %573 = vmatpush.msra.mxu0 %v218
  %574 = vmatpush.msra.mxu0 %v217
  %575 = vmatpush.msra.mxu0 %v216
  %576 = vmatpush.msra.mxu0 %v215
  %577 = vmatpush.msra.mxu0 %v214
  %578 = vmatpush.msra.mxu0 %v213
  %579 = vmatpush.msra.mxu0 %v212
  %580 = vmatpush.msra.mxu0 %v211
  %581 = vmatpush.msra.mxu0 %v210
  %582 = vmatpush.msra.mxu0 %v209
  %583 = vmatmul.f32.gmra.mxu0 %v17
  %v584 = vpop.f32.mrf.mxu0
  %v585 = vadd.f32 %v505, %v584
  %586 = vmatmul.f32.gmra.mxu0 %v24
  %v587 = vpop.f32.mrf.mxu0
  %v588 = vadd.f32 %v508, %v587
  %589 = vmatmul.f32.gmra.mxu0 %v31
  %v590 = vpop.f32.mrf.mxu0
  %v591 = vadd.f32 %v511, %v590
  %592 = vmatmul.f32.gmra.mxu0 %v38
  %v593 = vpop.f32.mrf.mxu0
  %v594 = vadd.f32 %v514, %v593
  %595 = vmatmul.f32.gmra.mxu0 %v45
  %v596 = vpop.f32.mrf.mxu0
  %v597 = vadd.f32 %v517, %v596
  %598 = vmatmul.f32.gmra.mxu0 %v52
  %v599 = vpop.f32.mrf.mxu0
  %v600 = vadd.f32 %v520, %v599
  %601 = vmatmul.f32.gmra.mxu0 %v59
  %v602 = vpop.f32.mrf.mxu0
  %v603 = vadd.f32 %v523, %v602
  %604 = vmatmul.f32.gmra.mxu0 %v66
  %v605 = vpop.f32.mrf.mxu0
  %v606 = vadd.f32 %v526, %v605
  %607 = vmatmul.f32.gmra.mxu0 %v73
  %v608 = vpop.f32.mrf.mxu0
  %v609 = vadd.f32 %v529, %v608
  %610 = vmatmul.f32.gmra.mxu0 %v80
  %v611 = vpop.f32.mrf.mxu0
  %v612 = vadd.f32 %v532, %v611
  %613 = vmatmul.f32.gmra.mxu0 %v87
  %v614 = vpop.f32.mrf.mxu0
  %v615 = vadd.f32 %v535, %v614
  %616 = vmatmul.f32.gmra.mxu0 %v94
  %v617 = vpop.f32.mrf.mxu0
  %v618 = vadd.f32 %v538, %v617
  %619 = vmatmul.f32.gmra.mxu0 %v101
  %v620 = vpop.f32.mrf.mxu0
  %v621 = vadd.f32 %v541, %v620
  %622 = vmatmul.f32.gmra.mxu0 %v108
  %v623 = vpop.f32.mrf.mxu0
  %v624 = vadd.f32 %v544, %v623
  %625 = vmatmul.f32.gmra.mxu0 %v115
  %v626 = vpop.f32.mrf.mxu0
  %v627 = vadd.f32 %v547, %v626
  %628 = vmatmul.f32.gmra.mxu0 %v122
  %v629 = vpop.f32.mrf.mxu0
  %v630 = vadd.f32 %v550, %v629
  %631 = vmatmul.f32.gmra.mxu0 %v129
  %v632 = vpop.f32.mrf.mxu0
  %v633 = vadd.f32 %v553, %v632
  %634 = vmatmul.f32.gmra.mxu0 %v136
  %v635 = vpop.f32.mrf.mxu0
  %v636 = vadd.f32 %v556, %v635
  %637 = vmatmul.f32.gmra.mxu0 %v143
  %v638 = vpop.f32.mrf.mxu0
  %v639 = vadd.f32 %v559, %v638
  %640 = vmatmul.f32.gmra.mxu0 %v150
  %v641 = vpop.f32.mrf.mxu0
  %v642 = vadd.f32 %v562, %v641
  %643 = vmatmul.f32.gmra.mxu0 %v157
  %v644 = vpop.f32.mrf.mxu0
  %v645 = vadd.f32 %v565, %v644
  %646 = vdwg.mxu0
  %647 = vmatpush.msra.mxu0 %v240
  %648 = vmatpush.msra.mxu0 %v239
  %649 = vmatpush.msra.mxu0 %v238
  %650 = vmatpush.msra.mxu0 %v237
  %651 = vmatpush.msra.mxu0 %v236
  %652 = vmatpush.msra.mxu0 %v235
  %653 = vmatpush.msra.mxu0 %v234
  %654 = vmatpush.msra.mxu0 %v233
  %655 = vmatpush.msra.mxu0 %v232
  %656 = vmatpush.msra.mxu0 %v231
  %657 = vmatpush.msra.mxu0 %v230
  %658 = vmatpush.msra.mxu0 %v229
  %659 = vmatpush.msra.mxu0 %v228
  %660 = vmatpush.msra.mxu0 %v227
  %661 = vmatpush.msra.mxu0 %v226
  %662 = vmatpush.msra.mxu0 %v225
  %663 = vmatmul.f32.gmra.mxu0 %v18
  %v664 = vpop.f32.mrf.mxu0
  %v665 = vadd.f32 %v585, %v664
  %666 = vmatmul.f32.gmra.mxu0 %v25
  %v667 = vpop.f32.mrf.mxu0
  %v668 = vadd.f32 %v588, %v667
  %669 = vmatmul.f32.gmra.mxu0 %v32
  %v670 = vpop.f32.mrf.mxu0
  %v671 = vadd.f32 %v591, %v670
  %672 = vmatmul.f32.gmra.mxu0 %v39
  %v673 = vpop.f32.mrf.mxu0
  %v674 = vadd.f32 %v594, %v673
  %675 = vmatmul.f32.gmra.mxu0 %v46
  %v676 = vpop.f32.mrf.mxu0
  %v677 = vadd.f32 %v597, %v676
  %678 = vmatmul.f32.gmra.mxu0 %v53
  %v679 = vpop.f32.mrf.mxu0
  %v680 = vadd.f32 %v600, %v679
  %681 = vmatmul.f32.gmra.mxu0 %v60
  %v682 = vpop.f32.mrf.mxu0
  %v683 = vadd.f32 %v603, %v682
  %684 = vmatmul.f32.gmra.mxu0 %v67
  %v685 = vpop.f32.mrf.mxu0
  %v686 = vadd.f32 %v606, %v685
  %687 = vmatmul.f32.gmra.mxu0 %v74
  %v688 = vpop.f32.mrf.mxu0
  %v689 = vadd.f32 %v609, %v688
  %690 = vmatmul.f32.gmra.mxu0 %v81
  %v691 = vpop.f32.mrf.mxu0
  %v692 = vadd.f32 %v612, %v691
  %693 = vmatmul.f32.gmra.mxu0 %v88
  %v694 = vpop.f32.mrf.mxu0
  %v695 = vadd.f32 %v615, %v694
  %696 = vmatmul.f32.gmra.mxu0 %v95
  %v697 = vpop.f32.mrf.mxu0
  %v698 = vadd.f32 %v618, %v697
  %699 = vmatmul.f32.gmra.mxu0 %v102
  %v700 = vpop.f32.mrf.mxu0
  %v701 = vadd.f32 %v621, %v700
  %702 = vmatmul.f32.gmra.mxu0 %v109
  %v703 = vpop.f32.mrf.mxu0
  %v704 = vadd.f32 %v624, %v703
  %705 = vmatmul.f32.gmra.mxu0 %v116
  %v706 = vpop.f32.mrf.mxu0
  %v707 = vadd.f32 %v627, %v706
  %708 = vmatmul.f32.gmra.mxu0 %v123
  %v709 = vpop.f32.mrf.mxu0
  %v710 = vadd.f32 %v630, %v709
  %711 = vmatmul.f32.gmra.mxu0 %v130
  %v712 = vpop.f32.mrf.mxu0
  %v713 = vadd.f32 %v633, %v712
  %714 = vmatmul.f32.gmra.mxu0 %v137
  %v715 = vpop.f32.mrf.mxu0
  %v716 = vadd.f32 %v636, %v715
  %717 = vmatmul.f32.gmra.mxu0 %v144
  %v718 = vpop.f32.mrf.mxu0
  %v719 = vadd.f32 %v639, %v718
  %720 = vmatmul.f32.gmra.mxu0 %v151
  %v721 = vpop.f32.mrf.mxu0
  %v722 = vadd.f32 %v642, %v721
  %723 = vmatmul.f32.gmra.mxu0 %v158
  %v724 = vpop.f32.mrf.mxu0
  %v725 = vadd.f32 %v645, %v724
  %726 = vdwg.mxu0
  %727 = vmatpush.msra.mxu0 %v256
  %728 = vmatpush.msra.mxu0 %v255
  %729 = vmatpush.msra.mxu0 %v254
  %730 = vmatpush.msra.mxu0 %v253
  %731 = vmatpush.msra.mxu0 %v252
  %732 = vmatpush.msra.mxu0 %v251
  %733 = vmatpush.msra.mxu0 %v250
  %734 = vmatpush.msra.mxu0 %v249
  %735 = vmatpush.msra.mxu0 %v248
  %736 = vmatpush.msra.mxu0 %v247
  %737 = vmatpush.msra.mxu0 %v246
  %738 = vmatpush.msra.mxu0 %v245
  %739 = vmatpush.msra.mxu0 %v244
  %740 = vmatpush.msra.mxu0 %v243
  %741 = vmatpush.msra.mxu0 %v242
  %742 = vmatpush.msra.mxu0 %v241
  %743 = vmatmul.f32.gmra.mxu0 %v19
  %v744 = vpop.f32.mrf.mxu0
  %v745 = vadd.f32 %v665, %v744
  %746 = vmatmul.f32.gmra.mxu0 %v26
  %v747 = vpop.f32.mrf.mxu0
  %v748 = vadd.f32 %v668, %v747
  %749 = vmatmul.f32.gmra.mxu0 %v33
  %v750 = vpop.f32.mrf.mxu0
  %v751 = vadd.f32 %v671, %v750
  %752 = vmatmul.f32.gmra.mxu0 %v40
  %v753 = vpop.f32.mrf.mxu0
  %v754 = vadd.f32 %v674, %v753
  %755 = vmatmul.f32.gmra.mxu0 %v47
  %v756 = vpop.f32.mrf.mxu0
  %v757 = vadd.f32 %v677, %v756
  %758 = vmatmul.f32.gmra.mxu0 %v54
  %v759 = vpop.f32.mrf.mxu0
  %v760 = vadd.f32 %v680, %v759
  %761 = vmatmul.f32.gmra.mxu0 %v61
  %v762 = vpop.f32.mrf.mxu0
  %v763 = vadd.f32 %v683, %v762
  %764 = vmatmul.f32.gmra.mxu0 %v68
  %v765 = vpop.f32.mrf.mxu0
  %v766 = vadd.f32 %v686, %v765
  %767 = vmatmul.f32.gmra.mxu0 %v75
  %v768 = vpop.f32.mrf.mxu0
  %v769 = vadd.f32 %v689, %v768
  %770 = vmatmul.f32.gmra.mxu0 %v82
  %v771 = vpop.f32.mrf.mxu0
  %v772 = vadd.f32 %v692, %v771
  %773 = vmatmul.f32.gmra.mxu0 %v89
  %v774 = vpop.f32.mrf.mxu0
  %v775 = vadd.f32 %v695, %v774
  %776 = vmatmul.f32.gmra.mxu0 %v96
  %v777 = vpop.f32.mrf.mxu0
  %v778 = vadd.f32 %v698, %v777
  %779 = vmatmul.f32.gmra.mxu0 %v103
  %v780 = vpop.f32.mrf.mxu0
  %v781 = vadd.f32 %v701, %v780
  %782 = vmatmul.f32.gmra.mxu0 %v110
  %v783 = vpop.f32.mrf.mxu0
  %v784 = vadd.f32 %v704, %v783
  %785 = vmatmul.f32.gmra.mxu0 %v117
  %v786 = vpop.f32.mrf.mxu0
  %v787 = vadd.f32 %v707, %v786
  %788 = vmatmul.f32.gmra.mxu0 %v124
  %v789 = vpop.f32.mrf.mxu0
  %v790 = vadd.f32 %v710, %v789
  %791 = vmatmul.f32.gmra.mxu0 %v131
  %v792 = vpop.f32.mrf.mxu0
  %v793 = vadd.f32 %v713, %v792
  %794 = vmatmul.f32.gmra.mxu0 %v138
  %v795 = vpop.f32.mrf.mxu0
  %v796 = vadd.f32 %v716, %v795
  %797 = vmatmul.f32.gmra.mxu0 %v145
  %v798 = vpop.f32.mrf.mxu0
  %v799 = vadd.f32 %v719, %v798
  %800 = vmatmul.f32.gmra.mxu0 %v152
  %v801 = vpop.f32.mrf.mxu0
  %v802 = vadd.f32 %v722, %v801
  %803 = vmatmul.f32.gmra.mxu0 %v159
  %v804 = vpop.f32.mrf.mxu0
  %v805 = vadd.f32 %v725, %v804
  %806 = vdwg.mxu0
  %807 = vmatpush.msra.mxu0 0.0
  %808 = vmatpush.msra.mxu0 0.0
  %809 = vmatpush.msra.mxu0 0.0
  %810 = vmatpush.msra.mxu0 0.0
  %811 = vmatpush.msra.mxu0 0.0
  %812 = vmatpush.msra.mxu0 0.0
  %813 = vmatpush.msra.mxu0 0.0
  %814 = vmatpush.msra.mxu0 0.0
  %815 = vmatpush.msra.mxu0 0.0
  %816 = vmatpush.msra.mxu0 0.0
  %817 = vmatpush.msra.mxu0 0.0
  %818 = vmatpush.msra.mxu0 0.0
  %819 = vmatpush.msra.mxu0 0.0
  %820 = vmatpush.msra.mxu0 0.0
  %821 = vmatpush.msra.mxu0 %v258
  %822 = vmatpush.msra.mxu0 %v257
  %823 = vmatmul.f32.gmra.mxu0 %v265
  %v824 = vpop.f32.mrf.mxu0
  %v825 = vadd.f32 %v745, %v824
  %826 = vmatmul.f32.gmra.mxu0 %v268
  %v827 = vpop.f32.mrf.mxu0
  %v828 = vadd.f32 %v748, %v827
  %829 = vmatmul.f32.gmra.mxu0 %v271
  %v830 = vpop.f32.mrf.mxu0
  %v831 = vadd.f32 %v751, %v830
  %832 = vmatmul.f32.gmra.mxu0 %v274
  %v833 = vpop.f32.mrf.mxu0
  %v834 = vadd.f32 %v754, %v833
  %835 = vmatmul.f32.gmra.mxu0 %v277
  %v836 = vpop.f32.mrf.mxu0
  %v837 = vadd.f32 %v757, %v836
  %838 = vmatmul.f32.gmra.mxu0 %v280
  %v839 = vpop.f32.mrf.mxu0
  %v840 = vadd.f32 %v760, %v839
  %841 = vmatmul.f32.gmra.mxu0 %v283
  %v842 = vpop.f32.mrf.mxu0
  %v843 = vadd.f32 %v763, %v842
  %844 = vmatmul.f32.gmra.mxu0 %v286
  %v845 = vpop.f32.mrf.mxu0
  %v846 = vadd.f32 %v766, %v845
  %847 = vmatmul.f32.gmra.mxu0 %v289
  %v848 = vpop.f32.mrf.mxu0
  %v849 = vadd.f32 %v769, %v848
  %850 = vmatmul.f32.gmra.mxu0 %v292
  %v851 = vpop.f32.mrf.mxu0
  %v852 = vadd.f32 %v772, %v851
  %853 = vmatmul.f32.gmra.mxu0 %v295
  %v854 = vpop.f32.mrf.mxu0
  %v855 = vadd.f32 %v775, %v854
  %856 = vmatmul.f32.gmra.mxu0 %v298
  %v857 = vpop.f32.mrf.mxu0
  %v858 = vadd.f32 %v778, %v857
  %859 = vmatmul.f32.gmra.mxu0 %v301
  %v860 = vpop.f32.mrf.mxu0
  %v861 = vadd.f32 %v781, %v860
  %862 = vmatmul.f32.gmra.mxu0 %v304
  %v863 = vpop.f32.mrf.mxu0
  %v864 = vadd.f32 %v784, %v863
  %865 = vmatmul.f32.gmra.mxu0 %v307
  %v866 = vpop.f32.mrf.mxu0
  %v867 = vadd.f32 %v787, %v866
  %868 = vmatmul.f32.gmra.mxu0 %v310
  %v869 = vpop.f32.mrf.mxu0
  %v870 = vadd.f32 %v790, %v869
  %871 = vmatmul.f32.gmra.mxu0 %v313
  %v872 = vpop.f32.mrf.mxu0
  %v873 = vadd.f32 %v793, %v872
  %874 = vmatmul.f32.gmra.mxu0 %v316
  %v875 = vpop.f32.mrf.mxu0
  %v876 = vadd.f32 %v796, %v875
  %877 = vmatmul.f32.gmra.mxu0 %v319
  %v878 = vpop.f32.mrf.mxu0
  %v879 = vadd.f32 %v799, %v878
  %880 = vmatmul.f32.gmra.mxu0 %v322
  %v881 = vpop.f32.mrf.mxu0
  %v882 = vadd.f32 %v802, %v881
  %883 = vmatmul.f32.gmra.mxu0 %v325
  %v884 = vpop.f32.mrf.mxu0
  %v885 = vadd.f32 %v805, %v884
  %886 = vdwg.mxu0
  %v887 = vsub.f32 0.0, %v825
  %v888 = vsub.f32 0.0, %v828
  %v889 = vsub.f32 0.0, %v831
  %v890 = vsub.f32 0.0, %v834
  %v891 = vsub.f32 0.0, %v837
  %v892 = vsub.f32 0.0, %v840
  %v893 = vsub.f32 0.0, %v843
  %v894 = vsub.f32 0.0, %v846
  %v895 = vsub.f32 0.0, %v849
  %v896 = vsub.f32 0.0, %v852
  %v897 = vsub.f32 0.0, %v855
  %v898 = vsub.f32 0.0, %v858
  %v899 = vsub.f32 0.0, %v861
  %v900 = vsub.f32 0.0, %v864
  %v901 = vsub.f32 0.0, %v867
  %v902 = vsub.f32 0.0, %v870
  %v903 = vsub.f32 0.0, %v873
  %v904 = vsub.f32 0.0, %v876
  %v905 = vsub.f32 0.0, %v879
  %v906 = vsub.f32 0.0, %v882
  %v907 = vsub.f32 0.0, %v885
  %v908 = vmul.f32 %v887, 1.442695
  %v909 = vpow.pop %v908
  %v910 = vmul.f32 %v888, 1.442695
  %v911 = vpow.pop %v910
  %v912 = vmul.f32 %v889, 1.442695
  %v913 = vpow.pop %v912
  %v914 = vmul.f32 %v890, 1.442695
  %v915 = vpow.pop %v914
  %v916 = vmul.f32 %v891, 1.442695
  %v917 = vpow.pop %v916
  %v918 = vmul.f32 %v892, 1.442695
  %v919 = vpow.pop %v918
  %v920 = vmul.f32 %v893, 1.442695
  %v921 = vpow.pop %v920
  %v922 = vmul.f32 %v894, 1.442695
  %v923 = vpow.pop %v922
  %v924 = vmul.f32 %v895, 1.442695
  %v925 = vpow.pop %v924
  %v926 = vmul.f32 %v896, 1.442695
  %v927 = vpow.pop %v926
  %v928 = vmul.f32 %v897, 1.442695
  %v929 = vpow.pop %v928
  %v930 = vmul.f32 %v898, 1.442695
  %v931 = vpow.pop %v930
  %v932 = vmul.f32 %v899, 1.442695
  %v933 = vpow.pop %v932
  %v934 = vmul.f32 %v900, 1.442695
  %v935 = vpow.pop %v934
  %v936 = vmul.f32 %v901, 1.442695
  %v937 = vpow.pop %v936
  %v938 = vmul.f32 %v902, 1.442695
  %v939 = vpow.pop %v938
  %v940 = vmul.f32 %v903, 1.442695
  %v941 = vpow.pop %v940
  %v942 = vmul.f32 %v904, 1.442695
  %v943 = vpow.pop %v942
  %v944 = vmul.f32 %v905, 1.442695
  %v945 = vpow.pop %v944
  %v946 = vmul.f32 %v906, 1.442695
  %v947 = vpow.pop %v946
  %v948 = vmul.f32 %v907, 1.442695
  %v949 = vpow.pop %v948
  %v950 = vadd.f32 %v909, 1.0
  %v951 = vadd.f32 %v911, 1.0
  %v952 = vadd.f32 %v913, 1.0
  %v953 = vadd.f32 %v915, 1.0
  %v954 = vadd.f32 %v917, 1.0
  %v955 = vadd.f32 %v919, 1.0
  %v956 = vadd.f32 %v921, 1.0
  %v957 = vadd.f32 %v923, 1.0
  %v958 = vadd.f32 %v925, 1.0
  %v959 = vadd.f32 %v927, 1.0
  %v960 = vadd.f32 %v929, 1.0
  %v961 = vadd.f32 %v931, 1.0
  %v962 = vadd.f32 %v933, 1.0
  %v963 = vadd.f32 %v935, 1.0
  %v964 = vadd.f32 %v937, 1.0
  %v965 = vadd.f32 %v939, 1.0
  %v966 = vadd.f32 %v941, 1.0
  %v967 = vadd.f32 %v943, 1.0
  %v968 = vadd.f32 %v945, 1.0
  %v969 = vadd.f32 %v947, 1.0
  %v970 = vadd.f32 %v949, 1.0
  %v971 = vrcp.pop %v950
  %v972 = vmul.f32 %v950, %v971
  %v973 = vsub.f32 1.0, %v972
  %v974 = vmul.f32 %v971, %v973
  %v975 = vadd.f32 %v971, %v974
  %vm976 = vweird.f32 %v950
  %vm977 = vweird.f32 %v971
  %vm978 = vmor %vm976, %vm977
  %v979 = vsel %vm978, %v971, %v975
  %v980 = vand.u32 2147483647, %v950
  %vm981 = vcmp.eq.f32.partialorder %v980, 8.507059e+37
  %v982 = vand.u32 %v950, 2147483648
  %v983 = vor.u32 1.1754944e-38, %v982
  %v984 = vsel %vm981, %v983, %v979
  %v985 = vmul.f32 1.0, %v984
  %v986 = vrcp.pop %v951
  %v987 = vmul.f32 %v951, %v986
  %v988 = vsub.f32 1.0, %v987
  %v989 = vmul.f32 %v986, %v988
  %v990 = vadd.f32 %v986, %v989
  %vm991 = vweird.f32 %v951
  %vm992 = vweird.f32 %v986
  %vm993 = vmor %vm991, %vm992
  %v994 = vsel %vm993, %v986, %v990
  %v995 = vand.u32 2147483647, %v951
  %vm996 = vcmp.eq.f32.partialorder %v995, 8.507059e+37
  %v997 = vand.u32 %v951, 2147483648
  %v998 = vor.u32 1.1754944e-38, %v997
  %v999 = vsel %vm996, %v998, %v994
  %v1000 = vmul.f32 1.0, %v999
  %v1001 = vrcp.pop %v952
  %v1002 = vmul.f32 %v952, %v1001
  %v1003 = vsub.f32 1.0, %v1002
  %v1004 = vmul.f32 %v1001, %v1003
  %v1005 = vadd.f32 %v1001, %v1004
  %vm1006 = vweird.f32 %v952
  %vm1007 = vweird.f32 %v1001
  %vm1008 = vmor %vm1006, %vm1007
  %v1009 = vsel %vm1008, %v1001, %v1005
  %v1010 = vand.u32 2147483647, %v952
  %vm1011 = vcmp.eq.f32.partialorder %v1010, 8.507059e+37
  %v1012 = vand.u32 %v952, 2147483648
  %v1013 = vor.u32 1.1754944e-38, %v1012
  %v1014 = vsel %vm1011, %v1013, %v1009
  %v1015 = vmul.f32 1.0, %v1014
  %v1016 = vrcp.pop %v953
  %v1017 = vmul.f32 %v953, %v1016
  %v1018 = vsub.f32 1.0, %v1017
  %v1019 = vmul.f32 %v1016, %v1018
  %v1020 = vadd.f32 %v1016, %v1019
  %vm1021 = vweird.f32 %v953
  %vm1022 = vweird.f32 %v1016
  %vm1023 = vmor %vm1021, %vm1022
  %v1024 = vsel %vm1023, %v1016, %v1020
  %v1025 = vand.u32 2147483647, %v953
  %vm1026 = vcmp.eq.f32.partialorder %v1025, 8.507059e+37
  %v1027 = vand.u32 %v953, 2147483648
  %v1028 = vor.u32 1.1754944e-38, %v1027
  %v1029 = vsel %vm1026, %v1028, %v1024
  %v1030 = vmul.f32 1.0, %v1029
  %v1031 = vrcp.pop %v954
  %v1032 = vmul.f32 %v954, %v1031
  %v1033 = vsub.f32 1.0, %v1032
  %v1034 = vmul.f32 %v1031, %v1033
  %v1035 = vadd.f32 %v1031, %v1034
  %vm1036 = vweird.f32 %v954
  %vm1037 = vweird.f32 %v1031
  %vm1038 = vmor %vm1036, %vm1037
  %v1039 = vsel %vm1038, %v1031, %v1035
  %v1040 = vand.u32 2147483647, %v954
  %vm1041 = vcmp.eq.f32.partialorder %v1040, 8.507059e+37
  %v1042 = vand.u32 %v954, 2147483648
  %v1043 = vor.u32 1.1754944e-38, %v1042
  %v1044 = vsel %vm1041, %v1043, %v1039
  %v1045 = vmul.f32 1.0, %v1044
  %v1046 = vrcp.pop %v955
  %v1047 = vmul.f32 %v955, %v1046
  %v1048 = vsub.f32 1.0, %v1047
  %v1049 = vmul.f32 %v1046, %v1048
  %v1050 = vadd.f32 %v1046, %v1049
  %vm1051 = vweird.f32 %v955
  %vm1052 = vweird.f32 %v1046
  %vm1053 = vmor %vm1051, %vm1052
  %v1054 = vsel %vm1053, %v1046, %v1050
  %v1055 = vand.u32 2147483647, %v955
  %vm1056 = vcmp.eq.f32.partialorder %v1055, 8.507059e+37
  %v1057 = vand.u32 %v955, 2147483648
  %v1058 = vor.u32 1.1754944e-38, %v1057
  %v1059 = vsel %vm1056, %v1058, %v1054
  %v1060 = vmul.f32 1.0, %v1059
  %v1061 = vrcp.pop %v956
  %v1062 = vmul.f32 %v956, %v1061
  %v1063 = vsub.f32 1.0, %v1062
  %v1064 = vmul.f32 %v1061, %v1063
  %v1065 = vadd.f32 %v1061, %v1064
  %vm1066 = vweird.f32 %v956
  %vm1067 = vweird.f32 %v1061
  %vm1068 = vmor %vm1066, %vm1067
  %v1069 = vsel %vm1068, %v1061, %v1065
  %v1070 = vand.u32 2147483647, %v956
  %vm1071 = vcmp.eq.f32.partialorder %v1070, 8.507059e+37
  %v1072 = vand.u32 %v956, 2147483648
  %v1073 = vor.u32 1.1754944e-38, %v1072
  %v1074 = vsel %vm1071, %v1073, %v1069
  %v1075 = vmul.f32 1.0, %v1074
  %v1076 = vrcp.pop %v957
  %v1077 = vmul.f32 %v957, %v1076
  %v1078 = vsub.f32 1.0, %v1077
  %v1079 = vmul.f32 %v1076, %v1078
  %v1080 = vadd.f32 %v1076, %v1079
  %vm1081 = vweird.f32 %v957
  %vm1082 = vweird.f32 %v1076
  %vm1083 = vmor %vm1081, %vm1082
  %v1084 = vsel %vm1083, %v1076, %v1080
  %v1085 = vand.u32 2147483647, %v957
  %vm1086 = vcmp.eq.f32.partialorder %v1085, 8.507059e+37
  %v1087 = vand.u32 %v957, 2147483648
  %v1088 = vor.u32 1.1754944e-38, %v1087
  %v1089 = vsel %vm1086, %v1088, %v1084
  %v1090 = vmul.f32 1.0, %v1089
  %v1091 = vrcp.pop %v958
  %v1092 = vmul.f32 %v958, %v1091
  %v1093 = vsub.f32 1.0, %v1092
  %v1094 = vmul.f32 %v1091, %v1093
  %v1095 = vadd.f32 %v1091, %v1094
  %vm1096 = vweird.f32 %v958
  %vm1097 = vweird.f32 %v1091
  %vm1098 = vmor %vm1096, %vm1097
  %v1099 = vsel %vm1098, %v1091, %v1095
  %v1100 = vand.u32 2147483647, %v958
  %vm1101 = vcmp.eq.f32.partialorder %v1100, 8.507059e+37
  %v1102 = vand.u32 %v958, 2147483648
  %v1103 = vor.u32 1.1754944e-38, %v1102
  %v1104 = vsel %vm1101, %v1103, %v1099
  %v1105 = vmul.f32 1.0, %v1104
  %v1106 = vrcp.pop %v959
  %v1107 = vmul.f32 %v959, %v1106
  %v1108 = vsub.f32 1.0, %v1107
  %v1109 = vmul.f32 %v1106, %v1108
  %v1110 = vadd.f32 %v1106, %v1109
  %vm1111 = vweird.f32 %v959
  %vm1112 = vweird.f32 %v1106
  %vm1113 = vmor %vm1111, %vm1112
  %v1114 = vsel %vm1113, %v1106, %v1110
  %v1115 = vand.u32 2147483647, %v959
  %vm1116 = vcmp.eq.f32.partialorder %v1115, 8.507059e+37
  %v1117 = vand.u32 %v959, 2147483648
  %v1118 = vor.u32 1.1754944e-38, %v1117
  %v1119 = vsel %vm1116, %v1118, %v1114
  %v1120 = vmul.f32 1.0, %v1119
  %v1121 = vrcp.pop %v960
  %v1122 = vmul.f32 %v960, %v1121
  %v1123 = vsub.f32 1.0, %v1122
  %v1124 = vmul.f32 %v1121, %v1123
  %v1125 = vadd.f32 %v1121, %v1124
  %vm1126 = vweird.f32 %v960
  %vm1127 = vweird.f32 %v1121
  %vm1128 = vmor %vm1126, %vm1127
  %v1129 = vsel %vm1128, %v1121, %v1125
  %v1130 = vand.u32 2147483647, %v960
  %vm1131 = vcmp.eq.f32.partialorder %v1130, 8.507059e+37
  %v1132 = vand.u32 %v960, 2147483648
  %v1133 = vor.u32 1.1754944e-38, %v1132
  %v1134 = vsel %vm1131, %v1133, %v1129
  %v1135 = vmul.f32 1.0, %v1134
  %v1136 = vrcp.pop %v961
  %v1137 = vmul.f32 %v961, %v1136
  %v1138 = vsub.f32 1.0, %v1137
  %v1139 = vmul.f32 %v1136, %v1138
  %v1140 = vadd.f32 %v1136, %v1139
  %vm1141 = vweird.f32 %v961
  %vm1142 = vweird.f32 %v1136
  %vm1143 = vmor %vm1141, %vm1142
  %v1144 = vsel %vm1143, %v1136, %v1140
  %v1145 = vand.u32 2147483647, %v961
  %vm1146 = vcmp.eq.f32.partialorder %v1145, 8.507059e+37
  %v1147 = vand.u32 %v961, 2147483648
  %v1148 = vor.u32 1.1754944e-38, %v1147
  %v1149 = vsel %vm1146, %v1148, %v1144
  %v1150 = vmul.f32 1.0, %v1149
  %v1151 = vrcp.pop %v962
  %v1152 = vmul.f32 %v962, %v1151
  %v1153 = vsub.f32 1.0, %v1152
  %v1154 = vmul.f32 %v1151, %v1153
  %v1155 = vadd.f32 %v1151, %v1154
  %vm1156 = vweird.f32 %v962
  %vm1157 = vweird.f32 %v1151
  %vm1158 = vmor %vm1156, %vm1157
  %v1159 = vsel %vm1158, %v1151, %v1155
  %v1160 = vand.u32 2147483647, %v962
  %vm1161 = vcmp.eq.f32.partialorder %v1160, 8.507059e+37
  %v1162 = vand.u32 %v962, 2147483648
  %v1163 = vor.u32 1.1754944e-38, %v1162
  %v1164 = vsel %vm1161, %v1163, %v1159
  %v1165 = vmul.f32 1.0, %v1164
  %v1166 = vrcp.pop %v963
  %v1167 = vmul.f32 %v963, %v1166
  %v1168 = vsub.f32 1.0, %v1167
  %v1169 = vmul.f32 %v1166, %v1168
  %v1170 = vadd.f32 %v1166, %v1169
  %vm1171 = vweird.f32 %v963
  %vm1172 = vweird.f32 %v1166
  %vm1173 = vmor %vm1171, %vm1172
  %v1174 = vsel %vm1173, %v1166, %v1170
  %v1175 = vand.u32 2147483647, %v963
  %vm1176 = vcmp.eq.f32.partialorder %v1175, 8.507059e+37
  %v1177 = vand.u32 %v963, 2147483648
  %v1178 = vor.u32 1.1754944e-38, %v1177
  %v1179 = vsel %vm1176, %v1178, %v1174
  %v1180 = vmul.f32 1.0, %v1179
  %v1181 = vrcp.pop %v964
  %v1182 = vmul.f32 %v964, %v1181
  %v1183 = vsub.f32 1.0, %v1182
  %v1184 = vmul.f32 %v1181, %v1183
  %v1185 = vadd.f32 %v1181, %v1184
  %vm1186 = vweird.f32 %v964
  %vm1187 = vweird.f32 %v1181
  %vm1188 = vmor %vm1186, %vm1187
  %v1189 = vsel %vm1188, %v1181, %v1185
  %v1190 = vand.u32 2147483647, %v964
  %vm1191 = vcmp.eq.f32.partialorder %v1190, 8.507059e+37
  %v1192 = vand.u32 %v964, 2147483648
  %v1193 = vor.u32 1.1754944e-38, %v1192
  %v1194 = vsel %vm1191, %v1193, %v1189
  %v1195 = vmul.f32 1.0, %v1194
  %v1196 = vrcp.pop %v965
  %v1197 = vmul.f32 %v965, %v1196
  %v1198 = vsub.f32 1.0, %v1197
  %v1199 = vmul.f32 %v1196, %v1198
  %v1200 = vadd.f32 %v1196, %v1199
  %vm1201 = vweird.f32 %v965
  %vm1202 = vweird.f32 %v1196
  %vm1203 = vmor %vm1201, %vm1202
  %v1204 = vsel %vm1203, %v1196, %v1200
  %v1205 = vand.u32 2147483647, %v965
  %vm1206 = vcmp.eq.f32.partialorder %v1205, 8.507059e+37
  %v1207 = vand.u32 %v965, 2147483648
  %v1208 = vor.u32 1.1754944e-38, %v1207
  %v1209 = vsel %vm1206, %v1208, %v1204
  %v1210 = vmul.f32 1.0, %v1209
  %v1211 = vrcp.pop %v966
  %v1212 = vmul.f32 %v966, %v1211
  %v1213 = vsub.f32 1.0, %v1212
  %v1214 = vmul.f32 %v1211, %v1213
  %v1215 = vadd.f32 %v1211, %v1214
  %vm1216 = vweird.f32 %v966
  %vm1217 = vweird.f32 %v1211
  %vm1218 = vmor %vm1216, %vm1217
  %v1219 = vsel %vm1218, %v1211, %v1215
  %v1220 = vand.u32 2147483647, %v966
  %vm1221 = vcmp.eq.f32.partialorder %v1220, 8.507059e+37
  %v1222 = vand.u32 %v966, 2147483648
  %v1223 = vor.u32 1.1754944e-38, %v1222
  %v1224 = vsel %vm1221, %v1223, %v1219
  %v1225 = vmul.f32 1.0, %v1224
  %v1226 = vrcp.pop %v967
  %v1227 = vmul.f32 %v967, %v1226
  %v1228 = vsub.f32 1.0, %v1227
  %v1229 = vmul.f32 %v1226, %v1228
  %v1230 = vadd.f32 %v1226, %v1229
  %vm1231 = vweird.f32 %v967
  %vm1232 = vweird.f32 %v1226
  %vm1233 = vmor %vm1231, %vm1232
  %v1234 = vsel %vm1233, %v1226, %v1230
  %v1235 = vand.u32 2147483647, %v967
  %vm1236 = vcmp.eq.f32.partialorder %v1235, 8.507059e+37
  %v1237 = vand.u32 %v967, 2147483648
  %v1238 = vor.u32 1.1754944e-38, %v1237
  %v1239 = vsel %vm1236, %v1238, %v1234
  %v1240 = vmul.f32 1.0, %v1239
  %v1241 = vrcp.pop %v968
  %v1242 = vmul.f32 %v968, %v1241
  %v1243 = vsub.f32 1.0, %v1242
  %v1244 = vmul.f32 %v1241, %v1243
  %v1245 = vadd.f32 %v1241, %v1244
  %vm1246 = vweird.f32 %v968
  %vm1247 = vweird.f32 %v1241
  %vm1248 = vmor %vm1246, %vm1247
  %v1249 = vsel %vm1248, %v1241, %v1245
  %v1250 = vand.u32 2147483647, %v968
  %vm1251 = vcmp.eq.f32.partialorder %v1250, 8.507059e+37
  %v1252 = vand.u32 %v968, 2147483648
  %v1253 = vor.u32 1.1754944e-38, %v1252
  %v1254 = vsel %vm1251, %v1253, %v1249
  %v1255 = vmul.f32 1.0, %v1254
  %v1256 = vrcp.pop %v969
  %v1257 = vmul.f32 %v969, %v1256
  %v1258 = vsub.f32 1.0, %v1257
  %v1259 = vmul.f32 %v1256, %v1258
  %v1260 = vadd.f32 %v1256, %v1259
  %vm1261 = vweird.f32 %v969
  %vm1262 = vweird.f32 %v1256
  %vm1263 = vmor %vm1261, %vm1262
  %v1264 = vsel %vm1263, %v1256, %v1260
  %v1265 = vand.u32 2147483647, %v969
  %vm1266 = vcmp.eq.f32.partialorder %v1265, 8.507059e+37
  %v1267 = vand.u32 %v969, 2147483648
  %v1268 = vor.u32 1.1754944e-38, %v1267
  %v1269 = vsel %vm1266, %v1268, %v1264
  %v1270 = vmul.f32 1.0, %v1269
  %v1271 = vrcp.pop %v970
  %v1272 = vmul.f32 %v970, %v1271
  %v1273 = vsub.f32 1.0, %v1272
  %v1274 = vmul.f32 %v1271, %v1273
  %v1275 = vadd.f32 %v1271, %v1274
  %vm1276 = vweird.f32 %v970
  %vm1277 = vweird.f32 %v1271
  %vm1278 = vmor %vm1276, %vm1277
  %v1279 = vsel %vm1278, %v1271, %v1275
  %v1280 = vand.u32 2147483647, %v970
  %vm1281 = vcmp.eq.f32.partialorder %v1280, 8.507059e+37
  %v1282 = vand.u32 %v970, 2147483648
  %v1283 = vor.u32 1.1754944e-38, %v1282
  %v1284 = vsel %vm1281, %v1283, %v1279
  %v1285 = vmul.f32 1.0, %v1284
  %1307 = vrot.lane.b32.xlu0 %v985, 112
  %v1308 = vpop.permute.xlu0 %1307
  %1309 = vrot.lane.b32.xlu0 %v1000, 112
  %v1310 = vpop.permute.xlu0 %1309
  %1311 = vrot.lane.b32.xlu0 %v1015, 112
  %v1312 = vpop.permute.xlu0 %1311
  %1313 = vrot.lane.b32.xlu0 %v1030, 112
  %v1314 = vpop.permute.xlu0 %1313
  %1315 = vrot.lane.b32.xlu0 %v1045, 112
  %v1316 = vpop.permute.xlu0 %1315
  %1317 = vrot.lane.b32.xlu0 %v1060, 112
  %v1318 = vpop.permute.xlu0 %1317
  %1319 = vrot.lane.b32.xlu0 %v1075, 112
  %v1320 = vpop.permute.xlu0 %1319
  %1321 = vrot.lane.b32.xlu0 %v1090, 112
  %v1322 = vpop.permute.xlu0 %1321
  %1323 = vrot.lane.b32.xlu0 %v1105, 112
  %v1324 = vpop.permute.xlu0 %1323
  %1325 = vrot.lane.b32.xlu0 %v1120, 112
  %v1326 = vpop.permute.xlu0 %1325
  %1327 = vrot.lane.b32.xlu0 %v1135, 112
  %v1328 = vpop.permute.xlu0 %1327
  %1329 = vrot.lane.b32.xlu0 %v1150, 112
  %v1330 = vpop.permute.xlu0 %1329
  %1331 = vrot.lane.b32.xlu0 %v1165, 112
  %v1332 = vpop.permute.xlu0 %1331
  %1333 = vrot.lane.b32.xlu0 %v1180, 112
  %v1334 = vpop.permute.xlu0 %1333
  %1335 = vrot.lane.b32.xlu0 %v1195, 112
  %v1336 = vpop.permute.xlu0 %1335
  %1337 = vrot.lane.b32.xlu0 %v1210, 112
  %v1338 = vpop.permute.xlu0 %1337
  %1339 = vrot.lane.b32.xlu0 %v1225, 112
  %v1340 = vpop.permute.xlu0 %1339
  %1341 = vrot.lane.b32.xlu0 %v1240, 112
  %v1342 = vpop.permute.xlu0 %1341
  %1343 = vrot.lane.b32.xlu0 %v1255, 112
  %v1344 = vpop.permute.xlu0 %1343
  %1345 = vrot.lane.b32.xlu0 %v1270, 112
  %v1346 = vpop.permute.xlu0 %1345
  %1347 = vrot.lane.b32.xlu0 %v1285, 112
  %v1348 = vpop.permute.xlu0 %1347
  %v1370 = vmul.f32 %v825, %v1308
  %v1371 = vmul.f32 %v828, %v1310
  %v1372 = vmul.f32 %v831, %v1312
  %v1373 = vmul.f32 %v834, %v1314
  %v1374 = vmul.f32 %v837, %v1316
  %v1375 = vmul.f32 %v840, %v1318
  %v1376 = vmul.f32 %v843, %v1320
  %v1377 = vmul.f32 %v846, %v1322
  %v1378 = vmul.f32 %v849, %v1324
  %v1379 = vmul.f32 %v852, %v1326
  %v1380 = vmul.f32 %v855, %v1328
  %v1381 = vmul.f32 %v858, %v1330
  %v1382 = vmul.f32 %v861, %v1332
  %v1383 = vmul.f32 %v864, %v1334
  %v1384 = vmul.f32 %v867, %v1336
  %v1385 = vmul.f32 %v870, %v1338
  %v1386 = vmul.f32 %v873, %v1340
  %v1387 = vmul.f32 %v876, %v1342
  %v1388 = vmul.f32 %v879, %v1344
  %v1389 = vmul.f32 %v882, %v1346
  %v1390 = vmul.f32 %v885, %v1348
  %1391 = vst.msk [vmem:[%s3] sm:$0xff] %vm263, %v1370
  %1392 = vst.msk [vmem:[%s3 + $0x8] sm:$0xff] %vm263, %v1371
  %1393 = vst.msk [vmem:[%s3 + $0x10] sm:$0xff] %vm263, %v1372
  %1394 = vst.msk [vmem:[%s3 + $0x18] sm:$0xff] %vm263, %v1373
  %1395 = vst.msk [vmem:[%s3 + $0x20] sm:$0xff] %vm263, %v1374
  %1396 = vst.msk [vmem:[%s3 + $0x28] sm:$0xff] %vm263, %v1375
  %1397 = vst.msk [vmem:[%s3 + $0x30] sm:$0xff] %vm263, %v1376
  %1398 = vst.msk [vmem:[%s3 + $0x38] sm:$0xff] %vm263, %v1377
  %1399 = vst.msk [vmem:[%s3 + $0x40] sm:$0xff] %vm263, %v1378
  %1400 = vst.msk [vmem:[%s3 + $0x48] sm:$0xff] %vm263, %v1379
  %1401 = vst.msk [vmem:[%s3 + $0x50] sm:$0xff] %vm263, %v1380
  %1402 = vst.msk [vmem:[%s3 + $0x58] sm:$0xff] %vm263, %v1381
  %1403 = vst.msk [vmem:[%s3 + $0x60] sm:$0xff] %vm263, %v1382
  %1404 = vst.msk [vmem:[%s3 + $0x68] sm:$0xff] %vm263, %v1383
  %1405 = vst.msk [vmem:[%s3 + $0x70] sm:$0xff] %vm263, %v1384
  %1406 = vst.msk [vmem:[%s3 + $0x78] sm:$0xff] %vm263, %v1385
  %1407 = vst.msk [vmem:[%s3 + $0x80] sm:$0xff] %vm263, %v1386
  %1408 = vst.msk [vmem:[%s3 + $0x88] sm:$0xff] %vm263, %v1387
  %1409 = vst.msk [vmem:[%s3 + $0x90] sm:$0xff] %vm263, %v1388
  %1410 = vst.msk [vmem:[%s3 + $0x98] sm:$0xff] %vm263, %v1389
  %vm1411 = vcmask 123904
  %1412 = vst.msk [vmem:[%s3 + $0xa0] sm:$0x3] %vm1411, %v1390
  // Predicated region
  $region14: #{degli_forward.14} parent=0 // pred_check
    _
  $region15: #{degli_forward.14} parent=0 // pred_check_branch
    %1414 = sbr.rel (0) target = $region17
  $region16: #{degli_forward.14} parent=0 // pred_region
    _
  $region17: #{degli_forward.14} parent=0 // pred_fallthru
    _
  // Predicated region
  $region18: #{degli_forward.14} parent=0 // pred_check
    _
  $region19: #{degli_forward.14} parent=0 // pred_check_branch
    %1416 = sbr.rel (0) target = $region21
  $region20: #{degli_forward.14} parent=0 // pred_region
    _
  $region21: #{degli_forward.14} parent=0 // pred_fallthru
    _

// kernel: degli_forward.16
$region0: #{degli_forward.16}
  #allocation0 [shape = 'u32[]', space=smem, size = 0x4, offset = 0x4, fixed_abs, tag = 'smem constant byte address 0x4 - core index']
  #allocation1 [shape = 'u32[72,128]{1,0:T(1,128)}', space=vmem, size = 0x9000, scoped, tag = 'internal scratch']
  %s0 = inlined_call_operand.vmem [shape: f32[162,784], index: 0, kind: input, shape index: {}]
  %s1 = inlined_call_operand.vmem [shape: f32[784,2], index: 1, kind: input, shape index: {}]
  %s2 = inlined_call_operand.vmem [shape: f32[1,2], index: 2, kind: input, shape index: {}]
  %s3 = inlined_call_operand.vmem [shape: f32[162,2], index: 3, kind: output, shape index: {}]
  %s4 = sld [smem:[#allocation0]]
  $region22: #{degli_forward.16} parent=0
    _
  %s6 = ssub.s32 1, %s4
  %s7 = scalar_select 0, %s6, %s4
  // Predicated region
  $region2: #{degli_forward.16} parent=0 // pred_check
    _
  $region3: #{degli_forward.16} parent=0 // pred_check_branch
    %9 = sbr.rel (0) target = $region5
  $region4: #{degli_forward.16} parent=0 // pred_region
    _
  $region5: #{degli_forward.16} parent=0 // pred_fallthru
    _
  // Predicated region
  $region6: #{degli_forward.16} parent=0 // pred_check
    _
  $region7: #{degli_forward.16} parent=0 // pred_check_branch
    %11 = sbr.rel (0) target = $region9
  $region8: #{degli_forward.16} parent=0 // pred_region
    _
  $region9: #{degli_forward.16} parent=0 // pred_fallthru
    _
  // Predicated region
  $region10: #{degli_forward.16} parent=0 // pred_check
    _
  $region11: #{degli_forward.16} parent=0 // pred_check_branch
    %13 = sbr.rel (0) target = $region13
  $region12: #{degli_forward.16} parent=0 // pred_region
    _
  $region13: #{degli_forward.16} parent=0 // pred_fallthru
    _
  %v14 = vld [vmem:[%s0] sm:$0xff]
  %v15 = vld [vmem:[%s0 + $0x8] sm:$0xff]
  %v16 = vld [vmem:[%s0 + $0x10] sm:$0xff]
  %v17 = vld [vmem:[%s0 + $0x18] sm:$0xff]
  %v18 = vld [vmem:[%s0 + $0x20] sm:$0xff]
  %v19 = vld [vmem:[%s0 + $0x28] sm:$0xff]
  %v20 = vld [vmem:[%s0 + $0x30] sm:$0xff]
  %v21 = vld [vmem:[%s0 + $0x38] sm:$0xff]
  %v22 = vld [vmem:[%s0 + $0x40] sm:$0xff]
  %v23 = vld [vmem:[%s0 + $0x48] sm:$0xff]
  %v24 = vld [vmem:[%s0 + $0x50] sm:$0xff]
  %v25 = vld [vmem:[%s0 + $0x58] sm:$0xff]
  %v26 = vld [vmem:[%s0 + $0x60] sm:$0xff]
  %v27 = vld [vmem:[%s0 + $0x68] sm:$0xff]
  %v28 = vld [vmem:[%s0 + $0x70] sm:$0xff]
  %v29 = vld [vmem:[%s0 + $0x78] sm:$0xff]
  %v30 = vld [vmem:[%s0 + $0x80] sm:$0xff]
  %v31 = vld [vmem:[%s0 + $0x88] sm:$0xff]
  %v32 = vld [vmem:[%s0 + $0x90] sm:$0xff]
  %v33 = vld [vmem:[%s0 + $0x98] sm:$0xff]
  %v34 = vld [vmem:[%s0 + $0xa0] sm:$0xff]
  %v35 = vld [vmem:[%s0 + $0xa8] sm:$0xff]
  %v36 = vld [vmem:[%s0 + $0xb0] sm:$0xff]
  %v37 = vld [vmem:[%s0 + $0xb8] sm:$0xff]
  %v38 = vld [vmem:[%s0 + $0xc0] sm:$0xff]
  %v39 = vld [vmem:[%s0 + $0xc8] sm:$0xff]
  %v40 = vld [vmem:[%s0 + $0xd0] sm:$0xff]
  %v41 = vld [vmem:[%s0 + $0xd8] sm:$0xff]
  %v42 = vld [vmem:[%s0 + $0xe0] sm:$0xff]
  %v43 = vld [vmem:[%s0 + $0xe8] sm:$0xff]
  %v44 = vld [vmem:[%s0 + $0xf0] sm:$0xff]
  %v45 = vld [vmem:[%s0 + $0xf8] sm:$0xff]
  %v46 = vld [vmem:[%s0 + $0x100] sm:$0xff]
  %v47 = vld [vmem:[%s0 + $0x108] sm:$0xff]
  %v48 = vld [vmem:[%s0 + $0x110] sm:$0xff]
  %v49 = vld [vmem:[%s0 + $0x118] sm:$0xff]
  %v50 = vld [vmem:[%s0 + $0x120] sm:$0xff]
  %v51 = vld [vmem:[%s0 + $0x128] sm:$0xff]
  %v52 = vld [vmem:[%s0 + $0x130] sm:$0xff]
  %v53 = vld [vmem:[%s0 + $0x138] sm:$0xff]
  %v54 = vld [vmem:[%s0 + $0x140] sm:$0xff]
  %v55 = vld [vmem:[%s0 + $0x148] sm:$0xff]
  %v56 = vld [vmem:[%s0 + $0x150] sm:$0xff]
  %v57 = vld [vmem:[%s0 + $0x158] sm:$0xff]
  %v58 = vld [vmem:[%s0 + $0x160] sm:$0xff]
  %v59 = vld [vmem:[%s0 + $0x168] sm:$0xff]
  %v60 = vld [vmem:[%s0 + $0x170] sm:$0xff]
  %v61 = vld [vmem:[%s0 + $0x178] sm:$0xff]
  %v62 = vld [vmem:[%s0 + $0x180] sm:$0xff]
  %v63 = vld [vmem:[%s0 + $0x188] sm:$0xff]
  %v64 = vld [vmem:[%s0 + $0x190] sm:$0xff]
  %v65 = vld [vmem:[%s0 + $0x198] sm:$0xff]
  %v66 = vld [vmem:[%s0 + $0x1a0] sm:$0xff]
  %v67 = vld [vmem:[%s0 + $0x1a8] sm:$0xff]
  %v68 = vld [vmem:[%s0 + $0x1b0] sm:$0xff]
  %v69 = vld [vmem:[%s0 + $0x1b8] sm:$0xff]
  %v70 = vld [vmem:[%s0 + $0x1c0] sm:$0xff]
  %v71 = vld [vmem:[%s0 + $0x1c8] sm:$0xff]
  %v72 = vld [vmem:[%s0 + $0x1d0] sm:$0xff]
  %v73 = vld [vmem:[%s0 + $0x1d8] sm:$0xff]
  %v74 = vld [vmem:[%s0 + $0x1e0] sm:$0xff]
  %v75 = vld [vmem:[%s0 + $0x1e8] sm:$0xff]
  %v76 = vld [vmem:[%s0 + $0x1f0] sm:$0xff]
  %v77 = vld [vmem:[%s0 + $0x1f8] sm:$0xff]
  %v78 = vld [vmem:[%s0 + $0x200] sm:$0xff]
  %v79 = vld [vmem:[%s0 + $0x208] sm:$0xff]
  %v80 = vld [vmem:[%s0 + $0x210] sm:$0xff]
  %v81 = vld [vmem:[%s0 + $0x218] sm:$0xff]
  %v82 = vld [vmem:[%s0 + $0x220] sm:$0xff]
  %v83 = vld [vmem:[%s0 + $0x228] sm:$0xff]
  %v84 = vld [vmem:[%s0 + $0x230] sm:$0xff]
  %v85 = vld [vmem:[%s0 + $0x238] sm:$0xff]
  %v86 = vld [vmem:[%s0 + $0x240] sm:$0xff]
  %v87 = vld [vmem:[%s0 + $0x248] sm:$0xff]
  %v88 = vld [vmem:[%s0 + $0x250] sm:$0xff]
  %v89 = vld [vmem:[%s0 + $0x258] sm:$0xff]
  %v90 = vld [vmem:[%s0 + $0x260] sm:$0xff]
  %v91 = vld [vmem:[%s0 + $0x268] sm:$0xff]
  %v92 = vld [vmem:[%s0 + $0x270] sm:$0xff]
  %v93 = vld [vmem:[%s0 + $0x278] sm:$0xff]
  %v94 = vld [vmem:[%s0 + $0x280] sm:$0xff]
  %v95 = vld [vmem:[%s0 + $0x288] sm:$0xff]
  %v96 = vld [vmem:[%s0 + $0x290] sm:$0xff]
  %v97 = vld [vmem:[%s0 + $0x298] sm:$0xff]
  %v98 = vld [vmem:[%s0 + $0x2a0] sm:$0xff]
  %v99 = vld [vmem:[%s0 + $0x2a8] sm:$0xff]
  %v100 = vld [vmem:[%s0 + $0x2b0] sm:$0xff]
  %v101 = vld [vmem:[%s0 + $0x2b8] sm:$0xff]
  %v102 = vld [vmem:[%s0 + $0x2c0] sm:$0xff]
  %v103 = vld [vmem:[%s0 + $0x2c8] sm:$0xff]
  %v104 = vld [vmem:[%s0 + $0x2d0] sm:$0xff]
  %v105 = vld [vmem:[%s0 + $0x2d8] sm:$0xff]
  %v106 = vld [vmem:[%s0 + $0x2e0] sm:$0xff]
  %v107 = vld [vmem:[%s0 + $0x2e8] sm:$0xff]
  %v108 = vld [vmem:[%s0 + $0x2f0] sm:$0xff]
  %v109 = vld [vmem:[%s0 + $0x2f8] sm:$0xff]
  %v110 = vld [vmem:[%s0 + $0x300] sm:$0xff]
  %v111 = vld [vmem:[%s0 + $0x308] sm:$0xff]
  %v112 = vld [vmem:[%s0 + $0x310] sm:$0xff]
  %v113 = vld [vmem:[%s0 + $0x318] sm:$0xff]
  %v114 = vld [vmem:[%s0 + $0x320] sm:$0xff]
  %v115 = vld [vmem:[%s0 + $0x328] sm:$0xff]
  %v116 = vld [vmem:[%s0 + $0x330] sm:$0xff]
  %v117 = vld [vmem:[%s0 + $0x338] sm:$0xff]
  %v118 = vld [vmem:[%s0 + $0x340] sm:$0xff]
  %v119 = vld [vmem:[%s0 + $0x348] sm:$0xff]
  %v120 = vld [vmem:[%s0 + $0x350] sm:$0xff]
  %v121 = vld [vmem:[%s0 + $0x358] sm:$0xff]
  %v122 = vld [vmem:[%s0 + $0x360] sm:$0xff]
  %v123 = vld [vmem:[%s0 + $0x368] sm:$0xff]
  %v124 = vld [vmem:[%s0 + $0x370] sm:$0xff]
  %v125 = vld [vmem:[%s0 + $0x378] sm:$0xff]
  %v126 = vld [vmem:[%s0 + $0x380] sm:$0xff]
  %v127 = vld [vmem:[%s0 + $0x388] sm:$0xff]
  %v128 = vld [vmem:[%s0 + $0x390] sm:$0xff]
  %v129 = vld [vmem:[%s0 + $0x398] sm:$0xff]
  %v130 = vld [vmem:[%s0 + $0x3a0] sm:$0xff]
  %v131 = vld [vmem:[%s0 + $0x3a8] sm:$0xff]
  %v132 = vld [vmem:[%s0 + $0x3b0] sm:$0xff]
  %v133 = vld [vmem:[%s0 + $0x3b8] sm:$0xff]
  %v134 = vld [vmem:[%s0 + $0x3c0] sm:$0xff]
  %v135 = vld [vmem:[%s0 + $0x3c8] sm:$0xff]
  %v136 = vld [vmem:[%s0 + $0x3d0] sm:$0xff]
  %v137 = vld [vmem:[%s0 + $0x3d8] sm:$0xff]
  %v138 = vld [vmem:[%s0 + $0x3e0] sm:$0xff]
  %v139 = vld [vmem:[%s0 + $0x3e8] sm:$0xff]
  %v140 = vld [vmem:[%s0 + $0x3f0] sm:$0xff]
  %v141 = vld [vmem:[%s0 + $0x3f8] sm:$0xff]
  %v142 = vld [vmem:[%s0 + $0x400] sm:$0xff]
  %v143 = vld [vmem:[%s0 + $0x408] sm:$0xff]
  %v144 = vld [vmem:[%s0 + $0x410] sm:$0xff]
  %v145 = vld [vmem:[%s0 + $0x418] sm:$0xff]
  %v146 = vld [vmem:[%s0 + $0x420] sm:$0xff]
  %v147 = vld [vmem:[%s0 + $0x428] sm:$0xff]
  %v148 = vld [vmem:[%s0 + $0x430] sm:$0xff]
  %v149 = vld [vmem:[%s0 + $0x438] sm:$0xff]
  %v150 = vld [vmem:[%s0 + $0x440] sm:$0xff]
  %v151 = vld [vmem:[%s0 + $0x448] sm:$0xff]
  %v152 = vld [vmem:[%s0 + $0x450] sm:$0xff]
  %v153 = vld [vmem:[%s0 + $0x458] sm:$0xff]
  %v154 = vld [vmem:[%s0 + $0x460] sm:$0x3]
  %v155 = vld [vmem:[%s0 + $0x468] sm:$0x3]
  %v156 = vld [vmem:[%s0 + $0x470] sm:$0x3]
  %v157 = vld [vmem:[%s0 + $0x478] sm:$0x3]
  %v158 = vld [vmem:[%s0 + $0x480] sm:$0x3]
  %v159 = vld [vmem:[%s0 + $0x488] sm:$0x3]
  %v160 = vld [vmem:[%s0 + $0x490] sm:$0x3]
  %v161 = vld [vmem:[%s1] sm:$0xff]
  %v162 = vld [vmem:[%s1 + $0x8] sm:$0xff]
  %v163 = vld [vmem:[%s1 + $0x10] sm:$0xff]
  %v164 = vld [vmem:[%s1 + $0x18] sm:$0xff]
  %v165 = vld [vmem:[%s1 + $0x20] sm:$0xff]
  %v166 = vld [vmem:[%s1 + $0x28] sm:$0xff]
  %v167 = vld [vmem:[%s1 + $0x30] sm:$0xff]
  %v168 = vld [vmem:[%s1 + $0x38] sm:$0xff]
  %v169 = vld [vmem:[%s1 + $0x40] sm:$0xff]
  %v170 = vld [vmem:[%s1 + $0x48] sm:$0xff]
  %v171 = vld [vmem:[%s1 + $0x50] sm:$0xff]
  %v172 = vld [vmem:[%s1 + $0x58] sm:$0xff]
  %v173 = vld [vmem:[%s1 + $0x60] sm:$0xff]
  %v174 = vld [vmem:[%s1 + $0x68] sm:$0xff]
  %v175 = vld [vmem:[%s1 + $0x70] sm:$0xff]
  %v176 = vld [vmem:[%s1 + $0x78] sm:$0xff]
  %v177 = vld [vmem:[%s1 + $0x80] sm:$0xff]
  %v178 = vld [vmem:[%s1 + $0x88] sm:$0xff]
  %v179 = vld [vmem:[%s1 + $0x90] sm:$0xff]
  %v180 = vld [vmem:[%s1 + $0x98] sm:$0xff]
  %v181 = vld [vmem:[%s1 + $0xa0] sm:$0xff]
  %v182 = vld [vmem:[%s1 + $0xa8] sm:$0xff]
  %v183 = vld [vmem:[%s1 + $0xb0] sm:$0xff]
  %v184 = vld [vmem:[%s1 + $0xb8] sm:$0xff]
  %v185 = vld [vmem:[%s1 + $0xc0] sm:$0xff]
  %v186 = vld [vmem:[%s1 + $0xc8] sm:$0xff]
  %v187 = vld [vmem:[%s1 + $0xd0] sm:$0xff]
  %v188 = vld [vmem:[%s1 + $0xd8] sm:$0xff]
  %v189 = vld [vmem:[%s1 + $0xe0] sm:$0xff]
  %v190 = vld [vmem:[%s1 + $0xe8] sm:$0xff]
  %v191 = vld [vmem:[%s1 + $0xf0] sm:$0xff]
  %v192 = vld [vmem:[%s1 + $0xf8] sm:$0xff]
  %v193 = vld [vmem:[%s1 + $0x100] sm:$0xff]
  %v194 = vld [vmem:[%s1 + $0x108] sm:$0xff]
  %v195 = vld [vmem:[%s1 + $0x110] sm:$0xff]
  %v196 = vld [vmem:[%s1 + $0x118] sm:$0xff]
  %v197 = vld [vmem:[%s1 + $0x120] sm:$0xff]
  %v198 = vld [vmem:[%s1 + $0x128] sm:$0xff]
  %v199 = vld [vmem:[%s1 + $0x130] sm:$0xff]
  %v200 = vld [vmem:[%s1 + $0x138] sm:$0xff]
  %v201 = vld [vmem:[%s1 + $0x140] sm:$0xff]
  %v202 = vld [vmem:[%s1 + $0x148] sm:$0xff]
  %v203 = vld [vmem:[%s1 + $0x150] sm:$0xff]
  %v204 = vld [vmem:[%s1 + $0x158] sm:$0xff]
  %v205 = vld [vmem:[%s1 + $0x160] sm:$0xff]
  %v206 = vld [vmem:[%s1 + $0x168] sm:$0xff]
  %v207 = vld [vmem:[%s1 + $0x170] sm:$0xff]
  %v208 = vld [vmem:[%s1 + $0x178] sm:$0xff]
  %v209 = vld [vmem:[%s1 + $0x180] sm:$0xff]
  %v210 = vld [vmem:[%s1 + $0x188] sm:$0xff]
  %v211 = vld [vmem:[%s1 + $0x190] sm:$0xff]
  %v212 = vld [vmem:[%s1 + $0x198] sm:$0xff]
  %v213 = vld [vmem:[%s1 + $0x1a0] sm:$0xff]
  %v214 = vld [vmem:[%s1 + $0x1a8] sm:$0xff]
  %v215 = vld [vmem:[%s1 + $0x1b0] sm:$0xff]
  %v216 = vld [vmem:[%s1 + $0x1b8] sm:$0xff]
  %v217 = vld [vmem:[%s1 + $0x1c0] sm:$0xff]
  %v218 = vld [vmem:[%s1 + $0x1c8] sm:$0xff]
  %v219 = vld [vmem:[%s1 + $0x1d0] sm:$0xff]
  %v220 = vld [vmem:[%s1 + $0x1d8] sm:$0xff]
  %v221 = vld [vmem:[%s1 + $0x1e0] sm:$0xff]
  %v222 = vld [vmem:[%s1 + $0x1e8] sm:$0xff]
  %v223 = vld [vmem:[%s1 + $0x1f0] sm:$0xff]
  %v224 = vld [vmem:[%s1 + $0x1f8] sm:$0xff]
  %v225 = vld [vmem:[%s1 + $0x200] sm:$0xff]
  %v226 = vld [vmem:[%s1 + $0x208] sm:$0xff]
  %v227 = vld [vmem:[%s1 + $0x210] sm:$0xff]
  %v228 = vld [vmem:[%s1 + $0x218] sm:$0xff]
  %v229 = vld [vmem:[%s1 + $0x220] sm:$0xff]
  %v230 = vld [vmem:[%s1 + $0x228] sm:$0xff]
  %v231 = vld [vmem:[%s1 + $0x230] sm:$0xff]
  %v232 = vld [vmem:[%s1 + $0x238] sm:$0xff]
  %v233 = vld [vmem:[%s1 + $0x240] sm:$0xff]
  %v234 = vld [vmem:[%s1 + $0x248] sm:$0xff]
  %v235 = vld [vmem:[%s1 + $0x250] sm:$0xff]
  %v236 = vld [vmem:[%s1 + $0x258] sm:$0xff]
  %v237 = vld [vmem:[%s1 + $0x260] sm:$0xff]
  %v238 = vld [vmem:[%s1 + $0x268] sm:$0xff]
  %v239 = vld [vmem:[%s1 + $0x270] sm:$0xff]
  %v240 = vld [vmem:[%s1 + $0x278] sm:$0xff]
  %v241 = vld [vmem:[%s1 + $0x280] sm:$0xff]
  %v242 = vld [vmem:[%s1 + $0x288] sm:$0xff]
  %v243 = vld [vmem:[%s1 + $0x290] sm:$0xff]
  %v244 = vld [vmem:[%s1 + $0x298] sm:$0xff]
  %v245 = vld [vmem:[%s1 + $0x2a0] sm:$0xff]
  %v246 = vld [vmem:[%s1 + $0x2a8] sm:$0xff]
  %v247 = vld [vmem:[%s1 + $0x2b0] sm:$0xff]
  %v248 = vld [vmem:[%s1 + $0x2b8] sm:$0xff]
  %v249 = vld [vmem:[%s1 + $0x2c0] sm:$0xff]
  %v250 = vld [vmem:[%s1 + $0x2c8] sm:$0xff]
  %v251 = vld [vmem:[%s1 + $0x2d0] sm:$0xff]
  %v252 = vld [vmem:[%s1 + $0x2d8] sm:$0xff]
  %v253 = vld [vmem:[%s1 + $0x2e0] sm:$0xff]
  %v254 = vld [vmem:[%s1 + $0x2e8] sm:$0xff]
  %v255 = vld [vmem:[%s1 + $0x2f0] sm:$0xff]
  %v256 = vld [vmem:[%s1 + $0x2f8] sm:$0xff]
  %v257 = vld [vmem:[%s1 + $0x300] sm:$0xff]
  %v258 = vld [vmem:[%s1 + $0x308] sm:$0xff]
  %v259 = vld [vmem:[%s2] sm:$0x1]
  %v261 = vperm.slane %v259, 0
  %vm263 = vcmask 130048
  %v265 = vsel %vm263, %v20, 0
  %v268 = vsel %vm263, %v27, 0
  %v271 = vsel %vm263, %v34, 0
  %v274 = vsel %vm263, %v41, 0
  %v277 = vsel %vm263, %v48, 0
  %v280 = vsel %vm263, %v55, 0
  %v283 = vsel %vm263, %v62, 0
  %v286 = vsel %vm263, %v69, 0
  %v289 = vsel %vm263, %v76, 0
  %v292 = vsel %vm263, %v83, 0
  %v295 = vsel %vm263, %v90, 0
  %v298 = vsel %vm263, %v97, 0
  %v301 = vsel %vm263, %v104, 0
  %v304 = vsel %vm263, %v111, 0
  %v307 = vsel %vm263, %v118, 0
  %v310 = vsel %vm263, %v125, 0
  %v313 = vsel %vm263, %v132, 0
  %v316 = vsel %vm263, %v139, 0
  %v319 = vsel %vm263, %v146, 0
  %v322 = vsel %vm263, %v153, 0
  %v325 = vsel %vm263, %v160, 0
  %327 = vmatpush.msra.mxu0 %v176
  %328 = vmatpush.msra.mxu0 %v175
  %329 = vmatpush.msra.mxu0 %v174
  %330 = vmatpush.msra.mxu0 %v173
  %331 = vmatpush.msra.mxu0 %v172
  %332 = vmatpush.msra.mxu0 %v171
  %333 = vmatpush.msra.mxu0 %v170
  %334 = vmatpush.msra.mxu0 %v169
  %335 = vmatpush.msra.mxu0 %v168
  %336 = vmatpush.msra.mxu0 %v167
  %337 = vmatpush.msra.mxu0 %v166
  %338 = vmatpush.msra.mxu0 %v165
  %339 = vmatpush.msra.mxu0 %v164
  %340 = vmatpush.msra.mxu0 %v163
  %341 = vmatpush.msra.mxu0 %v162
  %342 = vmatpush.msra.mxu0 %v161
  %343 = vmatmul.f32.gmra.mxu0 %v14
  %v344 = vpop.f32.mrf.mxu0
  %v345 = vadd.f32 %v261, %v344
  %346 = vmatmul.f32.gmra.mxu0 %v21
  %v347 = vpop.f32.mrf.mxu0
  %v348 = vadd.f32 %v261, %v347
  %349 = vmatmul.f32.gmra.mxu0 %v28
  %v350 = vpop.f32.mrf.mxu0
  %v351 = vadd.f32 %v261, %v350
  %352 = vmatmul.f32.gmra.mxu0 %v35
  %v353 = vpop.f32.mrf.mxu0
  %v354 = vadd.f32 %v261, %v353
  %355 = vmatmul.f32.gmra.mxu0 %v42
  %v356 = vpop.f32.mrf.mxu0
  %v357 = vadd.f32 %v261, %v356
  %358 = vmatmul.f32.gmra.mxu0 %v49
  %v359 = vpop.f32.mrf.mxu0
  %v360 = vadd.f32 %v261, %v359
  %361 = vmatmul.f32.gmra.mxu0 %v56
  %v362 = vpop.f32.mrf.mxu0
  %v363 = vadd.f32 %v261, %v362
  %364 = vmatmul.f32.gmra.mxu0 %v63
  %v365 = vpop.f32.mrf.mxu0
  %v366 = vadd.f32 %v261, %v365
  %367 = vmatmul.f32.gmra.mxu0 %v70
  %v368 = vpop.f32.mrf.mxu0
  %v369 = vadd.f32 %v261, %v368
  %370 = vmatmul.f32.gmra.mxu0 %v77
  %v371 = vpop.f32.mrf.mxu0
  %v372 = vadd.f32 %v261, %v371
  %373 = vmatmul.f32.gmra.mxu0 %v84
  %v374 = vpop.f32.mrf.mxu0
  %v375 = vadd.f32 %v261, %v374
  %376 = vmatmul.f32.gmra.mxu0 %v91
  %v377 = vpop.f32.mrf.mxu0
  %v378 = vadd.f32 %v261, %v377
  %379 = vmatmul.f32.gmra.mxu0 %v98
  %v380 = vpop.f32.mrf.mxu0
  %v381 = vadd.f32 %v261, %v380
  %382 = vmatmul.f32.gmra.mxu0 %v105
  %v383 = vpop.f32.mrf.mxu0
  %v384 = vadd.f32 %v261, %v383
  %385 = vmatmul.f32.gmra.mxu0 %v112
  %v386 = vpop.f32.mrf.mxu0
  %v387 = vadd.f32 %v261, %v386
  %388 = vmatmul.f32.gmra.mxu0 %v119
  %v389 = vpop.f32.mrf.mxu0
  %v390 = vadd.f32 %v261, %v389
  %391 = vmatmul.f32.gmra.mxu0 %v126
  %v392 = vpop.f32.mrf.mxu0
  %v393 = vadd.f32 %v261, %v392
  %394 = vmatmul.f32.gmra.mxu0 %v133
  %v395 = vpop.f32.mrf.mxu0
  %v396 = vadd.f32 %v261, %v395
  %397 = vmatmul.f32.gmra.mxu0 %v140
  %v398 = vpop.f32.mrf.mxu0
  %v399 = vadd.f32 %v261, %v398
  %400 = vmatmul.f32.gmra.mxu0 %v147
  %v401 = vpop.f32.mrf.mxu0
  %v402 = vadd.f32 %v261, %v401
  %403 = vmatmul.f32.gmra.mxu0 %v154
  %v404 = vpop.f32.mrf.mxu0
  %v405 = vadd.f32 %v261, %v404
  %406 = vdwg.mxu0
  %407 = vmatpush.msra.mxu0 %v192
  %408 = vmatpush.msra.mxu0 %v191
  %409 = vmatpush.msra.mxu0 %v190
  %410 = vmatpush.msra.mxu0 %v189
  %411 = vmatpush.msra.mxu0 %v188
  %412 = vmatpush.msra.mxu0 %v187
  %413 = vmatpush.msra.mxu0 %v186
  %414 = vmatpush.msra.mxu0 %v185
  %415 = vmatpush.msra.mxu0 %v184
  %416 = vmatpush.msra.mxu0 %v183
  %417 = vmatpush.msra.mxu0 %v182
  %418 = vmatpush.msra.mxu0 %v181
  %419 = vmatpush.msra.mxu0 %v180
  %420 = vmatpush.msra.mxu0 %v179
  %421 = vmatpush.msra.mxu0 %v178
  %422 = vmatpush.msra.mxu0 %v177
  %423 = vmatmul.f32.gmra.mxu0 %v15
  %v424 = vpop.f32.mrf.mxu0
  %v425 = vadd.f32 %v345, %v424
  %426 = vmatmul.f32.gmra.mxu0 %v22
  %v427 = vpop.f32.mrf.mxu0
  %v428 = vadd.f32 %v348, %v427
  %429 = vmatmul.f32.gmra.mxu0 %v29
  %v430 = vpop.f32.mrf.mxu0
  %v431 = vadd.f32 %v351, %v430
  %432 = vmatmul.f32.gmra.mxu0 %v36
  %v433 = vpop.f32.mrf.mxu0
  %v434 = vadd.f32 %v354, %v433
  %435 = vmatmul.f32.gmra.mxu0 %v43
  %v436 = vpop.f32.mrf.mxu0
  %v437 = vadd.f32 %v357, %v436
  %438 = vmatmul.f32.gmra.mxu0 %v50
  %v439 = vpop.f32.mrf.mxu0
  %v440 = vadd.f32 %v360, %v439
  %441 = vmatmul.f32.gmra.mxu0 %v57
  %v442 = vpop.f32.mrf.mxu0
  %v443 = vadd.f32 %v363, %v442
  %444 = vmatmul.f32.gmra.mxu0 %v64
  %v445 = vpop.f32.mrf.mxu0
  %v446 = vadd.f32 %v366, %v445
  %447 = vmatmul.f32.gmra.mxu0 %v71
  %v448 = vpop.f32.mrf.mxu0
  %v449 = vadd.f32 %v369, %v448
  %450 = vmatmul.f32.gmra.mxu0 %v78
  %v451 = vpop.f32.mrf.mxu0
  %v452 = vadd.f32 %v372, %v451
  %453 = vmatmul.f32.gmra.mxu0 %v85
  %v454 = vpop.f32.mrf.mxu0
  %v455 = vadd.f32 %v375, %v454
  %456 = vmatmul.f32.gmra.mxu0 %v92
  %v457 = vpop.f32.mrf.mxu0
  %v458 = vadd.f32 %v378, %v457
  %459 = vmatmul.f32.gmra.mxu0 %v99
  %v460 = vpop.f32.mrf.mxu0
  %v461 = vadd.f32 %v381, %v460
  %462 = vmatmul.f32.gmra.mxu0 %v106
  %v463 = vpop.f32.mrf.mxu0
  %v464 = vadd.f32 %v384, %v463
  %465 = vmatmul.f32.gmra.mxu0 %v113
  %v466 = vpop.f32.mrf.mxu0
  %v467 = vadd.f32 %v387, %v466
  %468 = vmatmul.f32.gmra.mxu0 %v120
  %v469 = vpop.f32.mrf.mxu0
  %v470 = vadd.f32 %v390, %v469
  %471 = vmatmul.f32.gmra.mxu0 %v127
  %v472 = vpop.f32.mrf.mxu0
  %v473 = vadd.f32 %v393, %v472
  %474 = vmatmul.f32.gmra.mxu0 %v134
  %v475 = vpop.f32.mrf.mxu0
  %v476 = vadd.f32 %v396, %v475
  %477 = vmatmul.f32.gmra.mxu0 %v141
  %v478 = vpop.f32.mrf.mxu0
  %v479 = vadd.f32 %v399, %v478
  %480 = vmatmul.f32.gmra.mxu0 %v148
  %v481 = vpop.f32.mrf.mxu0
  %v482 = vadd.f32 %v402, %v481
  %483 = vmatmul.f32.gmra.mxu0 %v155
  %v484 = vpop.f32.mrf.mxu0
  %v485 = vadd.f32 %v405, %v484
  %486 = vdwg.mxu0
  %487 = vmatpush.msra.mxu0 %v208
  %488 = vmatpush.msra.mxu0 %v207
  %489 = vmatpush.msra.mxu0 %v206
  %490 = vmatpush.msra.mxu0 %v205
  %491 = vmatpush.msra.mxu0 %v204
  %492 = vmatpush.msra.mxu0 %v203
  %493 = vmatpush.msra.mxu0 %v202
  %494 = vmatpush.msra.mxu0 %v201
  %495 = vmatpush.msra.mxu0 %v200
  %496 = vmatpush.msra.mxu0 %v199
  %497 = vmatpush.msra.mxu0 %v198
  %498 = vmatpush.msra.mxu0 %v197
  %499 = vmatpush.msra.mxu0 %v196
  %500 = vmatpush.msra.mxu0 %v195
  %501 = vmatpush.msra.mxu0 %v194
  %502 = vmatpush.msra.mxu0 %v193
  %503 = vmatmul.f32.gmra.mxu0 %v16
  %v504 = vpop.f32.mrf.mxu0
  %v505 = vadd.f32 %v425, %v504
  %506 = vmatmul.f32.gmra.mxu0 %v23
  %v507 = vpop.f32.mrf.mxu0
  %v508 = vadd.f32 %v428, %v507
  %509 = vmatmul.f32.gmra.mxu0 %v30
  %v510 = vpop.f32.mrf.mxu0
  %v511 = vadd.f32 %v431, %v510
  %512 = vmatmul.f32.gmra.mxu0 %v37
  %v513 = vpop.f32.mrf.mxu0
  %v514 = vadd.f32 %v434, %v513
  %515 = vmatmul.f32.gmra.mxu0 %v44
  %v516 = vpop.f32.mrf.mxu0
  %v517 = vadd.f32 %v437, %v516
  %518 = vmatmul.f32.gmra.mxu0 %v51
  %v519 = vpop.f32.mrf.mxu0
  %v520 = vadd.f32 %v440, %v519
  %521 = vmatmul.f32.gmra.mxu0 %v58
  %v522 = vpop.f32.mrf.mxu0
  %v523 = vadd.f32 %v443, %v522
  %524 = vmatmul.f32.gmra.mxu0 %v65
  %v525 = vpop.f32.mrf.mxu0
  %v526 = vadd.f32 %v446, %v525
  %527 = vmatmul.f32.gmra.mxu0 %v72
  %v528 = vpop.f32.mrf.mxu0
  %v529 = vadd.f32 %v449, %v528
  %530 = vmatmul.f32.gmra.mxu0 %v79
  %v531 = vpop.f32.mrf.mxu0
  %v532 = vadd.f32 %v452, %v531
  %533 = vmatmul.f32.gmra.mxu0 %v86
  %v534 = vpop.f32.mrf.mxu0
  %v535 = vadd.f32 %v455, %v534
  %536 = vmatmul.f32.gmra.mxu0 %v93
  %v537 = vpop.f32.mrf.mxu0
  %v538 = vadd.f32 %v458, %v537
  %539 = vmatmul.f32.gmra.mxu0 %v100
  %v540 = vpop.f32.mrf.mxu0
  %v541 = vadd.f32 %v461, %v540
  %542 = vmatmul.f32.gmra.mxu0 %v107
  %v543 = vpop.f32.mrf.mxu0
  %v544 = vadd.f32 %v464, %v543
  %545 = vmatmul.f32.gmra.mxu0 %v114
  %v546 = vpop.f32.mrf.mxu0
  %v547 = vadd.f32 %v467, %v546
  %548 = vmatmul.f32.gmra.mxu0 %v121
  %v549 = vpop.f32.mrf.mxu0
  %v550 = vadd.f32 %v470, %v549
  %551 = vmatmul.f32.gmra.mxu0 %v128
  %v552 = vpop.f32.mrf.mxu0
  %v553 = vadd.f32 %v473, %v552
  %554 = vmatmul.f32.gmra.mxu0 %v135
  %v555 = vpop.f32.mrf.mxu0
  %v556 = vadd.f32 %v476, %v555
  %557 = vmatmul.f32.gmra.mxu0 %v142
  %v558 = vpop.f32.mrf.mxu0
  %v559 = vadd.f32 %v479, %v558
  %560 = vmatmul.f32.gmra.mxu0 %v149
  %v561 = vpop.f32.mrf.mxu0
  %v562 = vadd.f32 %v482, %v561
  %563 = vmatmul.f32.gmra.mxu0 %v156
  %v564 = vpop.f32.mrf.mxu0
  %v565 = vadd.f32 %v485, %v564
  %566 = vdwg.mxu0
  %567 = vmatpush.msra.mxu0 %v224
  %568 = vmatpush.msra.mxu0 %v223
  %569 = vmatpush.msra.mxu0 %v222
  %570 = vmatpush.msra.mxu0 %v221
  %571 = vmatpush.msra.mxu0 %v220
  %572 = vmatpush.msra.mxu0 %v219
  %573 = vmatpush.msra.mxu0 %v218
  %574 = vmatpush.msra.mxu0 %v217
  %575 = vmatpush.msra.mxu0 %v216
  %576 = vmatpush.msra.mxu0 %v215
  %577 = vmatpush.msra.mxu0 %v214
  %578 = vmatpush.msra.mxu0 %v213
  %579 = vmatpush.msra.mxu0 %v212
  %580 = vmatpush.msra.mxu0 %v211
  %581 = vmatpush.msra.mxu0 %v210
  %582 = vmatpush.msra.mxu0 %v209
  %583 = vmatmul.f32.gmra.mxu0 %v17
  %v584 = vpop.f32.mrf.mxu0
  %v585 = vadd.f32 %v505, %v584
  %586 = vmatmul.f32.gmra.mxu0 %v24
  %v587 = vpop.f32.mrf.mxu0
  %v588 = vadd.f32 %v508, %v587
  %589 = vmatmul.f32.gmra.mxu0 %v31
  %v590 = vpop.f32.mrf.mxu0
  %v591 = vadd.f32 %v511, %v590
  %592 = vmatmul.f32.gmra.mxu0 %v38
  %v593 = vpop.f32.mrf.mxu0
  %v594 = vadd.f32 %v514, %v593
  %595 = vmatmul.f32.gmra.mxu0 %v45
  %v596 = vpop.f32.mrf.mxu0
  %v597 = vadd.f32 %v517, %v596
  %598 = vmatmul.f32.gmra.mxu0 %v52
  %v599 = vpop.f32.mrf.mxu0
  %v600 = vadd.f32 %v520, %v599
  %601 = vmatmul.f32.gmra.mxu0 %v59
  %v602 = vpop.f32.mrf.mxu0
  %v603 = vadd.f32 %v523, %v602
  %604 = vmatmul.f32.gmra.mxu0 %v66
  %v605 = vpop.f32.mrf.mxu0
  %v606 = vadd.f32 %v526, %v605
  %607 = vmatmul.f32.gmra.mxu0 %v73
  %v608 = vpop.f32.mrf.mxu0
  %v609 = vadd.f32 %v529, %v608
  %610 = vmatmul.f32.gmra.mxu0 %v80
  %v611 = vpop.f32.mrf.mxu0
  %v612 = vadd.f32 %v532, %v611
  %613 = vmatmul.f32.gmra.mxu0 %v87
  %v614 = vpop.f32.mrf.mxu0
  %v615 = vadd.f32 %v535, %v614
  %616 = vmatmul.f32.gmra.mxu0 %v94
  %v617 = vpop.f32.mrf.mxu0
  %v618 = vadd.f32 %v538, %v617
  %619 = vmatmul.f32.gmra.mxu0 %v101
  %v620 = vpop.f32.mrf.mxu0
  %v621 = vadd.f32 %v541, %v620
  %622 = vmatmul.f32.gmra.mxu0 %v108
  %v623 = vpop.f32.mrf.mxu0
  %v624 = vadd.f32 %v544, %v623
  %625 = vmatmul.f32.gmra.mxu0 %v115
  %v626 = vpop.f32.mrf.mxu0
  %v627 = vadd.f32 %v547, %v626
  %628 = vmatmul.f32.gmra.mxu0 %v122
  %v629 = vpop.f32.mrf.mxu0
  %v630 = vadd.f32 %v550, %v629
  %631 = vmatmul.f32.gmra.mxu0 %v129
  %v632 = vpop.f32.mrf.mxu0
  %v633 = vadd.f32 %v553, %v632
  %634 = vmatmul.f32.gmra.mxu0 %v136
  %v635 = vpop.f32.mrf.mxu0
  %v636 = vadd.f32 %v556, %v635
  %637 = vmatmul.f32.gmra.mxu0 %v143
  %v638 = vpop.f32.mrf.mxu0
  %v639 = vadd.f32 %v559, %v638
  %640 = vmatmul.f32.gmra.mxu0 %v150
  %v641 = vpop.f32.mrf.mxu0
  %v642 = vadd.f32 %v562, %v641
  %643 = vmatmul.f32.gmra.mxu0 %v157
  %v644 = vpop.f32.mrf.mxu0
  %v645 = vadd.f32 %v565, %v644
  %646 = vdwg.mxu0
  %647 = vmatpush.msra.mxu0 %v240
  %648 = vmatpush.msra.mxu0 %v239
  %649 = vmatpush.msra.mxu0 %v238
  %650 = vmatpush.msra.mxu0 %v237
  %651 = vmatpush.msra.mxu0 %v236
  %652 = vmatpush.msra.mxu0 %v235
  %653 = vmatpush.msra.mxu0 %v234
  %654 = vmatpush.msra.mxu0 %v233
  %655 = vmatpush.msra.mxu0 %v232
  %656 = vmatpush.msra.mxu0 %v231
  %657 = vmatpush.msra.mxu0 %v230
  %658 = vmatpush.msra.mxu0 %v229
  %659 = vmatpush.msra.mxu0 %v228
  %660 = vmatpush.msra.mxu0 %v227
  %661 = vmatpush.msra.mxu0 %v226
  %662 = vmatpush.msra.mxu0 %v225
  %663 = vmatmul.f32.gmra.mxu0 %v18
  %v664 = vpop.f32.mrf.mxu0
  %v665 = vadd.f32 %v585, %v664
  %666 = vmatmul.f32.gmra.mxu0 %v25
  %v667 = vpop.f32.mrf.mxu0
  %v668 = vadd.f32 %v588, %v667
  %669 = vmatmul.f32.gmra.mxu0 %v32
  %v670 = vpop.f32.mrf.mxu0
  %v671 = vadd.f32 %v591, %v670
  %672 = vmatmul.f32.gmra.mxu0 %v39
  %v673 = vpop.f32.mrf.mxu0
  %v674 = vadd.f32 %v594, %v673
  %675 = vmatmul.f32.gmra.mxu0 %v46
  %v676 = vpop.f32.mrf.mxu0
  %v677 = vadd.f32 %v597, %v676
  %678 = vmatmul.f32.gmra.mxu0 %v53
  %v679 = vpop.f32.mrf.mxu0
  %v680 = vadd.f32 %v600, %v679
  %681 = vmatmul.f32.gmra.mxu0 %v60
  %v682 = vpop.f32.mrf.mxu0
  %v683 = vadd.f32 %v603, %v682
  %684 = vmatmul.f32.gmra.mxu0 %v67
  %v685 = vpop.f32.mrf.mxu0
  %v686 = vadd.f32 %v606, %v685
  %687 = vmatmul.f32.gmra.mxu0 %v74
  %v688 = vpop.f32.mrf.mxu0
  %v689 = vadd.f32 %v609, %v688
  %690 = vmatmul.f32.gmra.mxu0 %v81
  %v691 = vpop.f32.mrf.mxu0
  %v692 = vadd.f32 %v612, %v691
  %693 = vmatmul.f32.gmra.mxu0 %v88
  %v694 = vpop.f32.mrf.mxu0
  %v695 = vadd.f32 %v615, %v694
  %696 = vmatmul.f32.gmra.mxu0 %v95
  %v697 = vpop.f32.mrf.mxu0
  %v698 = vadd.f32 %v618, %v697
  %699 = vmatmul.f32.gmra.mxu0 %v102
  %v700 = vpop.f32.mrf.mxu0
  %v701 = vadd.f32 %v621, %v700
  %702 = vmatmul.f32.gmra.mxu0 %v109
  %v703 = vpop.f32.mrf.mxu0
  %v704 = vadd.f32 %v624, %v703
  %705 = vmatmul.f32.gmra.mxu0 %v116
  %v706 = vpop.f32.mrf.mxu0
  %v707 = vadd.f32 %v627, %v706
  %708 = vmatmul.f32.gmra.mxu0 %v123
  %v709 = vpop.f32.mrf.mxu0
  %v710 = vadd.f32 %v630, %v709
  %711 = vmatmul.f32.gmra.mxu0 %v130
  %v712 = vpop.f32.mrf.mxu0
  %v713 = vadd.f32 %v633, %v712
  %714 = vmatmul.f32.gmra.mxu0 %v137
  %v715 = vpop.f32.mrf.mxu0
  %v716 = vadd.f32 %v636, %v715
  %717 = vmatmul.f32.gmra.mxu0 %v144
  %v718 = vpop.f32.mrf.mxu0
  %v719 = vadd.f32 %v639, %v718
  %720 = vmatmul.f32.gmra.mxu0 %v151
  %v721 = vpop.f32.mrf.mxu0
  %v722 = vadd.f32 %v642, %v721
  %723 = vmatmul.f32.gmra.mxu0 %v158
  %v724 = vpop.f32.mrf.mxu0
  %v725 = vadd.f32 %v645, %v724
  %726 = vdwg.mxu0
  %727 = vmatpush.msra.mxu0 %v256
  %728 = vmatpush.msra.mxu0 %v255
  %729 = vmatpush.msra.mxu0 %v254
  %730 = vmatpush.msra.mxu0 %v253
  %731 = vmatpush.msra.mxu0 %v252
  %732 = vmatpush.msra.mxu0 %v251
  %733 = vmatpush.msra.mxu0 %v250
  %734 = vmatpush.msra.mxu0 %v249
  %735 = vmatpush.msra.mxu0 %v248
  %736 = vmatpush.msra.mxu0 %v247
  %737 = vmatpush.msra.mxu0 %v246
  %738 = vmatpush.msra.mxu0 %v245
  %739 = vmatpush.msra.mxu0 %v244
  %740 = vmatpush.msra.mxu0 %v243
  %741 = vmatpush.msra.mxu0 %v242
  %742 = vmatpush.msra.mxu0 %v241
  %743 = vmatmul.f32.gmra.mxu0 %v19
  %v744 = vpop.f32.mrf.mxu0
  %v745 = vadd.f32 %v665, %v744
  %746 = vmatmul.f32.gmra.mxu0 %v26
  %v747 = vpop.f32.mrf.mxu0
  %v748 = vadd.f32 %v668, %v747
  %749 = vmatmul.f32.gmra.mxu0 %v33
  %v750 = vpop.f32.mrf.mxu0
  %v751 = vadd.f32 %v671, %v750
  %752 = vmatmul.f32.gmra.mxu0 %v40
  %v753 = vpop.f32.mrf.mxu0
  %v754 = vadd.f32 %v674, %v753
  %755 = vmatmul.f32.gmra.mxu0 %v47
  %v756 = vpop.f32.mrf.mxu0
  %v757 = vadd.f32 %v677, %v756
  %758 = vmatmul.f32.gmra.mxu0 %v54
  %v759 = vpop.f32.mrf.mxu0
  %v760 = vadd.f32 %v680, %v759
  %761 = vmatmul.f32.gmra.mxu0 %v61
  %v762 = vpop.f32.mrf.mxu0
  %v763 = vadd.f32 %v683, %v762
  %764 = vmatmul.f32.gmra.mxu0 %v68
  %v765 = vpop.f32.mrf.mxu0
  %v766 = vadd.f32 %v686, %v765
  %767 = vmatmul.f32.gmra.mxu0 %v75
  %v768 = vpop.f32.mrf.mxu0
  %v769 = vadd.f32 %v689, %v768
  %770 = vmatmul.f32.gmra.mxu0 %v82
  %v771 = vpop.f32.mrf.mxu0
  %v772 = vadd.f32 %v692, %v771
  %773 = vmatmul.f32.gmra.mxu0 %v89
  %v774 = vpop.f32.mrf.mxu0
  %v775 = vadd.f32 %v695, %v774
  %776 = vmatmul.f32.gmra.mxu0 %v96
  %v777 = vpop.f32.mrf.mxu0
  %v778 = vadd.f32 %v698, %v777
  %779 = vmatmul.f32.gmra.mxu0 %v103
  %v780 = vpop.f32.mrf.mxu0
  %v781 = vadd.f32 %v701, %v780
  %782 = vmatmul.f32.gmra.mxu0 %v110
  %v783 = vpop.f32.mrf.mxu0
  %v784 = vadd.f32 %v704, %v783
  %785 = vmatmul.f32.gmra.mxu0 %v117
  %v786 = vpop.f32.mrf.mxu0
  %v787 = vadd.f32 %v707, %v786
  %788 = vmatmul.f32.gmra.mxu0 %v124
  %v789 = vpop.f32.mrf.mxu0
  %v790 = vadd.f32 %v710, %v789
  %791 = vmatmul.f32.gmra.mxu0 %v131
  %v792 = vpop.f32.mrf.mxu0
  %v793 = vadd.f32 %v713, %v792
  %794 = vmatmul.f32.gmra.mxu0 %v138
  %v795 = vpop.f32.mrf.mxu0
  %v796 = vadd.f32 %v716, %v795
  %797 = vmatmul.f32.gmra.mxu0 %v145
  %v798 = vpop.f32.mrf.mxu0
  %v799 = vadd.f32 %v719, %v798
  %800 = vmatmul.f32.gmra.mxu0 %v152
  %v801 = vpop.f32.mrf.mxu0
  %v802 = vadd.f32 %v722, %v801
  %803 = vmatmul.f32.gmra.mxu0 %v159
  %v804 = vpop.f32.mrf.mxu0
  %v805 = vadd.f32 %v725, %v804
  %806 = vdwg.mxu0
  %807 = vmatpush.msra.mxu0 0.0
  %808 = vmatpush.msra.mxu0 0.0
  %809 = vmatpush.msra.mxu0 0.0
  %810 = vmatpush.msra.mxu0 0.0
  %811 = vmatpush.msra.mxu0 0.0
  %812 = vmatpush.msra.mxu0 0.0
  %813 = vmatpush.msra.mxu0 0.0
  %814 = vmatpush.msra.mxu0 0.0
  %815 = vmatpush.msra.mxu0 0.0
  %816 = vmatpush.msra.mxu0 0.0
  %817 = vmatpush.msra.mxu0 0.0
  %818 = vmatpush.msra.mxu0 0.0
  %819 = vmatpush.msra.mxu0 0.0
  %820 = vmatpush.msra.mxu0 0.0
  %821 = vmatpush.msra.mxu0 %v258
  %822 = vmatpush.msra.mxu0 %v257
  %823 = vmatmul.f32.gmra.mxu0 %v265
  %v824 = vpop.f32.mrf.mxu0
  %v825 = vadd.f32 %v745, %v824
  %826 = vmatmul.f32.gmra.mxu0 %v268
  %v827 = vpop.f32.mrf.mxu0
  %v828 = vadd.f32 %v748, %v827
  %829 = vmatmul.f32.gmra.mxu0 %v271
  %v830 = vpop.f32.mrf.mxu0
  %v831 = vadd.f32 %v751, %v830
  %832 = vmatmul.f32.gmra.mxu0 %v274
  %v833 = vpop.f32.mrf.mxu0
  %v834 = vadd.f32 %v754, %v833
  %835 = vmatmul.f32.gmra.mxu0 %v277
  %v836 = vpop.f32.mrf.mxu0
  %v837 = vadd.f32 %v757, %v836
  %838 = vmatmul.f32.gmra.mxu0 %v280
  %v839 = vpop.f32.mrf.mxu0
  %v840 = vadd.f32 %v760, %v839
  %841 = vmatmul.f32.gmra.mxu0 %v283
  %v842 = vpop.f32.mrf.mxu0
  %v843 = vadd.f32 %v763, %v842
  %844 = vmatmul.f32.gmra.mxu0 %v286
  %v845 = vpop.f32.mrf.mxu0
  %v846 = vadd.f32 %v766, %v845
  %847 = vmatmul.f32.gmra.mxu0 %v289
  %v848 = vpop.f32.mrf.mxu0
  %v849 = vadd.f32 %v769, %v848
  %850 = vmatmul.f32.gmra.mxu0 %v292
  %v851 = vpop.f32.mrf.mxu0
  %v852 = vadd.f32 %v772, %v851
  %853 = vmatmul.f32.gmra.mxu0 %v295
  %v854 = vpop.f32.mrf.mxu0
  %v855 = vadd.f32 %v775, %v854
  %856 = vmatmul.f32.gmra.mxu0 %v298
  %v857 = vpop.f32.mrf.mxu0
  %v858 = vadd.f32 %v778, %v857
  %859 = vmatmul.f32.gmra.mxu0 %v301
  %v860 = vpop.f32.mrf.mxu0
  %v861 = vadd.f32 %v781, %v860
  %862 = vmatmul.f32.gmra.mxu0 %v304
  %v863 = vpop.f32.mrf.mxu0
  %v864 = vadd.f32 %v784, %v863
  %865 = vmatmul.f32.gmra.mxu0 %v307
  %v866 = vpop.f32.mrf.mxu0
  %v867 = vadd.f32 %v787, %v866
  %868 = vmatmul.f32.gmra.mxu0 %v310
  %v869 = vpop.f32.mrf.mxu0
  %v870 = vadd.f32 %v790, %v869
  %871 = vmatmul.f32.gmra.mxu0 %v313
  %v872 = vpop.f32.mrf.mxu0
  %v873 = vadd.f32 %v793, %v872
  %874 = vmatmul.f32.gmra.mxu0 %v316
  %v875 = vpop.f32.mrf.mxu0
  %v876 = vadd.f32 %v796, %v875
  %877 = vmatmul.f32.gmra.mxu0 %v319
  %v878 = vpop.f32.mrf.mxu0
  %v879 = vadd.f32 %v799, %v878
  %880 = vmatmul.f32.gmra.mxu0 %v322
  %v881 = vpop.f32.mrf.mxu0
  %v882 = vadd.f32 %v802, %v881
  %883 = vmatmul.f32.gmra.mxu0 %v325
  %v884 = vpop.f32.mrf.mxu0
  %v885 = vadd.f32 %v805, %v884
  %886 = vdwg.mxu0
  %vm887 = vcmask 15360
  %888 = vst.msk [vmem:[%s3] sm:$0xff] %vm887, %v825
  %889 = vst.msk [vmem:[%s3 + $0x8] sm:$0xff] %vm887, %v828
  %890 = vst.msk [vmem:[%s3 + $0x10] sm:$0xff] %vm887, %v831
  %891 = vst.msk [vmem:[%s3 + $0x18] sm:$0xff] %vm887, %v834
  %892 = vst.msk [vmem:[%s3 + $0x20] sm:$0xff] %vm887, %v837
  %893 = vst.msk [vmem:[%s3 + $0x28] sm:$0xff] %vm887, %v840
  %894 = vst.msk [vmem:[%s3 + $0x30] sm:$0xff] %vm887, %v843
  %895 = vst.msk [vmem:[%s3 + $0x38] sm:$0xff] %vm887, %v846
  %896 = vst.msk [vmem:[%s3 + $0x40] sm:$0xff] %vm887, %v849
  %897 = vst.msk [vmem:[%s3 + $0x48] sm:$0xff] %vm887, %v852
  %898 = vst.msk [vmem:[%s3 + $0x50] sm:$0xff] %vm887, %v855
  %899 = vst.msk [vmem:[%s3 + $0x58] sm:$0xff] %vm887, %v858
  %900 = vst.msk [vmem:[%s3 + $0x60] sm:$0xff] %vm887, %v861
  %901 = vst.msk [vmem:[%s3 + $0x68] sm:$0xff] %vm887, %v864
  %902 = vst.msk [vmem:[%s3 + $0x70] sm:$0xff] %vm887, %v867
  %903 = vst.msk [vmem:[%s3 + $0x78] sm:$0xff] %vm887, %v870
  %904 = vst.msk [vmem:[%s3 + $0x80] sm:$0xff] %vm887, %v873
  %905 = vst.msk [vmem:[%s3 + $0x88] sm:$0xff] %vm887, %v876
  %906 = vst.msk [vmem:[%s3 + $0x90] sm:$0xff] %vm887, %v879
  %907 = vst.msk [vmem:[%s3 + $0x98] sm:$0xff] %vm887, %v882
  %vm908 = vcmask 9216
  %909 = vst.msk [vmem:[%s3 + $0xa0] sm:$0x3] %vm908, %v885
  // Predicated region
  $region14: #{degli_forward.16} parent=0 // pred_check
    _
  $region15: #{degli_forward.16} parent=0 // pred_check_branch
    %911 = sbr.rel (0) target = $region17
  $region16: #{degli_forward.16} parent=0 // pred_region
    _
  $region17: #{degli_forward.16} parent=0 // pred_fallthru
    _
  // Predicated region
  $region18: #{degli_forward.16} parent=0 // pred_check
    _
  $region19: #{degli_forward.16} parent=0 // pred_check_branch
    %913 = sbr.rel (0) target = $region21
  $region20: #{degli_forward.16} parent=0 // pred_region
    _
  $region21: #{degli_forward.16} parent=0 // pred_fallthru
    _

</llo_original>
